<compile_context>
chip_gen: v5e
topology: v5e:2x2
jax: 0.10.0
libtpu: 0.0.40
codegen_flags: <defaults>
</compile_context>

<pallas_src>
import functools

import jax
import jax.numpy as jnp
from jax.experimental import pallas as pl
from jax.experimental.pallas import tpu as pltpu


def _round_up(x, m):
    return ((x + m - 1) // m) * m


def _pick_row_tile(hw, cap=512):
    """Largest multiple-of-8 divisor of hw that is <= cap (falls back to full hw)."""
    start = (min(cap, hw) // 8) * 8
    for cand in range(start, 0, -8):
        if hw % cand == 0:
            return cand
    return hw


# ---------------------------------------------------------------------------
# Kernel A: conv3x3 (as matmul on im2col rows) + bias + ReLU -> feat (bf16),
# plus per-image channel sum/max accumulation and (on the last hw tile) the
# CBAM channel-attention MLP -> per-image channel scale.
# ---------------------------------------------------------------------------
def _conv_ca_kernel(patch_ref, w3_ref, b3_ref, w1_ref, w2_ref,
                    feat_ref, scale_ref, csum_ref, cmax_ref, *, inv_hw):
    t = pl.program_id(1)

    x = jnp.dot(patch_ref[...], w3_ref[...], preferred_element_type=jnp.float32)
    x = jnp.maximum(x + b3_ref[...], 0.0)                  # (TR, C_pad) f32
    feat_ref[...] = x.astype(feat_ref.dtype)

    psum = jnp.sum(x, axis=0, keepdims=True)               # (1, C_pad)
    pmax = jnp.max(x, axis=0, keepdims=True)               # (1, C_pad)

    @pl.when(t == 0)
    def _():
        csum_ref[...] = psum
        cmax_ref[...] = pmax

    @pl.when(t > 0)
    def _():
        csum_ref[...] = csum_ref[...] + psum
        cmax_ref[...] = jnp.maximum(cmax_ref[...], pmax)

    @pl.when(t == pl.num_programs(1) - 1)
    def _():
        # channel attention MLP, batched over the [avg; max] rows
        pooled = jnp.concatenate([csum_ref[...] * inv_hw, cmax_ref[...]], axis=0)
        hmid = jnp.maximum(
            jnp.dot(pooled, w1_ref[...], preferred_element_type=jnp.float32), 0.0)
        o = jnp.dot(hmid, w2_ref[...], preferred_element_type=jnp.float32)
        scale = jax.nn.sigmoid(o[0:1, :] + o[1:2, :])      # (1, C_pad)
        scale_ref[...] = jnp.broadcast_to(scale, scale_ref.shape)


# ---------------------------------------------------------------------------
# Kernel C: per-image CBAM spatial attention.  Channel mean/max maps are
# computed in-VMEM (never written to HBM); the 7x7 conv is 7 lane-aligned
# matmuls against precomputed Toeplitz matrices (avg/max halves concatenated).
# ---------------------------------------------------------------------------
def _spatial_attn_kernel(feat_ref, scale_ref, tmat_ref, sa_ref, pad_ref,
                         *, h, w, inv_c):
    c_pad = scale_ref.shape[-1]
    scl = scale_ref[0:1, :].reshape(1, 1, c_pad)
    x = feat_ref[...].astype(jnp.float32) * scl            # (H, W, C_pad)
    savg = jnp.sum(x, axis=-1) * inv_c                     # (H, W)
    smax = jnp.max(x, axis=-1)                             # (H, W) (values >= 0)

    # zero-padded [avg | max] maps side by side: (H+6, 2*(W+6))
    pad_ref[...] = jnp.zeros(pad_ref.shape, pad_ref.dtype)
    pad_ref[3:3 + h, 3:3 + w] = savg
    pad_ref[3:3 + h, (w + 6) + 3:(w + 6) + 3 + w] = smax

    acc = jnp.zeros((h, w), jnp.float32)
    for dy in range(7):                                    # 7 small MXU matmuls
        acc = acc + jnp.dot(pad_ref[dy:dy + h, :], tmat_ref[dy],
                            preferred_element_type=jnp.float32)
    sa_ref[...] = jax.nn.sigmoid(acc)


# ---------------------------------------------------------------------------
# Kernel D: apply channel + spatial attention, lane-concat with x_up, single
# fused 1x1 cat-conv matmul + bias + ReLU.
# ---------------------------------------------------------------------------
def _cat_conv_kernel(xup_ref, feat_ref, scale_ref, sa_ref, wcat_ref, bcat_ref,
                     out_ref):
    x_low = (feat_ref[...].astype(jnp.float32) * scale_ref[0:1, :]) * sa_ref[...]
    cat = jnp.concatenate([xup_ref[...], x_low.astype(xup_ref.dtype)], axis=-1)
    o = jnp.dot(cat, wcat_ref[...], preferred_element_type=jnp.float32) + bcat_ref[...]
    out_ref[...] = jnp.maximum(o, 0.0)


# ---------------------------------------------------------------------------
# Plain-JAX glue
# ---------------------------------------------------------------------------
def _bilinear_resize_nchw(x, out_h, out_w):
    """PyTorch F.interpolate(mode='bilinear', align_corners=False) semantics."""
    _, _, h, w = x.shape
    scale_h = h / out_h
    scale_w = w / out_w
    ys = jnp.maximum((jnp.arange(out_h, dtype=jnp.float32) + 0.5) * scale_h - 0.5, 0.0)
    xs = jnp.maximum((jnp.arange(out_w, dtype=jnp.float32) + 0.5) * scale_w - 0.5, 0.0)
    y0 = jnp.floor(ys).astype(jnp.int32)
    x0 = jnp.floor(xs).astype(jnp.int32)
    y1 = jnp.minimum(y0 + 1, h - 1)
    x1 = jnp.minimum(x0 + 1, w - 1)
    wy1 = (ys - y0.astype(jnp.float32))[:, None]
    wx1 = (xs - x0.astype(jnp.float32))[None, :]
    wy0 = 1.0 - wy1
    wx0 = 1.0 - wx1
    g = lambda yi, xi: x[:, :, yi, :][:, :, :, xi]
    return (g(y0, x0) * wy0 * wx0 + g(y0, x1) * wy0 * wx1
            + g(y1, x0) * wy1 * wx0 + g(y1, x1) * wy1 * wx1)


def init_params(key, c_low, c_up, ratio=16):
    cr = max(c_up // ratio, 1)
    ks = jax.random.split(key, 8)
    rn = lambda k, shape, s=0.1: jax.random.normal(k, shape, jnp.float32) * s
    w3 = rn(ks[0], (3, 3, c_low, c_up))                    # HWIO (ky, kx, cin, cout)
    return {
        "w3": w3.reshape(9 * c_low, c_up),                 # rows = (ky, kx, cin)
        "b3": rn(ks[1], (c_up,)),
        "ca_w1": rn(ks[2], (c_up, cr)),                    # channel-attn MLP (no bias)
        "ca_w2": rn(ks[3], (cr, c_up)),
        "sa_w": rn(ks[4], (7, 7, 2)),                      # 7x7 spatial conv, [avg,max]
        "wcat_up": rn(ks[5], (c_up, c_up)),                # 1x1 conv, x_up rows
        "wcat_low": rn(ks[6], (c_up, c_up)),               # 1x1 conv, x_low rows
        "bcat": rn(ks[7], (c_up,)),
    }


def combination_forward(params, x_low, x_up):
    f32, bf16 = jnp.float32, jnp.bfloat16
    n, c_up, h, w = x_up.shape
    c_low = x_low.shape[1]
    hw = h * w
    k9 = 9 * c_low
    cr = params["ca_w1"].shape[1]
    c_pad = _round_up(c_up, 128)                           # lane-dense channels
    cr_pad = _round_up(cr, 8)
    tr = _pick_row_tile(hw)                                # row tile (<=512: v7x-safe)
    n_t = hw // tr

    # ---- 1) bilinear upsample + im2col (glue), matmul operands in bf16 ----
    xl = _bilinear_resize_nchw(x_low.astype(f32), h, w)
    xl_nhwc = jnp.transpose(xl, (0, 2, 3, 1))
    xl_p = jnp.pad(xl_nhwc, ((0, 0), (1, 1), (1, 1), (0, 0)))
    patches = jnp.concatenate(
        [xl_p[:, dy:dy + h, dx:dx + w, :] for dy in range(3) for dx in range(3)],
        axis=-1).reshape(n, hw, k9).astype(bf16)

    xup = jnp.transpose(x_up.astype(f32), (0, 2, 3, 1)).reshape(n, hw, c_up)
    xup = jnp.zeros((n, hw, c_pad), bf16).at[:, :, :c_up].set(xup.astype(bf16))

    # ---- pad weights to lane-aligned channel counts (zero padding is inert) ----
    w3p = jnp.zeros((k9, c_pad), bf16).at[:, :c_up].set(params["w3"].astype(bf16))
    b3p = jnp.zeros((1, c_pad), f32).at[:, :c_up].set(params["b3"].reshape(1, c_up))
    w1p = jnp.zeros((c_pad, cr_pad), f32).at[:c_up, :cr].set(params["ca_w1"])
    w2p = jnp.zeros((cr_pad, c_pad), f32).at[:cr, :c_up].set(params["ca_w2"])
    wcat = jnp.zeros((2 * c_pad, c_pad), bf16)
    wcat = wcat.at[:c_up, :c_up].set(params["wcat_up"].astype(bf16))
    wcat = wcat.at[c_pad:c_pad + c_up, :c_up].set(params["wcat_low"].astype(bf16))
    bcat = jnp.zeros((1, c_pad), f32).at[:, :c_up].set(params["bcat"].reshape(1, c_up))

    # Toeplitz matrices for the 7x7 spatial conv along W (avg/max halves stacked)
    wi = jnp.arange(w + 6)[:, None]
    xo = jnp.arange(w)[None, :]
    j = wi - xo
    valid = (j >= 0) & (j < 7)
    jc = jnp.clip(j, 0, 6)
    sa_w = params["sa_w"].astype(f32)                      # (7, 7, 2)
    ta = jnp.where(valid[None, :, :], sa_w[:, :, 0][:, jc], 0.0)   # (7, W+6, W)
    tm = jnp.where(valid[None, :, :], sa_w[:, :, 1][:, jc], 0.0)   # (7, W+6, W)
    tcat = jnp.concatenate([ta, tm], axis=1)               # (7, 2*(W+6), W)

    # ---- 2) kernel A: conv3x3 + ReLU + channel attention stats/MLP ----
    feat, scale = pl.pallas_call(
        functools.partial(_conv_ca_kernel, inv_hw=1.0 / hw),
        grid=(n, n_t),
        in_specs=[
            pl.BlockSpec((None, tr, k9), lambda i, t: (i, t, 0)),
            pl.BlockSpec((k9, c_pad), lambda i, t: (0, 0)),
            pl.BlockSpec((1, c_pad), lambda i, t: (0, 0)),
            pl.BlockSpec((c_pad, cr_pad), lambda i, t: (0, 0)),
            pl.BlockSpec((cr_pad, c_pad), lambda i, t: (0, 0)),
        ],
        out_specs=(
            pl.BlockSpec((None, tr, c_pad), lambda i, t: (i, t, 0)),
            pl.BlockSpec((None, 8, c_pad), lambda i, t: (i, 0, 0)),
        ),
        out_shape=(
            jax.ShapeDtypeStruct((n, hw, c_pad), bf16),
            jax.ShapeDtypeStruct((n, 8, c_pad), f32),
        ),
        scratch_shapes=[pltpu.VMEM((1, c_pad), f32), pltpu.VMEM((1, c_pad), f32)],
        compiler_params=pltpu.CompilerParams(
            dimension_semantics=("parallel", "arbitrary")),
    )(patches, w3p, b3p, w1p, w2p)

    # ---- 3) kernel C: spatial attention map (per image) ----
    feat4 = feat.reshape(n, h, w, c_pad)                   # free HBM re-view
    sa = pl.pallas_call(
        functools.partial(_spatial_attn_kernel, h=h, w=w, inv_c=1.0 / c_up),
        grid=(n,),
        in_specs=[
            pl.BlockSpec((None, h, w, c_pad), lambda i: (i, 0, 0, 0)),
            pl.BlockSpec((None, 8, c_pad), lambda i: (i, 0, 0)),
            pl.BlockSpec((7, 2 * (w + 6), w), lambda i: (0, 0, 0)),
        ],
        out_specs=pl.BlockSpec((None, h, w), lambda i: (i, 0, 0)),
        out_shape=jax.ShapeDtypeStruct((n, h, w), f32),
        scratch_shapes=[pltpu.VMEM((h + 6, 2 * (w + 6)), f32)],
        compiler_params=pltpu.CompilerParams(dimension_semantics=("parallel",)),
    )(feat4, scale, tcat)

    # ---- 4) kernel D: attention apply + fused 1x1 cat-conv + ReLU ----
    sa_col = sa.reshape(n, hw, 1)                          # free HBM re-view
    out = pl.pallas_call(
        _cat_conv_kernel,
        grid=(n, n_t),
        in_specs=[
            pl.BlockSpec((None, tr, c_pad), lambda i, t: (i, t, 0)),   # x_up
            pl.BlockSpec((None, tr, c_pad), lambda i, t: (i, t, 0)),   # feat
            pl.BlockSpec((None, 8, c_pad), lambda i, t: (i, 0, 0)),    # channel scale
            pl.BlockSpec((None, tr, 1), lambda i, t: (i, t, 0)),       # spatial att
            pl.BlockSpec((2 * c_pad, c_pad), lambda i, t: (0, 0)),     # wcat
            pl.BlockSpec((1, c_pad), lambda i, t: (0, 0)),             # bcat
        ],
        out_specs=pl.BlockSpec((None, tr, c_pad), lambda i, t: (i, t, 0)),
        out_shape=jax.ShapeDtypeStruct((n, hw, c_pad), f32),
        compiler_params=pltpu.CompilerParams(
            dimension_semantics=("parallel", "parallel")),
    )(xup, feat, scale, sa_col, wcat, bcat)

    # strip channel padding, back to NCHW
    out = out[:, :, :c_up].reshape(n, h, w, c_up)
    return jnp.transpose(out, (0, 3, 1, 2))


if __name__ == "__main__":
    key = jax.random.PRNGKey(0)
    k1, k2, kp = jax.random.split(key, 3)

    N, C_LOW, C_UP = 2, 16, 32
    H_LOW = W_LOW = 8
    H_UP = W_UP = 16

    x_low = jax.random.normal(k1, (N, C_LOW, H_LOW, W_LOW), jnp.float32)
    x_up = jax.random.normal(k2, (N, C_UP, H_UP, W_UP), jnp.float32)
    params = init_params(kp, C_LOW, C_UP)

    out = jax.jit(combination_forward)(params, x_low, x_up)
    out = jax.block_until_ready(out)
    assert out.shape == (N, C_UP, H_UP, W_UP), out.shape
    print("KERNEL_OK")
</pallas_src>

<mosaic_0001>
module attributes {stable_mosaic.version = 11 : i64} {
  func.func @_conv_ca_kernel(%arg0: i32, %arg1: i32, %arg2: memref<1x256x144xbf16, #tpu.memory_space<vmem>>, %arg3: memref<144x128xbf16, #tpu.memory_space<vmem>>, %arg4: memref<1x128xf32, #tpu.memory_space<vmem>>, %arg5: memref<128x8xf32, #tpu.memory_space<vmem>>, %arg6: memref<8x128xf32, #tpu.memory_space<vmem>>, %arg7: memref<1x256x128xbf16, #tpu.memory_space<vmem>>, %arg8: memref<1x8x128xf32, #tpu.memory_space<vmem>>, %arg9: memref<1x128xf32, #tpu.memory_space<vmem>>, %arg10: memref<1x128xf32, #tpu.memory_space<vmem>>) attributes {dimension_semantics = [#tpu.dimension_semantics<parallel>, #tpu.dimension_semantics<arbitrary>], iteration_bounds = array<i64: 2, 1>, scalar_prefetch = 0 : i64, scratch_operands = 2 : i64, tpu.core_type = #tpu.core_type<tc>, window_params = [{transform_indices = @transform_0, window_bounds = array<i64: 1, 256, 144>}, {pipeline_mode = #tpu.pipeline_mode<synchronous>, transform_indices = @transform_1, window_bounds = array<i64: 144, 128>}, {pipeline_mode = #tpu.pipeline_mode<synchronous>, transform_indices = @transform_2, window_bounds = array<i64: 1, 128>}, {pipeline_mode = #tpu.pipeline_mode<synchronous>, transform_indices = @transform_3, window_bounds = array<i64: 128, 8>}, {pipeline_mode = #tpu.pipeline_mode<synchronous>, transform_indices = @transform_4, window_bounds = array<i64: 8, 128>}, {transform_indices = @transform_5, window_bounds = array<i64: 1, 256, 128>}, {transform_indices = @transform_6, window_bounds = array<i64: 1, 8, 128>}]} {
    %c0 = arith.constant 0 : index
    %c0_0 = arith.constant 0 : index
    %c0_1 = arith.constant 0 : index
    %0 = vector.load %arg2[%c0, %c0_0, %c0_1] : memref<1x256x144xbf16, #tpu.memory_space<vmem>>, vector<1x256x144xbf16>
    %1 = vector.shape_cast %0 : vector<1x256x144xbf16> to vector<256x144xbf16>
    %c0_2 = arith.constant 0 : index
    %c0_3 = arith.constant 0 : index
    %2 = vector.load %arg3[%c0_2, %c0_3] : memref<144x128xbf16, #tpu.memory_space<vmem>>, vector<144x128xbf16>
    %cst = arith.constant dense<0.000000e+00> : vector<256x128xf32>
    %3 = tpu.matmul %1, %2, %cst {dimension_numbers = #tpu.dot_dimension_numbers<[1], [0], [0], [1], [0, 0, 1, 1], [], []>} : vector<256x144xbf16>, vector<144x128xbf16>, vector<256x128xf32> -> vector<256x128xf32>
    %c0_4 = arith.constant 0 : index
    %c0_5 = arith.constant 0 : index
    %4 = vector.load %arg4[%c0_4, %c0_5] : memref<1x128xf32, #tpu.memory_space<vmem>>, vector<1x128xf32>
    %5 = vector.broadcast %4 : vector<1x128xf32> to vector<256x128xf32>
    %6 = arith.addf %3, %5 : vector<256x128xf32>
    %cst_6 = arith.constant 0.000000e+00 : f32
    %7 = vector.broadcast %cst_6 : f32 to vector<256x128xf32>
    %8 = arith.maximumf %6, %7 : vector<256x128xf32>
    %9 = arith.truncf %8 : vector<256x128xf32> to vector<256x128xbf16>
    %c0_7 = arith.constant 0 : index
    %c0_8 = arith.constant 0 : index
    %c0_9 = arith.constant 0 : index
    %10 = vector.load %arg7[%c0_7, %c0_8, %c0_9] : memref<1x256x128xbf16, #tpu.memory_space<vmem>>, vector<1x256x128xbf16>
    %11 = vector.shape_cast %10 : vector<1x256x128xbf16> to vector<256x128xbf16>
    %12 = vector.shape_cast %9 : vector<256x128xbf16> to vector<1x256x128xbf16>
    tpu.vector_store %arg7[%c0_7, %c0_8, %c0_9], %12 {strides = array<i32>} : memref<1x256x128xbf16, #tpu.memory_space<vmem>>, vector<1x256x128xbf16>,
    %cst_10 = arith.constant dense<0.000000e+00> : vector<128xf32>
    %13 = vector.multi_reduction <add>, %8, %cst_10 [0] : vector<256x128xf32> to vector<128xf32>
    %14 = vector.shape_cast %13 : vector<128xf32> to vector<1x128xf32>
    %cst_11 = arith.constant dense<0xFF800000> : vector<128xf32>
    %15 = vector.multi_reduction <maximumf>, %8, %cst_11 [0] : vector<256x128xf32> to vector<128xf32>
    %16 = vector.shape_cast %15 : vector<128xf32> to vector<1x128xf32>
    %c0_i32 = arith.constant 0 : i32
    %17 = arith.cmpi eq, %arg1, %c0_i32 : i32
    %18 = arith.extui %17 : i1 to i32
    %c0_i32_12 = arith.constant 0 : i32
    %19 = arith.cmpi ne, %18, %c0_i32_12 : i32
    scf.if %19 {
      %c0_17 = arith.constant 0 : index
      %c0_18 = arith.constant 0 : index
      %26 = vector.load %arg9[%c0_17, %c0_18] : memref<1x128xf32, #tpu.memory_space<vmem>>, vector<1x128xf32>
      tpu.vector_store %arg9[%c0_17, %c0_18], %14 {strides = array<i32>} : memref<1x128xf32, #tpu.memory_space<vmem>>, vector<1x128xf32>,
      %c0_19 = arith.constant 0 : index
      %c0_20 = arith.constant 0 : index
      %27 = vector.load %arg10[%c0_19, %c0_20] : memref<1x128xf32, #tpu.memory_space<vmem>>, vector<1x128xf32>
      tpu.vector_store %arg10[%c0_19, %c0_20], %16 {strides = array<i32>} : memref<1x128xf32, #tpu.memory_space<vmem>>, vector<1x128xf32>,
    } else {
    }
    %c0_i32_13 = arith.constant 0 : i32
    %20 = arith.cmpi sgt, %arg1, %c0_i32_13 : i32
    %21 = arith.extui %20 : i1 to i32
    %c0_i32_14 = arith.constant 0 : i32
    %22 = arith.cmpi ne, %21, %c0_i32_14 : i32
    scf.if %22 {
      %c0_17 = arith.constant 0 : index
      %c0_18 = arith.constant 0 : index
      %26 = vector.load %arg9[%c0_17, %c0_18] : memref<1x128xf32, #tpu.memory_space<vmem>>, vector<1x128xf32>
      %27 = arith.addf %26, %14 : vector<1x128xf32>
      %c0_19 = arith.constant 0 : index
      %c0_20 = arith.constant 0 : index
      %28 = vector.load %arg9[%c0_19, %c0_20] : memref<1x128xf32, #tpu.memory_space<vmem>>, vector<1x128xf32>
      tpu.vector_store %arg9[%c0_19, %c0_20], %27 {strides = array<i32>} : memref<1x128xf32, #tpu.memory_space<vmem>>, vector<1x128xf32>,
      %c0_21 = arith.constant 0 : index
      %c0_22 = arith.constant 0 : index
      %29 = vector.load %arg10[%c0_21, %c0_22] : memref<1x128xf32, #tpu.memory_space<vmem>>, vector<1x128xf32>
      %30 = arith.maximumf %29, %16 : vector<1x128xf32>
      %c0_23 = arith.constant 0 : index
      %c0_24 = arith.constant 0 : index
      %31 = vector.load %arg10[%c0_23, %c0_24] : memref<1x128xf32, #tpu.memory_space<vmem>>, vector<1x128xf32>
      tpu.vector_store %arg10[%c0_23, %c0_24], %30 {strides = array<i32>} : memref<1x128xf32, #tpu.memory_space<vmem>>, vector<1x128xf32>,
    } else {
    }
    %c0_i32_15 = arith.constant 0 : i32
    %23 = arith.cmpi eq, %arg1, %c0_i32_15 : i32
    %24 = arith.extui %23 : i1 to i32
    %c0_i32_16 = arith.constant 0 : i32
    %25 = arith.cmpi ne, %24, %c0_i32_16 : i32
    scf.if %25 {
      %c0_17 = arith.constant 0 : index
      %c0_18 = arith.constant 0 : index
      %26 = vector.load %arg9[%c0_17, %c0_18] : memref<1x128xf32, #tpu.memory_space<vmem>>, vector<1x128xf32>
      %cst_19 = arith.constant 3.906250e-03 : f32
      %27 = vector.broadcast %cst_19 : f32 to vector<1x128xf32>
      %28 = arith.mulf %26, %27 : vector<1x128xf32>
      %c0_20 = arith.constant 0 : index
      %c0_21 = arith.constant 0 : index
      %29 = vector.load %arg10[%c0_20, %c0_21] : memref<1x128xf32, #tpu.memory_space<vmem>>, vector<1x128xf32>
      %30 = tpu.concatenate %28, %29 in 0 : vector<1x128xf32>, vector<1x128xf32> -> vector<2x128xf32>
      %c0_22 = arith.constant 0 : index
      %c0_23 = arith.constant 0 : index
      %31 = vector.load %arg5[%c0_22, %c0_23] : memref<128x8xf32, #tpu.memory_space<vmem>>, vector<128x8xf32>
      %cst_24 = arith.constant dense<0.000000e+00> : vector<2x8xf32>
      %32 = tpu.matmul %30, %31, %cst_24 {dimension_numbers = #tpu.dot_dimension_numbers<[1], [0], [0], [1], [0, 0, 1, 1], [], []>} : vector<2x128xf32>, vector<128x8xf32>, vector<2x8xf32> -> vector<2x8xf32>
      %cst_25 = arith.constant 0.000000e+00 : f32
      %33 = vector.broadcast %cst_25 : f32 to vector<2x8xf32>
      %34 = arith.maximumf %32, %33 : vector<2x8xf32>
      %c0_26 = arith.constant 0 : index
      %c0_27 = arith.constant 0 : index
      %35 = vector.load %arg6[%c0_26, %c0_27] : memref<8x128xf32, #tpu.memory_space<vmem>>, vector<8x128xf32>
      %cst_28 = arith.constant dense<0.000000e+00> : vector<2x128xf32>
      %36 = tpu.matmul %34, %35, %cst_28 {dimension_numbers = #tpu.dot_dimension_numbers<[1], [0], [0], [1], [0, 0, 1, 1], [], []>} : vector<2x8xf32>, vector<8x128xf32>, vector<2x128xf32> -> vector<2x128xf32>
      %37 = vector.extract_strided_slice %36 {offsets = [0, 0], sizes = [1, 128], strides = [1, 1]} : vector<2x128xf32> to vector<1x128xf32>
      %38 = vector.extract_strided_slice %36 {offsets = [1, 0], sizes = [1, 128], strides = [1, 1]} : vector<2x128xf32> to vector<1x128xf32>
      %39 = arith.addf %37, %38 : vector<1x128xf32>
      %40 = arith.negf %39 : vector<1x128xf32>
      %41 = math.exp %40 : vector<1x128xf32>
      %cst_29 = arith.constant 1.000000e+00 : f32
      %42 = vector.broadcast %cst_29 : f32 to vector<1x128xf32>
      %43 = arith.addf %42, %41 : vector<1x128xf32>
      %44 = arith.divf %42, %43 : vector<1x128xf32>
      %45 = vector.shape_cast %44 : vector<1x128xf32> to vector<1x128xf32>
      %46 = vector.broadcast %45 : vector<1x128xf32> to vector<8x128xf32>
      %c0_30 = arith.constant 0 : index
      %c0_31 = arith.constant 0 : index
      %c0_32 = arith.constant 0 : index
      %47 = vector.load %arg8[%c0_30, %c0_31, %c0_32] : memref<1x8x128xf32, #tpu.memory_space<vmem>>, vector<1x8x128xf32>
      %48 = vector.shape_cast %47 : vector<1x8x128xf32> to vector<8x128xf32>
      %49 = vector.shape_cast %46 : vector<8x128xf32> to vector<1x8x128xf32>
      tpu.vector_store %arg8[%c0_30, %c0_31, %c0_32], %49 {strides = array<i32>} : memref<1x8x128xf32, #tpu.memory_space<vmem>>, vector<1x8x128xf32>,
    } else {
    }
    return
  }
  func.func @transform_0(%arg0: i32, %arg1: i32) -> (i32, i32, i32) {
    %c0_i32 = arith.constant 0 : i32
    %c0_i32_0 = arith.constant 0 : i32
    return %arg0, %arg1, %c0_i32 : i32, i32, i32
  }
  func.func @transform_1(%arg0: i32, %arg1: i32) -> (i32, i32) {
    %c0_i32 = arith.constant 0 : i32
    %c0_i32_0 = arith.constant 0 : i32
    %c0_i32_1 = arith.constant 0 : i32
    return %c0_i32, %c0_i32_0 : i32, i32
  }
  func.func @transform_2(%arg0: i32, %arg1: i32) -> (i32, i32) {
    %c0_i32 = arith.constant 0 : i32
    %c0_i32_0 = arith.constant 0 : i32
    %c0_i32_1 = arith.constant 0 : i32
    return %c0_i32, %c0_i32_0 : i32, i32
  }
  func.func @transform_3(%arg0: i32, %arg1: i32) -> (i32, i32) {
    %c0_i32 = arith.constant 0 : i32
    %c0_i32_0 = arith.constant 0 : i32
    %c0_i32_1 = arith.constant 0 : i32
    return %c0_i32, %c0_i32_0 : i32, i32
  }
  func.func @transform_4(%arg0: i32, %arg1: i32) -> (i32, i32) {
    %c0_i32 = arith.constant 0 : i32
    %c0_i32_0 = arith.constant 0 : i32
    %c0_i32_1 = arith.constant 0 : i32
    return %c0_i32, %c0_i32_0 : i32, i32
  }
  func.func @transform_5(%arg0: i32, %arg1: i32) -> (i32, i32, i32) {
    %c0_i32 = arith.constant 0 : i32
    %c0_i32_0 = arith.constant 0 : i32
    return %arg0, %arg1, %c0_i32 : i32, i32, i32
  }
  func.func @transform_6(%arg0: i32, %arg1: i32) -> (i32, i32, i32) {
    %c0_i32 = arith.constant 0 : i32
    %c0_i32_0 = arith.constant 0 : i32
    %c0_i32_1 = arith.constant 0 : i32
    return %arg0, %c0_i32, %c0_i32_0 : i32, i32, i32
  }
}

module attributes {stable_mosaic.version = 11 : i64} {
  func.func @_spatial_attn_kernel(%arg0: i32, %arg1: memref<1x16x16x128xbf16, #tpu.memory_space<vmem>>, %arg2: memref<1x8x128xf32, #tpu.memory_space<vmem>>, %arg3: memref<7x44x16xf32, #tpu.memory_space<vmem>>, %arg4: memref<1x16x16xf32, #tpu.memory_space<vmem>>, %arg5: memref<22x44xf32, #tpu.memory_space<vmem>>) attributes {dimension_semantics = [#tpu.dimension_semantics<parallel>], iteration_bounds = array<i64: 2>, scalar_prefetch = 0 : i64, scratch_operands = 1 : i64, tpu.core_type = #tpu.core_type<tc>, window_params = [{transform_indices = @transform_0, window_bounds = array<i64: 1, 16, 16, 128>}, {transform_indices = @transform_1, window_bounds = array<i64: 1, 8, 128>}, {pipeline_mode = #tpu.pipeline_mode<synchronous>, transform_indices = @transform_2, window_bounds = array<i64: 7, 44, 16>}, {transform_indices = @transform_3, window_bounds = array<i64: 1, 16, 16>}]} {
    %c0 = arith.constant 0 : index
    %c0_0 = arith.constant 0 : index
    %c0_1 = arith.constant 0 : index
    %0 = vector.load %arg2[%c0, %c0_0, %c0_1] : memref<1x8x128xf32, #tpu.memory_space<vmem>>, vector<1x1x128xf32>
    %1 = vector.shape_cast %0 : vector<1x1x128xf32> to vector<1x128xf32>
    %2 = vector.shape_cast %1 : vector<1x128xf32> to vector<1x1x128xf32>
    %c0_2 = arith.constant 0 : index
    %c0_3 = arith.constant 0 : index
    %c0_4 = arith.constant 0 : index
    %c0_5 = arith.constant 0 : index
    %3 = vector.load %arg1[%c0_2, %c0_3, %c0_4, %c0_5] : memref<1x16x16x128xbf16, #tpu.memory_space<vmem>>, vector<1x16x16x128xbf16>
    %4 = vector.shape_cast %3 : vector<1x16x16x128xbf16> to vector<16x16x128xbf16>
    %5 = arith.extf %4 : vector<16x16x128xbf16> to vector<16x16x128xf32>
    %6 = vector.broadcast %2 : vector<1x1x128xf32> to vector<16x16x128xf32>
    %7 = arith.mulf %5, %6 : vector<16x16x128xf32>
    %cst = arith.constant dense<0.000000e+00> : vector<16x16xf32>
    %8 = vector.multi_reduction <add>, %7, %cst [2] : vector<16x16x128xf32> to vector<16x16xf32>
    %cst_6 = arith.constant 3.125000e-02 : f32
    %9 = vector.broadcast %cst_6 : f32 to vector<16x16xf32>
    %10 = arith.mulf %8, %9 : vector<16x16xf32>
    %cst_7 = arith.constant dense<0xFF800000> : vector<16x16xf32>
    %11 = vector.multi_reduction <maximumf>, %7, %cst_7 [2] : vector<16x16x128xf32> to vector<16x16xf32>
    %cst_8 = arith.constant 0.000000e+00 : f32
    %12 = vector.broadcast %cst_8 : f32 to vector<22x44xf32>
    %c0_9 = arith.constant 0 : index
    %c0_10 = arith.constant 0 : index
    %13 = vector.load %arg5[%c0_9, %c0_10] : memref<22x44xf32, #tpu.memory_space<vmem>>, vector<22x44xf32>
    tpu.vector_store %arg5[%c0_9, %c0_10], %12 {strides = array<i32>} : memref<22x44xf32, #tpu.memory_space<vmem>>, vector<22x44xf32>,
    %c3 = arith.constant 3 : index
    %c3_11 = arith.constant 3 : index
    %14 = vector.load %arg5[%c3, %c3_11] : memref<22x44xf32, #tpu.memory_space<vmem>>, vector<16x16xf32>
    tpu.vector_store %arg5[%c3, %c3_11], %10 {strides = array<i32>} : memref<22x44xf32, #tpu.memory_space<vmem>>, vector<16x16xf32>,
    %c3_12 = arith.constant 3 : index
    %c25 = arith.constant 25 : index
    %15 = vector.load %arg5[%c3_12, %c25] : memref<22x44xf32, #tpu.memory_space<vmem>>, vector<16x16xf32>
    tpu.vector_store %arg5[%c3_12, %c25], %11 {strides = array<i32>} : memref<22x44xf32, #tpu.memory_space<vmem>>, vector<16x16xf32>,
    %cst_13 = arith.constant 0.000000e+00 : f32
    %16 = vector.broadcast %cst_13 : f32 to vector<16x16xf32>
    %c0_14 = arith.constant 0 : index
    %c0_15 = arith.constant 0 : index
    %17 = vector.load %arg5[%c0_14, %c0_15] : memref<22x44xf32, #tpu.memory_space<vmem>>, vector<16x44xf32>
    %c0_16 = arith.constant 0 : index
    %c0_17 = arith.constant 0 : index
    %c0_18 = arith.constant 0 : index
    %18 = vector.load %arg3[%c0_16, %c0_17, %c0_18] : memref<7x44x16xf32, #tpu.memory_space<vmem>>, vector<1x44x16xf32>
    %19 = vector.shape_cast %18 : vector<1x44x16xf32> to vector<44x16xf32>
    %cst_19 = arith.constant dense<0.000000e+00> : vector<16x16xf32>
    %20 = tpu.matmul %17, %19, %cst_19 {dimension_numbers = #tpu.dot_dimension_numbers<[1], [0], [0], [1], [0, 0, 1, 1], [], []>} : vector<16x44xf32>, vector<44x16xf32>, vector<16x16xf32> -> vector<16x16xf32>
    %21 = arith.addf %16, %20 : vector<16x16xf32>
    %c1 = arith.constant 1 : index
    %c0_20 = arith.constant 0 : index
    %22 = vector.load %arg5[%c1, %c0_20] : memref<22x44xf32, #tpu.memory_space<vmem>>, vector<16x44xf32>
    %c1_21 = arith.constant 1 : index
    %c0_22 = arith.constant 0 : index
    %c0_23 = arith.constant 0 : index
    %23 = vector.load %arg3[%c1_21, %c0_22, %c0_23] : memref<7x44x16xf32, #tpu.memory_space<vmem>>, vector<1x44x16xf32>
    %24 = vector.shape_cast %23 : vector<1x44x16xf32> to vector<44x16xf32>
    %cst_24 = arith.constant dense<0.000000e+00> : vector<16x16xf32>
    %25 = tpu.matmul %22, %24, %cst_24 {dimension_numbers = #tpu.dot_dimension_numbers<[1], [0], [0], [1], [0, 0, 1, 1], [], []>} : vector<16x44xf32>, vector<44x16xf32>, vector<16x16xf32> -> vector<16x16xf32>
    %26 = arith.addf %21, %25 : vector<16x16xf32>
    %c2 = arith.constant 2 : index
    %c0_25 = arith.constant 0 : index
    %27 = vector.load %arg5[%c2, %c0_25] : memref<22x44xf32, #tpu.memory_space<vmem>>, vector<16x44xf32>
    %c2_26 = arith.constant 2 : index
    %c0_27 = arith.constant 0 : index
    %c0_28 = arith.constant 0 : index
    %28 = vector.load %arg3[%c2_26, %c0_27, %c0_28] : memref<7x44x16xf32, #tpu.memory_space<vmem>>, vector<1x44x16xf32>
    %29 = vector.shape_cast %28 : vector<1x44x16xf32> to vector<44x16xf32>
    %cst_29 = arith.constant dense<0.000000e+00> : vector<16x16xf32>
    %30 = tpu.matmul %27, %29, %cst_29 {dimension_numbers = #tpu.dot_dimension_numbers<[1], [0], [0], [1], [0, 0, 1, 1], [], []>} : vector<16x44xf32>, vector<44x16xf32>, vector<16x16xf32> -> vector<16x16xf32>
    %31 = arith.addf %26, %30 : vector<16x16xf32>
    %c3_30 = arith.constant 3 : index
    %c0_31 = arith.constant 0 : index
    %32 = vector.load %arg5[%c3_30, %c0_31] : memref<22x44xf32, #tpu.memory_space<vmem>>, vector<16x44xf32>
    %c3_32 = arith.constant 3 : index
    %c0_33 = arith.constant 0 : index
    %c0_34 = arith.constant 0 : index
    %33 = vector.load %arg3[%c3_32, %c0_33, %c0_34] : memref<7x44x16xf32, #tpu.memory_space<vmem>>, vector<1x44x16xf32>
    %34 = vector.shape_cast %33 : vector<1x44x16xf32> to vector<44x16xf32>
    %cst_35 = arith.constant dense<0.000000e+00> : vector<16x16xf32>
    %35 = tpu.matmul %32, %34, %cst_35 {dimension_numbers = #tpu.dot_dimension_numbers<[1], [0], [0], [1], [0, 0, 1, 1], [], []>} : vector<16x44xf32>, vector<44x16xf32>, vector<16x16xf32> -> vector<16x16xf32>
    %36 = arith.addf %31, %35 : vector<16x16xf32>
    %c4 = arith.constant 4 : index
    %c0_36 = arith.constant 0 : index
    %37 = vector.load %arg5[%c4, %c0_36] : memref<22x44xf32, #tpu.memory_space<vmem>>, vector<16x44xf32>
    %c4_37 = arith.constant 4 : index
    %c0_38 = arith.constant 0 : index
    %c0_39 = arith.constant 0 : index
    %38 = vector.load %arg3[%c4_37, %c0_38, %c0_39] : memref<7x44x16xf32, #tpu.memory_space<vmem>>, vector<1x44x16xf32>
    %39 = vector.shape_cast %38 : vector<1x44x16xf32> to vector<44x16xf32>
    %cst_40 = arith.constant dense<0.000000e+00> : vector<16x16xf32>
    %40 = tpu.matmul %37, %39, %cst_40 {dimension_numbers = #tpu.dot_dimension_numbers<[1], [0], [0], [1], [0, 0, 1, 1], [], []>} : vector<16x44xf32>, vector<44x16xf32>, vector<16x16xf32> -> vector<16x16xf32>
    %41 = arith.addf %36, %40 : vector<16x16xf32>
    %c5 = arith.constant 5 : index
    %c0_41 = arith.constant 0 : index
    %42 = vector.load %arg5[%c5, %c0_41] : memref<22x44xf32, #tpu.memory_space<vmem>>, vector<16x44xf32>
    %c5_42 = arith.constant 5 : index
    %c0_43 = arith.constant 0 : index
    %c0_44 = arith.constant 0 : index
    %43 = vector.load %arg3[%c5_42, %c0_43, %c0_44] : memref<7x44x16xf32, #tpu.memory_space<vmem>>, vector<1x44x16xf32>
    %44 = vector.shape_cast %43 : vector<1x44x16xf32> to vector<44x16xf32>
    %cst_45 = arith.constant dense<0.000000e+00> : vector<16x16xf32>
    %45 = tpu.matmul %42, %44, %cst_45 {dimension_numbers = #tpu.dot_dimension_numbers<[1], [0], [0], [1], [0, 0, 1, 1], [], []>} : vector<16x44xf32>, vector<44x16xf32>, vector<16x16xf32> -> vector<16x16xf32>
    %46 = arith.addf %41, %45 : vector<16x16xf32>
    %c6 = arith.constant 6 : index
    %c0_46 = arith.constant 0 : index
    %47 = vector.load %arg5[%c6, %c0_46] : memref<22x44xf32, #tpu.memory_space<vmem>>, vector<16x44xf32>
    %c6_47 = arith.constant 6 : index
    %c0_48 = arith.constant 0 : index
    %c0_49 = arith.constant 0 : index
    %48 = vector.load %arg3[%c6_47, %c0_48, %c0_49] : memref<7x44x16xf32, #tpu.memory_space<vmem>>, vector<1x44x16xf32>
    %49 = vector.shape_cast %48 : vector<1x44x16xf32> to vector<44x16xf32>
    %cst_50 = arith.constant dense<0.000000e+00> : vector<16x16xf32>
    %50 = tpu.matmul %47, %49, %cst_50 {dimension_numbers = #tpu.dot_dimension_numbers<[1], [0], [0], [1], [0, 0, 1, 1], [], []>} : vector<16x44xf32>, vector<44x16xf32>, vector<16x16xf32> -> vector<16x16xf32>
    %51 = arith.addf %46, %50 : vector<16x16xf32>
    %52 = arith.negf %51 : vector<16x16xf32>
    %53 = math.exp %52 : vector<16x16xf32>
    %cst_51 = arith.constant 1.000000e+00 : f32
    %54 = vector.broadcast %cst_51 : f32 to vector<16x16xf32>
    %55 = arith.addf %54, %53 : vector<16x16xf32>
    %56 = arith.divf %54, %55 : vector<16x16xf32>
    %c0_52 = arith.constant 0 : index
    %c0_53 = arith.constant 0 : index
    %c0_54 = arith.constant 0 : index
    %57 = vector.load %arg4[%c0_52, %c0_53, %c0_54] : memref<1x16x16xf32, #tpu.memory_space<vmem>>, vector<1x16x16xf32>
    %58 = vector.shape_cast %57 : vector<1x16x16xf32> to vector<16x16xf32>
    %59 = vector.shape_cast %56 : vector<16x16xf32> to vector<1x16x16xf32>
    tpu.vector_store %arg4[%c0_52, %c0_53, %c0_54], %59 {strides = array<i32>} : memref<1x16x16xf32, #tpu.memory_space<vmem>>, vector<1x16x16xf32>,
    return
  }
  func.func @transform_0(%arg0: i32) -> (i32, i32, i32, i32) {
    %c0_i32 = arith.constant 0 : i32
    %c0_i32_0 = arith.constant 0 : i32
    %c0_i32_1 = arith.constant 0 : i32
    %c0_i32_2 = arith.constant 0 : i32
    return %arg0, %c0_i32, %c0_i32_0, %c0_i32_1 : i32, i32, i32, i32
  }
  func.func @transform_1(%arg0: i32) -> (i32, i32, i32) {
    %c0_i32 = arith.constant 0 : i32
    %c0_i32_0 = arith.constant 0 : i32
    %c0_i32_1 = arith.constant 0 : i32
    return %arg0, %c0_i32, %c0_i32_0 : i32, i32, i32
  }
  func.func @transform_2(%arg0: i32) -> (i32, i32, i32) {
    %c0_i32 = arith.constant 0 : i32
    %c0_i32_0 = arith.constant 0 : i32
    %c0_i32_1 = arith.constant 0 : i32
    %c0_i32_2 = arith.constant 0 : i32
    return %c0_i32, %c0_i32_0, %c0_i32_1 : i32, i32, i32
  }
  func.func @transform_3(%arg0: i32) -> (i32, i32, i32) {
    %c0_i32 = arith.constant 0 : i32
    %c0_i32_0 = arith.constant 0 : i32
    %c0_i32_1 = arith.constant 0 : i32
    return %arg0, %c0_i32, %c0_i32_0 : i32, i32, i32
  }
}

module attributes {stable_mosaic.version = 11 : i64} {
  func.func @_cat_conv_kernel(%arg0: i32, %arg1: i32, %arg2: memref<1x256x128xbf16, #tpu.memory_space<vmem>>, %arg3: memref<1x256x128xbf16, #tpu.memory_space<vmem>>, %arg4: memref<1x8x128xf32, #tpu.memory_space<vmem>>, %arg5: memref<1x256x1xf32, #tpu.memory_space<vmem>>, %arg6: memref<256x128xbf16, #tpu.memory_space<vmem>>, %arg7: memref<1x128xf32, #tpu.memory_space<vmem>>, %arg8: memref<1x256x128xf32, #tpu.memory_space<vmem>>) attributes {dimension_semantics = [#tpu.dimension_semantics<parallel>, #tpu.dimension_semantics<parallel>], iteration_bounds = array<i64: 2, 1>, scalar_prefetch = 0 : i64, scratch_operands = 0 : i64, tpu.core_type = #tpu.core_type<tc>, window_params = [{transform_indices = @transform_0, window_bounds = array<i64: 1, 256, 128>}, {transform_indices = @transform_1, window_bounds = array<i64: 1, 256, 128>}, {transform_indices = @transform_2, window_bounds = array<i64: 1, 8, 128>}, {transform_indices = @transform_3, window_bounds = array<i64: 1, 256, 1>}, {pipeline_mode = #tpu.pipeline_mode<synchronous>, transform_indices = @transform_4, window_bounds = array<i64: 256, 128>}, {pipeline_mode = #tpu.pipeline_mode<synchronous>, transform_indices = @transform_5, window_bounds = array<i64: 1, 128>}, {transform_indices = @transform_6, window_bounds = array<i64: 1, 256, 128>}]} {
    %c0 = arith.constant 0 : index
    %c0_0 = arith.constant 0 : index
    %c0_1 = arith.constant 0 : index
    %0 = vector.load %arg3[%c0, %c0_0, %c0_1] : memref<1x256x128xbf16, #tpu.memory_space<vmem>>, vector<1x256x128xbf16>
    %1 = vector.shape_cast %0 : vector<1x256x128xbf16> to vector<256x128xbf16>
    %2 = arith.extf %1 : vector<256x128xbf16> to vector<256x128xf32>
    %c0_2 = arith.constant 0 : index
    %c0_3 = arith.constant 0 : index
    %c0_4 = arith.constant 0 : index
    %3 = vector.load %arg4[%c0_2, %c0_3, %c0_4] : memref<1x8x128xf32, #tpu.memory_space<vmem>>, vector<1x1x128xf32>
    %4 = vector.shape_cast %3 : vector<1x1x128xf32> to vector<1x128xf32>
    %5 = vector.broadcast %4 : vector<1x128xf32> to vector<256x128xf32>
    %6 = arith.mulf %2, %5 : vector<256x128xf32>
    %c0_5 = arith.constant 0 : index
    %c0_6 = arith.constant 0 : index
    %c0_7 = arith.constant 0 : index
    %7 = vector.load %arg5[%c0_5, %c0_6, %c0_7] : memref<1x256x1xf32, #tpu.memory_space<vmem>>, vector<1x256x1xf32>
    %8 = vector.shape_cast %7 : vector<1x256x1xf32> to vector<256x1xf32>
    %9 = vector.broadcast %8 : vector<256x1xf32> to vector<256x128xf32>
    %10 = arith.mulf %6, %9 : vector<256x128xf32>
    %c0_8 = arith.constant 0 : index
    %c0_9 = arith.constant 0 : index
    %c0_10 = arith.constant 0 : index
    %11 = vector.load %arg2[%c0_8, %c0_9, %c0_10] : memref<1x256x128xbf16, #tpu.memory_space<vmem>>, vector<1x256x128xbf16>
    %12 = vector.shape_cast %11 : vector<1x256x128xbf16> to vector<256x128xbf16>
    %13 = arith.truncf %10 : vector<256x128xf32> to vector<256x128xbf16>
    %14 = tpu.concatenate %12, %13 in 1 : vector<256x128xbf16>, vector<256x128xbf16> -> vector<256x256xbf16>
    %c0_11 = arith.constant 0 : index
    %c0_12 = arith.constant 0 : index
    %15 = vector.load %arg6[%c0_11, %c0_12] : memref<256x128xbf16, #tpu.memory_space<vmem>>, vector<256x128xbf16>
    %cst = arith.constant dense<0.000000e+00> : vector<256x128xf32>
    %16 = tpu.matmul %14, %15, %cst {dimension_numbers = #tpu.dot_dimension_numbers<[1], [0], [0], [1], [0, 0, 1, 1], [], []>} : vector<256x256xbf16>, vector<256x128xbf16>, vector<256x128xf32> -> vector<256x128xf32>
    %c0_13 = arith.constant 0 : index
    %c0_14 = arith.constant 0 : index
    %17 = vector.load %arg7[%c0_13, %c0_14] : memref<1x128xf32, #tpu.memory_space<vmem>>, vector<1x128xf32>
    %18 = vector.broadcast %17 : vector<1x128xf32> to vector<256x128xf32>
    %19 = arith.addf %16, %18 : vector<256x128xf32>
    %cst_15 = arith.constant 0.000000e+00 : f32
    %20 = vector.broadcast %cst_15 : f32 to vector<256x128xf32>
    %21 = arith.maximumf %19, %20 : vector<256x128xf32>
    %c0_16 = arith.constant 0 : index
    %c0_17 = arith.constant 0 : index
    %c0_18 = arith.constant 0 : index
    %22 = vector.load %arg8[%c0_16, %c0_17, %c0_18] : memref<1x256x128xf32, #tpu.memory_space<vmem>>, vector<1x256x128xf32>
    %23 = vector.shape_cast %22 : vector<1x256x128xf32> to vector<256x128xf32>
    %24 = vector.shape_cast %21 : vector<256x128xf32> to vector<1x256x128xf32>
    tpu.vector_store %arg8[%c0_16, %c0_17, %c0_18], %24 {strides = array<i32>} : memref<1x256x128xf32, #tpu.memory_space<vmem>>, vector<1x256x128xf32>,
    return
  }
  func.func @transform_0(%arg0: i32, %arg1: i32) -> (i32, i32, i32) {
    %c0_i32 = arith.constant 0 : i32
    %c0_i32_0 = arith.constant 0 : i32
    return %arg0, %arg1, %c0_i32 : i32, i32, i32
  }
  func.func @transform_1(%arg0: i32, %arg1: i32) -> (i32, i32, i32) {
    %c0_i32 = arith.constant 0 : i32
    %c0_i32_0 = arith.constant 0 : i32
    return %arg0, %arg1, %c0_i32 : i32, i32, i32
  }
  func.func @transform_2(%arg0: i32, %arg1: i32) -> (i32, i32, i32) {
    %c0_i32 = arith.constant 0 : i32
    %c0_i32_0 = arith.constant 0 : i32
    %c0_i32_1 = arith.constant 0 : i32
    return %arg0, %c0_i32, %c0_i32_0 : i32, i32, i32
  }
  func.func @transform_3(%arg0: i32, %arg1: i32) -> (i32, i32, i32) {
    %c0_i32 = arith.constant 0 : i32
    %c0_i32_0 = arith.constant 0 : i32
    return %arg0, %arg1, %c0_i32 : i32, i32, i32
  }
  func.func @transform_4(%arg0: i32, %arg1: i32) -> (i32, i32) {
    %c0_i32 = arith.constant 0 : i32
    %c0_i32_0 = arith.constant 0 : i32
    %c0_i32_1 = arith.constant 0 : i32
    return %c0_i32, %c0_i32_0 : i32, i32
  }
  func.func @transform_5(%arg0: i32, %arg1: i32) -> (i32, i32) {
    %c0_i32 = arith.constant 0 : i32
    %c0_i32_0 = arith.constant 0 : i32
    %c0_i32_1 = arith.constant 0 : i32
    return %c0_i32, %c0_i32_0 : i32, i32
  }
  func.func @transform_6(%arg0: i32, %arg1: i32) -> (i32, i32, i32) {
    %c0_i32 = arith.constant 0 : i32
    %c0_i32_0 = arith.constant 0 : i32
    return %arg0, %arg1, %c0_i32 : i32, i32, i32
  }
}

</mosaic_0001>

<llo_original>
// kernel: combination_forward.3
$region0: #{combination_forward.3}
  #allocation0 [shape = 'u32[]', space=smem, size = 0x4, offset = 0x4, fixed_abs, tag = 'smem constant byte address 0x4 - core index']
  #allocation1 [shape = 'u32[72,128]{1,0:T(1,128)}', space=vmem, size = 0x9000, scoped, tag = 'internal scratch']
  #allocation2 [shape = 'f32[1,128]{1,0:T(1,128)}', space=vmem, size = 0x200, scoped, tag = 'scratch operand']
  #allocation3 [shape = 'f32[1,128]{1,0:T(1,128)}', space=vmem, size = 0x200, scoped, tag = 'scratch operand']
  %s0 = inlined_call_operand.vmem [shape: bf16[2,256,144], index: 0, kind: input, shape index: {}]
  %s1 = inlined_call_operand.vmem [shape: bf16[144,128], index: 1, kind: input, shape index: {}]
  %s2 = inlined_call_operand.vmem [shape: f32[1,128], index: 2, kind: input, shape index: {}]
  %s3 = inlined_call_operand.vmem [shape: f32[128,8], index: 3, kind: input, shape index: {}]
  %s4 = inlined_call_operand.vmem [shape: f32[8,128], index: 4, kind: input, shape index: {}]
  %s5 = inlined_call_operand.vmem [shape: bf16[2,256,128], index: 5, kind: output, shape index: {0}]
  %s6 = inlined_call_operand.vmem [shape: f32[2,8,128], index: 6, kind: output, shape index: {1}]
  %7 = xla_tuple %s5, %s6
  %s8 = sld [smem:[#allocation0]]
  $region73: #{combination_forward.3} parent=0
    _
  %s10 = ssub.s32 1, %s8
  %s11 = scalar_select 0, %s10, %s8
  loop: start=0, step=1, limit=4
  $region2: #{combination_forward.3} parent=0 // loop_pre_header
    _
  $region3: #{combination_forward.3} parent=0 // loop_header
    %s13 = sphi 0, %s17
    %p14 = scmp.ge.s32.totalorder %s13, 4
    %s20 = sphi 0, %s32
    %s21 = sphi 0, %s28
    %s22 = sphi 0, %s20
    %s23 = sphi 0, %s21
    %s24 = sphi 0, %s22
    %s25 = sphi 0, %s23
    %s37 = sphi 0, %s39
    %s40 = sphi 0, %s37
    %s41 = sphi 0, %s40
    %s57 = sphi 0, %s41
    %s61 = sphi 0, %s61
    %s63 = sphi 0, %s61
    %s64 = sphi 0, %s63
    %s78 = sphi 0, %s64
    %s82 = sphi 0, %s82
    %s84 = sphi 0, %s82
    %s85 = sphi 0, %s84
    %s99 = sphi 0, %s85
    %s103 = sphi 0, %s103
    %s105 = sphi 0, %s103
    %s106 = sphi 0, %s105
    %s120 = sphi 0, %s106
    %s124 = sphi 0, %s124
    %s126 = sphi 0, %s124
    %s127 = sphi 0, %s126
    %s141 = sphi 0, %s127
    %s149 = sphi 0, %s151
    %s152 = sphi 0, %s149
    %s153 = sphi 0, %s152
    %s169 = sphi 0, %s153
    %s175 = sphi 0, %s177
    %s178 = sphi 0, %s175
    %s179 = sphi 0, %s178
    %s195 = sphi 0, %s179
  $region4: #{combination_forward.3} parent=0 // loop_header_branch
    %16 = sbr.rel (%p14) target = $region8
  $region5: #{combination_forward.3} parent=0 // loop_body
    %s18 = ssub.s32 %s13, 1
    %s19 = ssub.s32 %s13, 2
    %s26 = sadd.s32 1, %s21
    %p27 = scmp.ge.s32.totalorder %s26, 1
    %s28 = scalar_select %p27, 0, %s26
    %s29 = sadd.s32 1, %s20
    %s30 = scalar_select %p27, %s29, %s20
    %p31 = scmp.ge.s32.totalorder %s30, 2
    %s32 = scalar_select %p31, 0, %s30
    %s33 = ssub.s32 %s20, %s32
    %s34 = ssub.s32 %s21, %s28
    %s35 = sor.u32 %s33, %s34
    %p36 = scmp.eq.s32.totalorder %s35, 0
    %s38 = sadd.s32 %s37, 1
    %s39 = scalar_select %p36, %s37, %s38
    %p42 = pneg %p36
    %p43 = scmp.eq.s32.totalorder %s13, 1
    %p44 = por %p42, %p43
    %p45 = scmp.ne.s32.totalorder %s37, %s40
    %p46 = scmp.eq.s32.totalorder %s13, 0
    %p47 = por %p45, %p46
    %p48 = scmp.ne.s32.totalorder %s37, %s40
    %p49 = scmp.eq.s32.totalorder %s18, 1
    %p50 = por %p48, %p49
    %p51 = scmp.ne.s32.totalorder %s40, %s41
    %p52 = scmp.eq.s32.totalorder %s18, 0
    %p53 = por %p51, %p52
    %p54 = scmp.ne.s32.totalorder %s40, %s41
    %p55 = scmp.eq.s32.totalorder %s19, 1
    %p56 = por %p54, %p55
    %p58 = scmp.ne.s32.totalorder %s41, %s57
    %p59 = scmp.eq.s32.totalorder %s19, 0
    %p60 = por %p58, %p59
    %s62 = sadd.s32 %s61, 1
    %p65 = scmp.eq.s32.totalorder %s13, 1
    %p66 = scmp.ne.s32.totalorder %s61, %s63
    %p67 = scmp.eq.s32.totalorder %s13, 0
    %p68 = por %p66, %p67
    %p69 = scmp.ne.s32.totalorder %s61, %s63
    %p70 = scmp.eq.s32.totalorder %s18, 1
    %p71 = por %p69, %p70
    %p72 = scmp.ne.s32.totalorder %s63, %s64
    %p73 = scmp.eq.s32.totalorder %s18, 0
    %p74 = por %p72, %p73
    %p75 = scmp.ne.s32.totalorder %s63, %s64
    %p76 = scmp.eq.s32.totalorder %s19, 1
    %p77 = por %p75, %p76
    %p79 = scmp.ne.s32.totalorder %s64, %s78
    %p80 = scmp.eq.s32.totalorder %s19, 0
    %p81 = por %p79, %p80
    %s83 = sadd.s32 %s82, 1
    %p86 = scmp.eq.s32.totalorder %s13, 1
    %p87 = scmp.ne.s32.totalorder %s82, %s84
    %p88 = scmp.eq.s32.totalorder %s13, 0
    %p89 = por %p87, %p88
    %p90 = scmp.ne.s32.totalorder %s82, %s84
    %p91 = scmp.eq.s32.totalorder %s18, 1
    %p92 = por %p90, %p91
    %p93 = scmp.ne.s32.totalorder %s84, %s85
    %p94 = scmp.eq.s32.totalorder %s18, 0
    %p95 = por %p93, %p94
    %p96 = scmp.ne.s32.totalorder %s84, %s85
    %p97 = scmp.eq.s32.totalorder %s19, 1
    %p98 = por %p96, %p97
    %p100 = scmp.ne.s32.totalorder %s85, %s99
    %p101 = scmp.eq.s32.totalorder %s19, 0
    %p102 = por %p100, %p101
    %s104 = sadd.s32 %s103, 1
    %p107 = scmp.eq.s32.totalorder %s13, 1
    %p108 = scmp.ne.s32.totalorder %s103, %s105
    %p109 = scmp.eq.s32.totalorder %s13, 0
    %p110 = por %p108, %p109
    %p111 = scmp.ne.s32.totalorder %s103, %s105
    %p112 = scmp.eq.s32.totalorder %s18, 1
    %p113 = por %p111, %p112
    %p114 = scmp.ne.s32.totalorder %s105, %s106
    %p115 = scmp.eq.s32.totalorder %s18, 0
    %p116 = por %p114, %p115
    %p117 = scmp.ne.s32.totalorder %s105, %s106
    %p118 = scmp.eq.s32.totalorder %s19, 1
    %p119 = por %p117, %p118
    %p121 = scmp.ne.s32.totalorder %s106, %s120
    %p122 = scmp.eq.s32.totalorder %s19, 0
    %p123 = por %p121, %p122
    %s125 = sadd.s32 %s124, 1
    %p128 = scmp.eq.s32.totalorder %s13, 1
    %p129 = scmp.ne.s32.totalorder %s124, %s126
    %p130 = scmp.eq.s32.totalorder %s13, 0
    %p131 = por %p129, %p130
    %p132 = scmp.ne.s32.totalorder %s124, %s126
    %p133 = scmp.eq.s32.totalorder %s18, 1
    %p134 = por %p132, %p133
    %p135 = scmp.ne.s32.totalorder %s126, %s127
    %p136 = scmp.eq.s32.totalorder %s18, 0
    %p137 = por %p135, %p136
    %p138 = scmp.ne.s32.totalorder %s126, %s127
    %p139 = scmp.eq.s32.totalorder %s19, 1
    %p140 = por %p138, %p139
    %p142 = scmp.ne.s32.totalorder %s127, %s141
    %p143 = scmp.eq.s32.totalorder %s19, 0
    %p144 = por %p142, %p143
    %s145 = ssub.s32 %s20, %s32
    %s146 = ssub.s32 %s21, %s28
    %s147 = sor.u32 %s145, %s146
    %p148 = scmp.eq.s32.totalorder %s147, 0
    %s150 = sadd.s32 %s149, 1
    %s151 = scalar_select %p148, %s149, %s150
    %p154 = pneg %p148
    %p155 = scmp.eq.s32.totalorder %s13, 1
    %p156 = por %p154, %p155
    %p157 = scmp.ne.s32.totalorder %s149, %s152
    %p158 = scmp.eq.s32.totalorder %s13, 0
    %p159 = por %p157, %p158
    %p160 = scmp.ne.s32.totalorder %s149, %s152
    %p161 = scmp.eq.s32.totalorder %s18, 1
    %p162 = por %p160, %p161
    %p163 = scmp.ne.s32.totalorder %s152, %s153
    %p164 = scmp.eq.s32.totalorder %s18, 0
    %p165 = por %p163, %p164
    %p166 = scmp.ne.s32.totalorder %s152, %s153
    %p167 = scmp.eq.s32.totalorder %s19, 1
    %p168 = por %p166, %p167
    %p170 = scmp.ne.s32.totalorder %s153, %s169
    %p171 = scmp.eq.s32.totalorder %s19, 0
    %p172 = por %p170, %p171
    %s173 = ssub.s32 %s20, %s32
    %p174 = scmp.eq.s32.totalorder %s173, 0
    %s176 = sadd.s32 %s175, 1
    %s177 = scalar_select %p174, %s175, %s176
    %p180 = pneg %p174
    %p181 = scmp.eq.s32.totalorder %s13, 1
    %p182 = por %p180, %p181
    %p183 = scmp.ne.s32.totalorder %s175, %s178
    %p184 = scmp.eq.s32.totalorder %s13, 0
    %p185 = por %p183, %p184
    %p186 = scmp.ne.s32.totalorder %s175, %s178
    %p187 = scmp.eq.s32.totalorder %s18, 1
    %p188 = por %p186, %p187
    %p189 = scmp.ne.s32.totalorder %s178, %s179
    %p190 = scmp.eq.s32.totalorder %s18, 0
    %p191 = por %p189, %p190
    %p192 = scmp.ne.s32.totalorder %s178, %s179
    %p193 = scmp.eq.s32.totalorder %s19, 1
    %p194 = por %p192, %p193
    %p196 = scmp.ne.s32.totalorder %s179, %s195
    %p197 = scmp.eq.s32.totalorder %s19, 0
    %p198 = por %p196, %p197
    %p199 = scmp.le.s32.totalorder 1, %s13
    %p200 = scmp.lt.s32.totalorder %s13, 3
    %p201 = pnand %p199, %p200
    %p202 = pneg %p201
    // Predicated region
    $region9: #{combination_forward.3} parent=5 // pred_check
      _
    $region10: #{combination_forward.3} parent=5 // pred_check_branch
      %204 = sbr.rel (%p201) target = $region12
    $region11: #{combination_forward.3} parent=5 // pred_region
      %s205 = ssub.s32 %s13, 1
      // Predicated region
      $region13: #{combination_forward.3} parent=11 // pred_check
        %p206 = pneg %p74
      $region14: #{combination_forward.3} parent=11 // pred_check_branch
        %208 = sbr.rel (%p206) target = $region16
      $region15: #{combination_forward.3} parent=11 // pred_region
        _
      $region16: #{combination_forward.3} parent=11 // pred_fallthru
        _
      // Predicated region
      $region17: #{combination_forward.3} parent=11 // pred_check
        %p209 = pneg %p95
      $region18: #{combination_forward.3} parent=11 // pred_check_branch
        %211 = sbr.rel (%p209) target = $region20
      $region19: #{combination_forward.3} parent=11 // pred_region
        _
      $region20: #{combination_forward.3} parent=11 // pred_fallthru
        _
      // Predicated region
      $region21: #{combination_forward.3} parent=11 // pred_check
        %p212 = pneg %p116
      $region22: #{combination_forward.3} parent=11 // pred_check_branch
        %214 = sbr.rel (%p212) target = $region24
      $region23: #{combination_forward.3} parent=11 // pred_region
        _
      $region24: #{combination_forward.3} parent=11 // pred_fallthru
        _
      // Predicated region
      $region25: #{combination_forward.3} parent=11 // pred_check
        %p215 = pneg %p137
      $region26: #{combination_forward.3} parent=11 // pred_check_branch
        %217 = sbr.rel (%p215) target = $region28
      $region27: #{combination_forward.3} parent=11 // pred_region
        _
      $region28: #{combination_forward.3} parent=11 // pred_fallthru
        _
    $region12: #{combination_forward.3} parent=5 // pred_fallthru
      _
    %p218 = scmp.lt.s32.totalorder %s13, 2
    // Predicated region
    $region29: #{combination_forward.3} parent=5 // pred_check
      %p219 = pneg %p218
    $region30: #{combination_forward.3} parent=5 // pred_check_branch
      %221 = sbr.rel (%p219) target = $region32
    $region31: #{combination_forward.3} parent=5 // pred_region
      // Predicated region
      $region33: #{combination_forward.3} parent=31 // pred_check
        %p222 = pneg %p47
      $region34: #{combination_forward.3} parent=31 // pred_check_branch
        %224 = sbr.rel (%p222) target = $region36
      $region35: #{combination_forward.3} parent=31 // pred_region
        %s225 = smul.u32 32, %s21
        %p226 = scmp.lt.s32.totalorder %s20, 1
        %s227 = scalar_select %p226, %s20, 1
        %p228 = scmp.lt.s32.totalorder %s225, 31
        %s229 = scalar_select %p228, %s225, 31
        %s230 = smul.addr %s229, 2
        %s231 = smul.addr %s227, 64
        %s232 = sadd.s32 %s230, %s231
        %s233 = smul.addr %s232, 4
        %s234 = scalar_lea.vmem %s0, %s233
        %s235 = smul.u32 32, %s21
      $region36: #{combination_forward.3} parent=31 // pred_fallthru
        _
    $region32: #{combination_forward.3} parent=5 // pred_fallthru
      _
    %p236 = scmp.le.s32.totalorder 1, %s13
    %p237 = scmp.lt.s32.totalorder %s13, 3
    %p238 = pnand %p236, %p237
    %p239 = pneg %p238
    // Predicated region
    $region37: #{combination_forward.3} parent=5 // pred_check
      _
    $region38: #{combination_forward.3} parent=5 // pred_check_branch
      %241 = sbr.rel (%p238) target = $region40
    $region39: #{combination_forward.3} parent=5 // pred_region
      %s242 = ssub.s32 %s13, 1
      %s243 = smul.u32 32, %s23
      %p244 = scmp.lt.s32.totalorder %s22, 1
      %s245 = scalar_select %p244, %s22, 1
      %p246 = scmp.lt.s32.totalorder %s243, 31
      %s247 = scalar_select %p246, %s243, 31
      %s248 = smul.addr %s247, 2
      %s249 = smul.addr %s245, 64
      %s250 = sadd.s32 %s248, %s249
      %s251 = smul.addr %s250, 4
      %s252 = scalar_lea.vmem %s0, %s251
      %p253 = pneg %p53
      %p254 = pneg %p50
      %p255 = pneg %p74
      %p256 = pneg %p71
      %p257 = pneg %p95
      %p258 = pneg %p92
      %p259 = pneg %p116
      %p260 = pneg %p113
      %p261 = pneg %p137
      %p262 = pneg %p134
      %p263 = pneg %p165
      %p264 = pneg %p162
      %s265 = smul.u32 32, %s23
      %p266 = scmp.lt.s32.totalorder %s22, 1
      %s267 = scalar_select %p266, %s22, 1
      %p268 = scmp.lt.s32.totalorder %s265, 31
      %s269 = scalar_select %p268, %s265, 31
      %s270 = smul.addr %s267, 32
      %s271 = sadd.s32 %s269, %s270
      %s272 = smul.addr %s271, 4
      %s273 = scalar_lea.vmem %s5, %s272
      %p274 = pneg %p191
      %p275 = pneg %p188
      %p276 = scmp.lt.s32.totalorder %s22, 1
      %s277 = scalar_select %p276, %s22, 1
      %s278 = smul.addr %s277, 8
      %s279 = scalar_lea.vmem %s6, %s278
      %s280 = smul.u32 32, %s23
      %p281 = scmp.lt.s32.totalorder %s22, 1
      %s282 = scalar_select %p281, %s22, 1
      %p283 = scmp.lt.s32.totalorder %s280, 31
      %s284 = scalar_select %p283, %s280, 31
      %s285 = smul.addr %s284, 2
      %s286 = smul.addr %s282, 64
      %s287 = sadd.s32 %s285, %s286
      %s288 = smul.addr %s287, 4
      %s289 = scalar_lea.vmem %s0, %s288
      %s290 = smul.u32 32, %s23
      %s291 = smul.u32 32, %s23
      %p292 = scmp.lt.s32.totalorder %s22, 1
      %s293 = scalar_select %p292, %s22, 1
      %p294 = scmp.lt.s32.totalorder %s291, 31
      %s295 = scalar_select %p294, %s291, 31
      %s296 = smul.addr %s293, 32
      %s297 = sadd.s32 %s295, %s296
      %s298 = smul.addr %s297, 4
      %s299 = scalar_lea.vmem %s5, %s298
      %s300 = smul.u32 32, %s23
      %p301 = scmp.lt.s32.totalorder %s22, 1
      %s302 = scalar_select %p301, %s22, 1
      %s303 = smul.addr %s302, 8
      %s304 = scalar_lea.vmem %s6, %s303
      %v306 = vld [vmem:[%s289] sm:$0xff]
      %v307 = vld [vmem:[%s289 + $0x8] sm:$0xff]
      %v308 = vld [vmem:[%s289 + $0x10] sm:$0xff]
      %v309 = vld [vmem:[%s289 + $0x18] sm:$0xff]
      %v310 = vld [vmem:[%s289 + $0x20] sm:$0xff]
      %v311 = vld [vmem:[%s289 + $0x28] sm:$0xff]
      %v312 = vld [vmem:[%s289 + $0x30] sm:$0xff]
      %v313 = vld [vmem:[%s289 + $0x38] sm:$0xff]
      %v314 = vld [vmem:[%s289 + $0x40] sm:$0xff]
      %v315 = vld [vmem:[%s289 + $0x48] sm:$0xff]
      %v316 = vld [vmem:[%s289 + $0x50] sm:$0xff]
      %v317 = vld [vmem:[%s289 + $0x58] sm:$0xff]
      %v318 = vld [vmem:[%s289 + $0x60] sm:$0xff]
      %v319 = vld [vmem:[%s289 + $0x68] sm:$0xff]
      %v320 = vld [vmem:[%s289 + $0x70] sm:$0xff]
      %v321 = vld [vmem:[%s289 + $0x78] sm:$0xff]
      %v322 = vld [vmem:[%s289 + $0x80] sm:$0xff]
      %v323 = vld [vmem:[%s289 + $0x88] sm:$0xff]
      %v324 = vld [vmem:[%s289 + $0x90] sm:$0xff]
      %v325 = vld [vmem:[%s289 + $0x98] sm:$0xff]
      %v326 = vld [vmem:[%s289 + $0xa0] sm:$0xff]
      %v327 = vld [vmem:[%s289 + $0xa8] sm:$0xff]
      %v328 = vld [vmem:[%s289 + $0xb0] sm:$0xff]
      %v329 = vld [vmem:[%s289 + $0xb8] sm:$0xff]
      %v330 = vld [vmem:[%s289 + $0xc0] sm:$0xff]
      %v331 = vld [vmem:[%s289 + $0xc8] sm:$0xff]
      %v332 = vld [vmem:[%s289 + $0xd0] sm:$0xff]
      %v333 = vld [vmem:[%s289 + $0xd8] sm:$0xff]
      %v334 = vld [vmem:[%s289 + $0xe0] sm:$0xff]
      %v335 = vld [vmem:[%s289 + $0xe8] sm:$0xff]
      %v336 = vld [vmem:[%s289 + $0xf0] sm:$0xff]
      %v337 = vld [vmem:[%s289 + $0xf8] sm:$0xff]
      %v338 = vld [vmem:[%s1] sm:$0xf]
      %v339 = vld [vmem:[%s1 + $0x4] sm:$0xf]
      %v340 = vld [vmem:[%s1 + $0x8] sm:$0xf]
      %v341 = vld [vmem:[%s1 + $0xc] sm:$0xf]
      %v342 = vld [vmem:[%s1 + $0x10] sm:$0xf]
      %v343 = vld [vmem:[%s1 + $0x14] sm:$0xf]
      %v344 = vld [vmem:[%s1 + $0x18] sm:$0xf]
      %v345 = vld [vmem:[%s1 + $0x1c] sm:$0xf]
      %v346 = vld [vmem:[%s1 + $0x20] sm:$0xf]
      %v347 = vld [vmem:[%s1 + $0x24] sm:$0xf]
      %v348 = vld [vmem:[%s1 + $0x28] sm:$0xf]
      %v349 = vld [vmem:[%s1 + $0x2c] sm:$0xf]
      %v350 = vld [vmem:[%s1 + $0x30] sm:$0xf]
      %v351 = vld [vmem:[%s1 + $0x34] sm:$0xf]
      %v352 = vld [vmem:[%s1 + $0x38] sm:$0xf]
      %v353 = vld [vmem:[%s1 + $0x3c] sm:$0xf]
      %v354 = vld [vmem:[%s1 + $0x40] sm:$0xf]
      %v355 = vld [vmem:[%s1 + $0x44] sm:$0xf]
      %v356 = vld [vmem:[%s2] sm:$0x1]
      %v358 = vperm.slane %v356, 0
      %v392 = vunpack.c.l.b16 %v306
      %v393 = vunpack.c.h.b16 %v306
      %v394 = vunpack.c.l.b16 %v307
      %v395 = vunpack.c.h.b16 %v307
      %v396 = vunpack.c.l.b16 %v308
      %v397 = vunpack.c.h.b16 %v308
      %v398 = vunpack.c.l.b16 %v309
      %v399 = vunpack.c.h.b16 %v309
      %v400 = vunpack.c.l.b16 %v310
      %v401 = vunpack.c.h.b16 %v310
      %v402 = vunpack.c.l.b16 %v311
      %v403 = vunpack.c.h.b16 %v311
      %v404 = vunpack.c.l.b16 %v312
      %v405 = vunpack.c.h.b16 %v312
      %v406 = vunpack.c.l.b16 %v313
      %v407 = vunpack.c.h.b16 %v313
      %v408 = vunpack.c.l.b16 %v314
      %v409 = vunpack.c.h.b16 %v314
      %v410 = vunpack.c.l.b16 %v315
      %v411 = vunpack.c.h.b16 %v315
      %v412 = vunpack.c.l.b16 %v316
      %v413 = vunpack.c.h.b16 %v316
      %v414 = vunpack.c.l.b16 %v317
      %v415 = vunpack.c.h.b16 %v317
      %v416 = vunpack.c.l.b16 %v318
      %v417 = vunpack.c.h.b16 %v318
      %v418 = vunpack.c.l.b16 %v319
      %v419 = vunpack.c.h.b16 %v319
      %v420 = vunpack.c.l.b16 %v320
      %v421 = vunpack.c.h.b16 %v320
      %v422 = vunpack.c.l.b16 %v321
      %v423 = vunpack.c.h.b16 %v321
      %v424 = vunpack.c.l.b16 %v322
      %v425 = vunpack.c.h.b16 %v322
      %v426 = vunpack.c.l.b16 %v323
      %v427 = vunpack.c.h.b16 %v323
      %v428 = vunpack.c.l.b16 %v324
      %v429 = vunpack.c.h.b16 %v324
      %v430 = vunpack.c.l.b16 %v325
      %v431 = vunpack.c.h.b16 %v325
      %v432 = vunpack.c.l.b16 %v326
      %v433 = vunpack.c.h.b16 %v326
      %v434 = vunpack.c.l.b16 %v327
      %v435 = vunpack.c.h.b16 %v327
      %v436 = vunpack.c.l.b16 %v328
      %v437 = vunpack.c.h.b16 %v328
      %v438 = vunpack.c.l.b16 %v329
      %v439 = vunpack.c.h.b16 %v329
      %v440 = vunpack.c.l.b16 %v330
      %v441 = vunpack.c.h.b16 %v330
      %v442 = vunpack.c.l.b16 %v331
      %v443 = vunpack.c.h.b16 %v331
      %v444 = vunpack.c.l.b16 %v332
      %v445 = vunpack.c.h.b16 %v332
      %v446 = vunpack.c.l.b16 %v333
      %v447 = vunpack.c.h.b16 %v333
      %v448 = vunpack.c.l.b16 %v334
      %v449 = vunpack.c.h.b16 %v334
      %v450 = vunpack.c.l.b16 %v335
      %v451 = vunpack.c.h.b16 %v335
      %v452 = vunpack.c.l.b16 %v336
      %v453 = vunpack.c.h.b16 %v336
      %v454 = vunpack.c.l.b16 %v337
      %v455 = vunpack.c.h.b16 %v337
      %v456 = vpack.c.b16 %v394, %v392
      %v457 = vpack.c.b16 %v395, %v393
      %v458 = vpack.c.b16 %v398, %v396
      %v459 = vpack.c.b16 %v399, %v397
      %v460 = vpack.c.b16 %v402, %v400
      %v461 = vpack.c.b16 %v403, %v401
      %v462 = vpack.c.b16 %v406, %v404
      %v463 = vpack.c.b16 %v407, %v405
      %v464 = vpack.c.b16 %v410, %v408
      %v465 = vpack.c.b16 %v411, %v409
      %v466 = vpack.c.b16 %v414, %v412
      %v467 = vpack.c.b16 %v415, %v413
      %v468 = vpack.c.b16 %v418, %v416
      %v469 = vpack.c.b16 %v419, %v417
      %v470 = vpack.c.b16 %v422, %v420
      %v471 = vpack.c.b16 %v423, %v421
      %v472 = vpack.c.b16 %v426, %v424
      %v473 = vpack.c.b16 %v427, %v425
      %v474 = vpack.c.b16 %v430, %v428
      %v475 = vpack.c.b16 %v431, %v429
      %v476 = vpack.c.b16 %v434, %v432
      %v477 = vpack.c.b16 %v435, %v433
      %v478 = vpack.c.b16 %v438, %v436
      %v479 = vpack.c.b16 %v439, %v437
      %v480 = vpack.c.b16 %v442, %v440
      %v481 = vpack.c.b16 %v443, %v441
      %v482 = vpack.c.b16 %v446, %v444
      %v483 = vpack.c.b16 %v447, %v445
      %v484 = vpack.c.b16 %v450, %v448
      %v485 = vpack.c.b16 %v451, %v449
      %v486 = vpack.c.b16 %v454, %v452
      %v487 = vpack.c.b16 %v455, %v453
      %v522 = vunpack.c.l.b16 %v338
      %v523 = vunpack.c.l.b16 %v339
      %v524 = vunpack.c.l.b16 %v340
      %v525 = vunpack.c.l.b16 %v341
      %v526 = vunpack.c.l.b16 %v342
      %v527 = vunpack.c.l.b16 %v343
      %v528 = vunpack.c.l.b16 %v344
      %v529 = vunpack.c.l.b16 %v345
      %v530 = vunpack.c.l.b16 %v346
      %v531 = vunpack.c.l.b16 %v347
      %v532 = vunpack.c.l.b16 %v348
      %v533 = vunpack.c.l.b16 %v349
      %v534 = vunpack.c.l.b16 %v350
      %v535 = vunpack.c.l.b16 %v351
      %v536 = vunpack.c.l.b16 %v352
      %v537 = vunpack.c.l.b16 %v353
      %v538 = vunpack.c.l.b16 %v354
      %v539 = vunpack.c.l.b16 %v355
      %v540 = vpack.c.b16 %v523, %v522
      %v541 = vpack.c.b16 %v525, %v524
      %v542 = vpack.c.b16 %v527, %v526
      %v543 = vpack.c.b16 %v529, %v528
      %v544 = vpack.c.b16 %v531, %v530
      %v545 = vpack.c.b16 %v533, %v532
      %v546 = vpack.c.b16 %v535, %v534
      %v547 = vpack.c.b16 %v537, %v536
      %v548 = vpack.c.b16 %v539, %v538
      %vm558 = vcmask 130048
      %v560 = vsel %vm558, %v457, 0
      %v563 = vsel %vm558, %v459, 0
      %v566 = vsel %vm558, %v461, 0
      %v569 = vsel %vm558, %v463, 0
      %v572 = vsel %vm558, %v465, 0
      %v575 = vsel %vm558, %v467, 0
      %v578 = vsel %vm558, %v469, 0
      %v581 = vsel %vm558, %v471, 0
      %v584 = vsel %vm558, %v473, 0
      %v587 = vsel %vm558, %v475, 0
      %v590 = vsel %vm558, %v477, 0
      %v593 = vsel %vm558, %v479, 0
      %v596 = vsel %vm558, %v481, 0
      %v599 = vsel %vm558, %v483, 0
      %v602 = vsel %vm558, %v485, 0
      %v605 = vsel %vm558, %v487, 0
      %607 = vmatpush.bf16.msra.mxu0 %v547
      %608 = vmatpush.bf16.msra.mxu0 %v546
      %609 = vmatpush.bf16.msra.mxu0 %v545
      %610 = vmatpush.bf16.msra.mxu0 %v544
      %611 = vmatpush.bf16.msra.mxu0 %v543
      %612 = vmatpush.bf16.msra.mxu0 %v542
      %613 = vmatpush.bf16.msra.mxu0 %v541
      %614 = vmatpush.bf16.msra.mxu0 %v540
      %615 = vmatmul.bf16.gmra.mxu0 %v456
      %v616 = vpop.f32.mrf.mxu0
      %v617 = vadd.f32 %v358, %v616
      %v618 = vpop.f32.mrf.mxu0
      %v619 = vadd.f32 %v358, %v618
      %620 = vmatmul.bf16.gmra.mxu0 %v458
      %v621 = vpop.f32.mrf.mxu0
      %v622 = vadd.f32 %v358, %v621
      %v623 = vpop.f32.mrf.mxu0
      %v624 = vadd.f32 %v358, %v623
      %625 = vmatmul.bf16.gmra.mxu0 %v460
      %v626 = vpop.f32.mrf.mxu0
      %v627 = vadd.f32 %v358, %v626
      %v628 = vpop.f32.mrf.mxu0
      %v629 = vadd.f32 %v358, %v628
      %630 = vmatmul.bf16.gmra.mxu0 %v462
      %v631 = vpop.f32.mrf.mxu0
      %v632 = vadd.f32 %v358, %v631
      %v633 = vpop.f32.mrf.mxu0
      %v634 = vadd.f32 %v358, %v633
      %635 = vmatmul.bf16.gmra.mxu0 %v464
      %v636 = vpop.f32.mrf.mxu0
      %v637 = vadd.f32 %v358, %v636
      %v638 = vpop.f32.mrf.mxu0
      %v639 = vadd.f32 %v358, %v638
      %640 = vmatmul.bf16.gmra.mxu0 %v466
      %v641 = vpop.f32.mrf.mxu0
      %v642 = vadd.f32 %v358, %v641
      %v643 = vpop.f32.mrf.mxu0
      %v644 = vadd.f32 %v358, %v643
      %645 = vmatmul.bf16.gmra.mxu0 %v468
      %v646 = vpop.f32.mrf.mxu0
      %v647 = vadd.f32 %v358, %v646
      %v648 = vpop.f32.mrf.mxu0
      %v649 = vadd.f32 %v358, %v648
      %650 = vmatmul.bf16.gmra.mxu0 %v470
      %v651 = vpop.f32.mrf.mxu0
      %v652 = vadd.f32 %v358, %v651
      %v653 = vpop.f32.mrf.mxu0
      %v654 = vadd.f32 %v358, %v653
      %655 = vmatmul.bf16.gmra.mxu0 %v472
      %v656 = vpop.f32.mrf.mxu0
      %v657 = vadd.f32 %v358, %v656
      %v658 = vpop.f32.mrf.mxu0
      %v659 = vadd.f32 %v358, %v658
      %660 = vmatmul.bf16.gmra.mxu0 %v474
      %v661 = vpop.f32.mrf.mxu0
      %v662 = vadd.f32 %v358, %v661
      %v663 = vpop.f32.mrf.mxu0
      %v664 = vadd.f32 %v358, %v663
      %665 = vmatmul.bf16.gmra.mxu0 %v476
      %v666 = vpop.f32.mrf.mxu0
      %v667 = vadd.f32 %v358, %v666
      %v668 = vpop.f32.mrf.mxu0
      %v669 = vadd.f32 %v358, %v668
      %670 = vmatmul.bf16.gmra.mxu0 %v478
      %v671 = vpop.f32.mrf.mxu0
      %v672 = vadd.f32 %v358, %v671
      %v673 = vpop.f32.mrf.mxu0
      %v674 = vadd.f32 %v358, %v673
      %675 = vmatmul.bf16.gmra.mxu0 %v480
      %v676 = vpop.f32.mrf.mxu0
      %v677 = vadd.f32 %v358, %v676
      %v678 = vpop.f32.mrf.mxu0
      %v679 = vadd.f32 %v358, %v678
      %680 = vmatmul.bf16.gmra.mxu0 %v482
      %v681 = vpop.f32.mrf.mxu0
      %v682 = vadd.f32 %v358, %v681
      %v683 = vpop.f32.mrf.mxu0
      %v684 = vadd.f32 %v358, %v683
      %685 = vmatmul.bf16.gmra.mxu0 %v484
      %v686 = vpop.f32.mrf.mxu0
      %v687 = vadd.f32 %v358, %v686
      %v688 = vpop.f32.mrf.mxu0
      %v689 = vadd.f32 %v358, %v688
      %690 = vmatmul.bf16.gmra.mxu0 %v486
      %v691 = vpop.f32.mrf.mxu0
      %v692 = vadd.f32 %v358, %v691
      %v693 = vpop.f32.mrf.mxu0
      %v694 = vadd.f32 %v358, %v693
      %695 = vdwg.mxu0
      %696 = vmatpush.bf16.msra.mxu0 0
      %697 = vmatpush.bf16.msra.mxu0 0
      %698 = vmatpush.bf16.msra.mxu0 0
      %699 = vmatpush.bf16.msra.mxu0 0
      %700 = vmatpush.bf16.msra.mxu0 0
      %701 = vmatpush.bf16.msra.mxu0 0
      %702 = vmatpush.bf16.msra.mxu0 0
      %703 = vmatpush.bf16.msra.mxu0 %v548
      %704 = vmatmul.bf16.gmra.mxu0 %v560
      %v705 = vpop.f32.mrf.mxu0
      %v706 = vadd.f32 %v617, %v705
      %v707 = vpop.f32.mrf.mxu0
      %v708 = vadd.f32 %v619, %v707
      %709 = vmatmul.bf16.gmra.mxu0 %v563
      %v710 = vpop.f32.mrf.mxu0
      %v711 = vadd.f32 %v622, %v710
      %v712 = vpop.f32.mrf.mxu0
      %v713 = vadd.f32 %v624, %v712
      %714 = vmatmul.bf16.gmra.mxu0 %v566
      %v715 = vpop.f32.mrf.mxu0
      %v716 = vadd.f32 %v627, %v715
      %v717 = vpop.f32.mrf.mxu0
      %v718 = vadd.f32 %v629, %v717
      %719 = vmatmul.bf16.gmra.mxu0 %v569
      %v720 = vpop.f32.mrf.mxu0
      %v721 = vadd.f32 %v632, %v720
      %v722 = vpop.f32.mrf.mxu0
      %v723 = vadd.f32 %v634, %v722
      %724 = vmatmul.bf16.gmra.mxu0 %v572
      %v725 = vpop.f32.mrf.mxu0
      %v726 = vadd.f32 %v637, %v725
      %v727 = vpop.f32.mrf.mxu0
      %v728 = vadd.f32 %v639, %v727
      %729 = vmatmul.bf16.gmra.mxu0 %v575
      %v730 = vpop.f32.mrf.mxu0
      %v731 = vadd.f32 %v642, %v730
      %v732 = vpop.f32.mrf.mxu0
      %v733 = vadd.f32 %v644, %v732
      %734 = vmatmul.bf16.gmra.mxu0 %v578
      %v735 = vpop.f32.mrf.mxu0
      %v736 = vadd.f32 %v647, %v735
      %v737 = vpop.f32.mrf.mxu0
      %v738 = vadd.f32 %v649, %v737
      %739 = vmatmul.bf16.gmra.mxu0 %v581
      %v740 = vpop.f32.mrf.mxu0
      %v741 = vadd.f32 %v652, %v740
      %v742 = vpop.f32.mrf.mxu0
      %v743 = vadd.f32 %v654, %v742
      %744 = vmatmul.bf16.gmra.mxu0 %v584
      %v745 = vpop.f32.mrf.mxu0
      %v746 = vadd.f32 %v657, %v745
      %v747 = vpop.f32.mrf.mxu0
      %v748 = vadd.f32 %v659, %v747
      %749 = vmatmul.bf16.gmra.mxu0 %v587
      %v750 = vpop.f32.mrf.mxu0
      %v751 = vadd.f32 %v662, %v750
      %v752 = vpop.f32.mrf.mxu0
      %v753 = vadd.f32 %v664, %v752
      %754 = vmatmul.bf16.gmra.mxu0 %v590
      %v755 = vpop.f32.mrf.mxu0
      %v756 = vadd.f32 %v667, %v755
      %v757 = vpop.f32.mrf.mxu0
      %v758 = vadd.f32 %v669, %v757
      %759 = vmatmul.bf16.gmra.mxu0 %v593
      %v760 = vpop.f32.mrf.mxu0
      %v761 = vadd.f32 %v672, %v760
      %v762 = vpop.f32.mrf.mxu0
      %v763 = vadd.f32 %v674, %v762
      %764 = vmatmul.bf16.gmra.mxu0 %v596
      %v765 = vpop.f32.mrf.mxu0
      %v766 = vadd.f32 %v677, %v765
      %v767 = vpop.f32.mrf.mxu0
      %v768 = vadd.f32 %v679, %v767
      %769 = vmatmul.bf16.gmra.mxu0 %v599
      %v770 = vpop.f32.mrf.mxu0
      %v771 = vadd.f32 %v682, %v770
      %v772 = vpop.f32.mrf.mxu0
      %v773 = vadd.f32 %v684, %v772
      %774 = vmatmul.bf16.gmra.mxu0 %v602
      %v775 = vpop.f32.mrf.mxu0
      %v776 = vadd.f32 %v687, %v775
      %v777 = vpop.f32.mrf.mxu0
      %v778 = vadd.f32 %v689, %v777
      %779 = vmatmul.bf16.gmra.mxu0 %v605
      %v780 = vpop.f32.mrf.mxu0
      %v781 = vadd.f32 %v692, %v780
      %v782 = vpop.f32.mrf.mxu0
      %v783 = vadd.f32 %v694, %v782
      %784 = vdwg.mxu0
      %v785 = vmax.f32 %v706, 0.0
      %v786 = vmax.f32 %v708, 0.0
      %v787 = vmax.f32 %v711, 0.0
      %v788 = vmax.f32 %v713, 0.0
      %v789 = vmax.f32 %v716, 0.0
      %v790 = vmax.f32 %v718, 0.0
      %v791 = vmax.f32 %v721, 0.0
      %v792 = vmax.f32 %v723, 0.0
      %v793 = vmax.f32 %v726, 0.0
      %v794 = vmax.f32 %v728, 0.0
      %v795 = vmax.f32 %v731, 0.0
      %v796 = vmax.f32 %v733, 0.0
      %v797 = vmax.f32 %v736, 0.0
      %v798 = vmax.f32 %v738, 0.0
      %v799 = vmax.f32 %v741, 0.0
      %v800 = vmax.f32 %v743, 0.0
      %v801 = vmax.f32 %v746, 0.0
      %v802 = vmax.f32 %v748, 0.0
      %v803 = vmax.f32 %v751, 0.0
      %v804 = vmax.f32 %v753, 0.0
      %v805 = vmax.f32 %v756, 0.0
      %v806 = vmax.f32 %v758, 0.0
      %v807 = vmax.f32 %v761, 0.0
      %v808 = vmax.f32 %v763, 0.0
      %v809 = vmax.f32 %v766, 0.0
      %v810 = vmax.f32 %v768, 0.0
      %v811 = vmax.f32 %v771, 0.0
      %v812 = vmax.f32 %v773, 0.0
      %v813 = vmax.f32 %v776, 0.0
      %v814 = vmax.f32 %v778, 0.0
      %v815 = vmax.f32 %v781, 0.0
      %v816 = vmax.f32 %v783, 0.0
      %v817 = vpack.c.bf16 %v785, %v785
      %v818 = vpack.c.bf16 %v786, %v786
      %v819 = vpack.c.bf16 %v787, %v787
      %v820 = vpack.c.bf16 %v788, %v788
      %v821 = vpack.c.bf16 %v789, %v789
      %v822 = vpack.c.bf16 %v790, %v790
      %v823 = vpack.c.bf16 %v791, %v791
      %v824 = vpack.c.bf16 %v792, %v792
      %v825 = vpack.c.bf16 %v793, %v793
      %v826 = vpack.c.bf16 %v794, %v794
      %v827 = vpack.c.bf16 %v795, %v795
      %v828 = vpack.c.bf16 %v796, %v796
      %v829 = vpack.c.bf16 %v797, %v797
      %v830 = vpack.c.bf16 %v798, %v798
      %v831 = vpack.c.bf16 %v799, %v799
      %v832 = vpack.c.bf16 %v800, %v800
      %v833 = vpack.c.bf16 %v801, %v801
      %v834 = vpack.c.bf16 %v802, %v802
      %v835 = vpack.c.bf16 %v803, %v803
      %v836 = vpack.c.bf16 %v804, %v804
      %v837 = vpack.c.bf16 %v805, %v805
      %v838 = vpack.c.bf16 %v806, %v806
      %v839 = vpack.c.bf16 %v807, %v807
      %v840 = vpack.c.bf16 %v808, %v808
      %v841 = vpack.c.bf16 %v809, %v809
      %v842 = vpack.c.bf16 %v810, %v810
      %v843 = vpack.c.bf16 %v811, %v811
      %v844 = vpack.c.bf16 %v812, %v812
      %v845 = vpack.c.bf16 %v813, %v813
      %v846 = vpack.c.bf16 %v814, %v814
      %v847 = vpack.c.bf16 %v815, %v815
      %v848 = vpack.c.bf16 %v816, %v816
      %849 = vst [vmem:[%s299] sm:$0xf] %v817
      %850 = vst [vmem:[%s299 + $0x4] sm:$0xf] %v818
      %851 = vst [vmem:[%s299 + $0x8] sm:$0xf] %v819
      %852 = vst [vmem:[%s299 + $0xc] sm:$0xf] %v820
      %853 = vst [vmem:[%s299 + $0x10] sm:$0xf] %v821
      %854 = vst [vmem:[%s299 + $0x14] sm:$0xf] %v822
      %855 = vst [vmem:[%s299 + $0x18] sm:$0xf] %v823
      %856 = vst [vmem:[%s299 + $0x1c] sm:$0xf] %v824
      %857 = vst [vmem:[%s299 + $0x20] sm:$0xf] %v825
      %858 = vst [vmem:[%s299 + $0x24] sm:$0xf] %v826
      %859 = vst [vmem:[%s299 + $0x28] sm:$0xf] %v827
      %860 = vst [vmem:[%s299 + $0x2c] sm:$0xf] %v828
      %861 = vst [vmem:[%s299 + $0x30] sm:$0xf] %v829
      %862 = vst [vmem:[%s299 + $0x34] sm:$0xf] %v830
      %863 = vst [vmem:[%s299 + $0x38] sm:$0xf] %v831
      %864 = vst [vmem:[%s299 + $0x3c] sm:$0xf] %v832
      %865 = vst [vmem:[%s299 + $0x40] sm:$0xf] %v833
      %866 = vst [vmem:[%s299 + $0x44] sm:$0xf] %v834
      %867 = vst [vmem:[%s299 + $0x48] sm:$0xf] %v835
      %868 = vst [vmem:[%s299 + $0x4c] sm:$0xf] %v836
      %869 = vst [vmem:[%s299 + $0x50] sm:$0xf] %v837
      %870 = vst [vmem:[%s299 + $0x54] sm:$0xf] %v838
      %871 = vst [vmem:[%s299 + $0x58] sm:$0xf] %v839
      %872 = vst [vmem:[%s299 + $0x5c] sm:$0xf] %v840
      %873 = vst [vmem:[%s299 + $0x60] sm:$0xf] %v841
      %874 = vst [vmem:[%s299 + $0x64] sm:$0xf] %v842
      %875 = vst [vmem:[%s299 + $0x68] sm:$0xf] %v843
      %876 = vst [vmem:[%s299 + $0x6c] sm:$0xf] %v844
      %877 = vst [vmem:[%s299 + $0x70] sm:$0xf] %v845
      %878 = vst [vmem:[%s299 + $0x74] sm:$0xf] %v846
      %879 = vst [vmem:[%s299 + $0x78] sm:$0xf] %v847
      %880 = vst [vmem:[%s299 + $0x7c] sm:$0xf] %v848
      %v881 = vadd.f32 %v785, %v786
      %v882 = vadd.f32 %v881, %v787
      %v883 = vadd.f32 %v882, %v788
      %v884 = vadd.f32 %v883, %v789
      %v885 = vadd.f32 %v884, %v790
      %v886 = vadd.f32 %v885, %v791
      %v887 = vadd.f32 %v886, %v792
      %v888 = vadd.f32 %v887, %v793
      %v889 = vadd.f32 %v888, %v794
      %v890 = vadd.f32 %v889, %v795
      %v891 = vadd.f32 %v890, %v796
      %v892 = vadd.f32 %v891, %v797
      %v893 = vadd.f32 %v892, %v798
      %v894 = vadd.f32 %v893, %v799
      %v895 = vadd.f32 %v894, %v800
      %v896 = vadd.f32 %v895, %v801
      %v897 = vadd.f32 %v896, %v802
      %v898 = vadd.f32 %v897, %v803
      %v899 = vadd.f32 %v898, %v804
      %v900 = vadd.f32 %v899, %v805
      %v901 = vadd.f32 %v900, %v806
      %v902 = vadd.f32 %v901, %v807
      %v903 = vadd.f32 %v902, %v808
      %v904 = vadd.f32 %v903, %v809
      %v905 = vadd.f32 %v904, %v810
      %v906 = vadd.f32 %v905, %v811
      %v907 = vadd.f32 %v906, %v812
      %v908 = vadd.f32 %v907, %v813
      %v909 = vadd.f32 %v908, %v814
      %v910 = vadd.f32 %v909, %v815
      %v911 = vadd.f32 %v910, %v816
      %v912 = vrot.slane %v911, 4
      %v913 = vadd.f32 %v911, %v912
      %v914 = vrot.slane %v913, 2
      %v915 = vadd.f32 %v913, %v914
      %v916 = vrot.slane %v915, 1
      %v917 = vadd.f32 %v915, %v916
      %v918 = vmax.f32 %v785, %v789
      %v919 = vmax.f32 %v786, %v790
      %v920 = vmax.f32 %v787, %v791
      %v921 = vmax.f32 %v788, %v792
      %v922 = vmax.f32 %v918, %v793
      %v923 = vmax.f32 %v919, %v794
      %v924 = vmax.f32 %v920, %v795
      %v925 = vmax.f32 %v921, %v796
      %v926 = vmax.f32 %v922, %v797
      %v927 = vmax.f32 %v923, %v798
      %v928 = vmax.f32 %v924, %v799
      %v929 = vmax.f32 %v925, %v800
      %v930 = vmax.f32 %v926, %v801
      %v931 = vmax.f32 %v927, %v802
      %v932 = vmax.f32 %v928, %v803
      %v933 = vmax.f32 %v929, %v804
      %v934 = vmax.f32 %v930, %v805
      %v935 = vmax.f32 %v931, %v806
      %v936 = vmax.f32 %v932, %v807
      %v937 = vmax.f32 %v933, %v808
      %v938 = vmax.f32 %v934, %v809
      %v939 = vmax.f32 %v935, %v810
      %v940 = vmax.f32 %v936, %v811
      %v941 = vmax.f32 %v937, %v812
      %v942 = vmax.f32 %v938, %v813
      %v943 = vmax.f32 %v939, %v814
      %v944 = vmax.f32 %v940, %v815
      %v945 = vmax.f32 %v941, %v816
      %v946 = vmax.f32 %v942, %v943
      %v947 = vmax.f32 %v944, %v945
      %v948 = vmax.f32 %v946, %v947
      %v949 = vrot.slane %v948, 4
      %v950 = vmax.f32 %v948, %v949
      %v951 = vrot.slane %v950, 2
      %v952 = vmax.f32 %v950, %v951
      %v953 = vrot.slane %v952, 1
      %v954 = vmax.f32 %v952, %v953
      %p955 = scmp.eq.s32.totalorder %s23, 0
      // Predicated region
      $region41: #{combination_forward.3} parent=39 // pred_check
        %p956 = pneg %p955
      $region42: #{combination_forward.3} parent=39 // pred_check_branch
        %958 = sbr.rel (%p956) target = $region44
      $region43: #{combination_forward.3} parent=39 // pred_region
        %959 = vst [vmem:[#allocation2] sm:$0x1] %v917
        %960 = vst [vmem:[#allocation3] sm:$0x1] %v954
      $region44: #{combination_forward.3} parent=39 // pred_fallthru
        _
      %p961 = scmp.gt.s32.totalorder %s23, 0
      // Predicated region
      $region45: #{combination_forward.3} parent=39 // pred_check
        %p962 = pneg %p961
      $region46: #{combination_forward.3} parent=39 // pred_check_branch
        %964 = sbr.rel (%p962) target = $region48
      $region47: #{combination_forward.3} parent=39 // pred_region
        %v965 = vld [vmem:[#allocation2] sm:$0x1]
        %v966 = vadd.f32 %v965, %v917
        %967 = vst [vmem:[#allocation2] sm:$0x1] %v966
        %v968 = vld [vmem:[#allocation3] sm:$0x1]
        %v969 = vmax.f32 %v968, %v954
        %970 = vst [vmem:[#allocation3] sm:$0x1] %v969
      $region48: #{combination_forward.3} parent=39 // pred_fallthru
        _
      // Predicated region
      $region49: #{combination_forward.3} parent=39 // pred_check
        %p971 = pneg %p955
      $region50: #{combination_forward.3} parent=39 // pred_check_branch
        %973 = sbr.rel (%p971) target = $region52
      $region51: #{combination_forward.3} parent=39 // pred_region
        %v974 = vld [vmem:[#allocation2] sm:$0x1]
        %v975 = vmul.f32 %v974, 0.00390625
        %v976 = vld [vmem:[#allocation3] sm:$0x1]
        %v978 = vperm.slane %v976, 0
        %vm980 = vcmask 1040384
        %v981 = vsel %vm980, %v975, %v978
        %v982 = vld [vmem:[%s3] sm:$0xff]
        %v983 = vld [vmem:[%s3 + $0x8] sm:$0xff]
        %v984 = vld [vmem:[%s3 + $0x10] sm:$0xff]
        %v985 = vld [vmem:[%s3 + $0x18] sm:$0xff]
        %v986 = vld [vmem:[%s3 + $0x20] sm:$0xff]
        %v987 = vld [vmem:[%s3 + $0x28] sm:$0xff]
        %v988 = vld [vmem:[%s3 + $0x30] sm:$0xff]
        %v989 = vld [vmem:[%s3 + $0x38] sm:$0xff]
        %v990 = vld [vmem:[%s3 + $0x40] sm:$0xff]
        %v991 = vld [vmem:[%s3 + $0x48] sm:$0xff]
        %v992 = vld [vmem:[%s3 + $0x50] sm:$0xff]
        %v993 = vld [vmem:[%s3 + $0x58] sm:$0xff]
        %v994 = vld [vmem:[%s3 + $0x60] sm:$0xff]
        %v995 = vld [vmem:[%s3 + $0x68] sm:$0xff]
        %v996 = vld [vmem:[%s3 + $0x70] sm:$0xff]
        %v997 = vld [vmem:[%s3 + $0x78] sm:$0xff]
        %998 = vmatpush.msra.mxu0 %v997
        %999 = vmatpush.msra.mxu0 %v996
        %1000 = vmatpush.msra.mxu0 %v995
        %1001 = vmatpush.msra.mxu0 %v994
        %1002 = vmatpush.msra.mxu0 %v993
        %1003 = vmatpush.msra.mxu0 %v992
        %1004 = vmatpush.msra.mxu0 %v991
        %1005 = vmatpush.msra.mxu0 %v990
        %1006 = vmatpush.msra.mxu0 %v989
        %1007 = vmatpush.msra.mxu0 %v988
        %1008 = vmatpush.msra.mxu0 %v987
        %1009 = vmatpush.msra.mxu0 %v986
        %1010 = vmatpush.msra.mxu0 %v985
        %1011 = vmatpush.msra.mxu0 %v984
        %1012 = vmatpush.msra.mxu0 %v983
        %1013 = vmatpush.msra.mxu0 %v982
        %1014 = vmatmul.f32.gmra.mxu0 %v981
        %v1015 = vpop.f32.mrf.mxu0
        %v1016 = vadd.f32 0.0, %v1015
        %1017 = vdwg.mxu0
        %v1018 = vmax.f32 %v1016, 0.0
        %v1019 = vld [vmem:[%s4] sm:$0xff]
        %vm1020 = vcmask 64512
        %v1022 = vsel %vm1020, %v1018, 0
        %1024 = vmatpush.msra.mxu0 0.0
        %1025 = vmatpush.msra.mxu0 0.0
        %1026 = vmatpush.msra.mxu0 0.0
        %1027 = vmatpush.msra.mxu0 0.0
        %1028 = vmatpush.msra.mxu0 0.0
        %1029 = vmatpush.msra.mxu0 0.0
        %1030 = vmatpush.msra.mxu0 0.0
        %1031 = vmatpush.msra.mxu0 0.0
        %1032 = vmatpush.msra.mxu0 0.0
        %1033 = vmatpush.msra.mxu0 0.0
        %1034 = vmatpush.msra.mxu0 0.0
        %1035 = vmatpush.msra.mxu0 0.0
        %1036 = vmatpush.msra.mxu0 0.0
        %1037 = vmatpush.msra.mxu0 0.0
        %1038 = vmatpush.msra.mxu0 0.0
        %1039 = vmatpush.msra.mxu0 %v1019
        %1040 = vmatmul.f32.gmra.mxu0 %v1022
        %v1041 = vpop.f32.mrf.mxu0
        %v1042 = vadd.f32 0.0, %v1041
        %1043 = vdwg.mxu0
        %v1045 = vrot.slane %v1042, 1
        %v1047 = vadd.f32 %v1042, %v1045
        %v1048 = vxor.u32 %v1047, 2147483648
        %v1049 = vmul.f32 %v1048, 1.442695
        %v1050 = vpow.pop %v1049
        %v1051 = vadd.f32 %v1050, 1.0
        %v1052 = vrcp.pop %v1051
        %v1053 = vmul.f32 %v1051, %v1052
        %v1054 = vsub.f32 1.0, %v1053
        %v1055 = vmul.f32 %v1052, %v1054
        %v1056 = vadd.f32 %v1052, %v1055
        %vm1057 = vweird.f32 %v1051
        %vm1058 = vweird.f32 %v1052
        %vm1059 = vmor %vm1057, %vm1058
        %v1060 = vsel %vm1059, %v1052, %v1056
        %v1061 = vand.u32 2147483647, %v1051
        %vm1062 = vcmp.eq.f32.partialorder %v1061, 8.507059e+37
        %v1063 = vand.u32 %v1051, 2147483648
        %v1064 = vor.u32 1.1754944e-38, %v1063
        %v1065 = vsel %vm1062, %v1064, %v1060
        %v1066 = vmul.f32 1.0, %v1065
        %v1067 = vperm.slane %v1066, 0
        %1068 = vst [vmem:[%s304] sm:$0xff] %v1067
      $region52: #{combination_forward.3} parent=39 // pred_fallthru
        _
      %s1069 = smul.u32 32, %s23
      %p1070 = scmp.lt.s32.totalorder %s22, 1
      %s1071 = scalar_select %p1070, %s22, 1
      %p1072 = scmp.lt.s32.totalorder %s1069, 31
      %s1073 = scalar_select %p1072, %s1069, 31
      %s1074 = smul.addr %s1071, 32
      %s1075 = sadd.s32 %s1073, %s1074
      %s1076 = smul.addr %s1075, 4
      %s1077 = scalar_lea.vmem %s5, %s1076
      %p1078 = scmp.lt.s32.totalorder %s22, 1
      %s1079 = scalar_select %p1078, %s22, 1
      %s1080 = smul.addr %s1079, 8
      %s1081 = scalar_lea.vmem %s6, %s1080
      // Predicated region
      $region53: #{combination_forward.3} parent=39 // pred_check
        %p1082 = pneg %p162
      $region54: #{combination_forward.3} parent=39 // pred_check_branch
        %1084 = sbr.rel (%p1082) target = $region56
      $region55: #{combination_forward.3} parent=39 // pred_region
        %s1085 = smul.u32 32, %s23
      $region56: #{combination_forward.3} parent=39 // pred_fallthru
        _
      // Predicated region
      $region57: #{combination_forward.3} parent=39 // pred_check
        %p1086 = pneg %p188
      $region58: #{combination_forward.3} parent=39 // pred_check_branch
        %1088 = sbr.rel (%p1086) target = $region60
      $region59: #{combination_forward.3} parent=39 // pred_region
        _
      $region60: #{combination_forward.3} parent=39 // pred_fallthru
        _
    $region40: #{combination_forward.3} parent=5 // pred_fallthru
      _
    %p1089 = scmp.le.s32.totalorder 2, %s13
    // Predicated region
    $region61: #{combination_forward.3} parent=5 // pred_check
      %p1090 = pneg %p1089
    $region62: #{combination_forward.3} parent=5 // pred_check_branch
      %1092 = sbr.rel (%p1090) target = $region64
    $region63: #{combination_forward.3} parent=5 // pred_region
      %s1093 = ssub.s32 %s13, 2
      // Predicated region
      $region65: #{combination_forward.3} parent=63 // pred_check
        %p1094 = pneg %p168
      $region66: #{combination_forward.3} parent=63 // pred_check_branch
        %1096 = sbr.rel (%p1094) target = $region68
      $region67: #{combination_forward.3} parent=63 // pred_region
        %s1097 = smul.u32 32, %s25
        %p1098 = scmp.lt.s32.totalorder %s24, 1
        %s1099 = scalar_select %p1098, %s24, 1
        %p1100 = scmp.lt.s32.totalorder %s1097, 31
        %s1101 = scalar_select %p1100, %s1097, 31
        %s1102 = smul.addr %s1099, 32
        %s1103 = sadd.s32 %s1101, %s1102
        %s1104 = smul.addr %s1103, 4
        %s1105 = scalar_lea.vmem %s5, %s1104
      $region68: #{combination_forward.3} parent=63 // pred_fallthru
        _
      // Predicated region
      $region69: #{combination_forward.3} parent=63 // pred_check
        %p1106 = pneg %p194
      $region70: #{combination_forward.3} parent=63 // pred_check_branch
        %1108 = sbr.rel (%p1106) target = $region72
      $region71: #{combination_forward.3} parent=63 // pred_region
        %p1109 = scmp.lt.s32.totalorder %s24, 1
        %s1110 = scalar_select %p1109, %s24, 1
        %s1111 = smul.addr %s1110, 8
        %s1112 = scalar_lea.vmem %s6, %s1111
      $region72: #{combination_forward.3} parent=63 // pred_fallthru
        _
    $region64: #{combination_forward.3} parent=5 // pred_fallthru
      _
  $region6: #{combination_forward.3} parent=0 // loop_footer
    %s17 = sadd.s32 1, %s13
  $region7: #{combination_forward.3} parent=0 // loop_footer_branch
    %12 = sbr.rel target = $region3
  $region8: #{combination_forward.3} parent=0 // loop_exit
    _

// kernel: combination_forward.4
$region0: #{combination_forward.4}
  #allocation0 [shape = 'u32[]', space=smem, size = 0x4, offset = 0x4, fixed_abs, tag = 'smem constant byte address 0x4 - core index']
  #allocation1 [shape = 'u32[72,128]{1,0:T(1,128)}', space=vmem, size = 0x9000, scoped, tag = 'internal scratch']
  #allocation2 [shape = 'f32[22,44]{1,0:T(8,128)}', space=vmem, size = 0x3000, scoped, tag = 'scratch operand']
  %s0 = inlined_call_operand.vmem [shape: bf16[2,16,16,128], index: 0, kind: input, shape index: {}]
  %s1 = inlined_call_operand.vmem [shape: f32[2,8,128], index: 1, kind: input, shape index: {}]
  %s2 = inlined_call_operand.vmem [shape: f32[7,44,16], index: 2, kind: input, shape index: {}]
  %s3 = inlined_call_operand.vmem [shape: f32[2,16,16], index: 3, kind: output, shape index: {}]
  %s4 = sld [smem:[#allocation0]]
  $region45: #{combination_forward.4} parent=0
    _
  %s6 = ssub.s32 1, %s4
  %s7 = scalar_select 0, %s6, %s4
  loop: start=0, step=1, limit=4
  $region2: #{combination_forward.4} parent=0 // loop_pre_header
    _
  $region3: #{combination_forward.4} parent=0 // loop_header
    %s9 = sphi 0, %s13
    %p10 = scmp.ge.s32.totalorder %s9, 4
    %s19 = sphi 0, %s21
    %s22 = sphi 0, %s19
    %s23 = sphi 0, %s22
    %s39 = sphi 0, %s23
    %s45 = sphi 0, %s47
    %s48 = sphi 0, %s45
    %s49 = sphi 0, %s48
    %s65 = sphi 0, %s49
    %s69 = sphi 0, %s69
    %s71 = sphi 0, %s69
    %s72 = sphi 0, %s71
    %s86 = sphi 0, %s72
    %s92 = sphi 0, %s94
    %s95 = sphi 0, %s92
    %s96 = sphi 0, %s95
    %s112 = sphi 0, %s96
  $region4: #{combination_forward.4} parent=0 // loop_header_branch
    %12 = sbr.rel (%p10) target = $region8
  $region5: #{combination_forward.4} parent=0 // loop_body
    %s14 = ssub.s32 %s9, 1
    %s15 = ssub.s32 %s9, 2
    %s16 = sadd.s32 %s9, 1
    %s17 = ssub.s32 %s9, %s16
    %p18 = scmp.eq.s32.totalorder %s17, 0
    %s20 = sadd.s32 %s19, 1
    %s21 = scalar_select %p18, %s19, %s20
    %p24 = pneg %p18
    %p25 = scmp.eq.s32.totalorder %s9, 1
    %p26 = por %p24, %p25
    %p27 = scmp.ne.s32.totalorder %s19, %s22
    %p28 = scmp.eq.s32.totalorder %s9, 0
    %p29 = por %p27, %p28
    %p30 = scmp.ne.s32.totalorder %s19, %s22
    %p31 = scmp.eq.s32.totalorder %s14, 1
    %p32 = por %p30, %p31
    %p33 = scmp.ne.s32.totalorder %s22, %s23
    %p34 = scmp.eq.s32.totalorder %s14, 0
    %p35 = por %p33, %p34
    %p36 = scmp.ne.s32.totalorder %s22, %s23
    %p37 = scmp.eq.s32.totalorder %s15, 1
    %p38 = por %p36, %p37
    %p40 = scmp.ne.s32.totalorder %s23, %s39
    %p41 = scmp.eq.s32.totalorder %s15, 0
    %p42 = por %p40, %p41
    %s43 = ssub.s32 %s9, %s16
    %p44 = scmp.eq.s32.totalorder %s43, 0
    %s46 = sadd.s32 %s45, 1
    %s47 = scalar_select %p44, %s45, %s46
    %p50 = pneg %p44
    %p51 = scmp.eq.s32.totalorder %s9, 1
    %p52 = por %p50, %p51
    %p53 = scmp.ne.s32.totalorder %s45, %s48
    %p54 = scmp.eq.s32.totalorder %s9, 0
    %p55 = por %p53, %p54
    %p56 = scmp.ne.s32.totalorder %s45, %s48
    %p57 = scmp.eq.s32.totalorder %s14, 1
    %p58 = por %p56, %p57
    %p59 = scmp.ne.s32.totalorder %s48, %s49
    %p60 = scmp.eq.s32.totalorder %s14, 0
    %p61 = por %p59, %p60
    %p62 = scmp.ne.s32.totalorder %s48, %s49
    %p63 = scmp.eq.s32.totalorder %s15, 1
    %p64 = por %p62, %p63
    %p66 = scmp.ne.s32.totalorder %s49, %s65
    %p67 = scmp.eq.s32.totalorder %s15, 0
    %p68 = por %p66, %p67
    %s70 = sadd.s32 %s69, 1
    %p73 = scmp.eq.s32.totalorder %s9, 1
    %p74 = scmp.ne.s32.totalorder %s69, %s71
    %p75 = scmp.eq.s32.totalorder %s9, 0
    %p76 = por %p74, %p75
    %p77 = scmp.ne.s32.totalorder %s69, %s71
    %p78 = scmp.eq.s32.totalorder %s14, 1
    %p79 = por %p77, %p78
    %p80 = scmp.ne.s32.totalorder %s71, %s72
    %p81 = scmp.eq.s32.totalorder %s14, 0
    %p82 = por %p80, %p81
    %p83 = scmp.ne.s32.totalorder %s71, %s72
    %p84 = scmp.eq.s32.totalorder %s15, 1
    %p85 = por %p83, %p84
    %p87 = scmp.ne.s32.totalorder %s72, %s86
    %p88 = scmp.eq.s32.totalorder %s15, 0
    %p89 = por %p87, %p88
    %s90 = ssub.s32 %s9, %s16
    %p91 = scmp.eq.s32.totalorder %s90, 0
    %s93 = sadd.s32 %s92, 1
    %s94 = scalar_select %p91, %s92, %s93
    %p97 = pneg %p91
    %p98 = scmp.eq.s32.totalorder %s9, 1
    %p99 = por %p97, %p98
    %p100 = scmp.ne.s32.totalorder %s92, %s95
    %p101 = scmp.eq.s32.totalorder %s9, 0
    %p102 = por %p100, %p101
    %p103 = scmp.ne.s32.totalorder %s92, %s95
    %p104 = scmp.eq.s32.totalorder %s14, 1
    %p105 = por %p103, %p104
    %p106 = scmp.ne.s32.totalorder %s95, %s96
    %p107 = scmp.eq.s32.totalorder %s14, 0
    %p108 = por %p106, %p107
    %p109 = scmp.ne.s32.totalorder %s95, %s96
    %p110 = scmp.eq.s32.totalorder %s15, 1
    %p111 = por %p109, %p110
    %p113 = scmp.ne.s32.totalorder %s96, %s112
    %p114 = scmp.eq.s32.totalorder %s15, 0
    %p115 = por %p113, %p114
    %p116 = scmp.le.s32.totalorder 1, %s9
    %p117 = scmp.lt.s32.totalorder %s9, 3
    %p118 = pnand %p116, %p117
    %p119 = pneg %p118
    // Predicated region
    $region9: #{combination_forward.4} parent=5 // pred_check
      _
    $region10: #{combination_forward.4} parent=5 // pred_check_branch
      %121 = sbr.rel (%p118) target = $region12
    $region11: #{combination_forward.4} parent=5 // pred_region
      %s122 = ssub.s32 %s9, 1
      // Predicated region
      $region13: #{combination_forward.4} parent=11 // pred_check
        %p123 = pneg %p82
      $region14: #{combination_forward.4} parent=11 // pred_check_branch
        %125 = sbr.rel (%p123) target = $region16
      $region15: #{combination_forward.4} parent=11 // pred_region
        _
      $region16: #{combination_forward.4} parent=11 // pred_fallthru
        _
    $region12: #{combination_forward.4} parent=5 // pred_fallthru
      _
    %p126 = scmp.lt.s32.totalorder %s9, 2
    // Predicated region
    $region17: #{combination_forward.4} parent=5 // pred_check
      %p127 = pneg %p126
    $region18: #{combination_forward.4} parent=5 // pred_check_branch
      %129 = sbr.rel (%p127) target = $region20
    $region19: #{combination_forward.4} parent=5 // pred_region
      // Predicated region
      $region21: #{combination_forward.4} parent=19 // pred_check
        %p130 = pneg %p29
      $region22: #{combination_forward.4} parent=19 // pred_check_branch
        %132 = sbr.rel (%p130) target = $region24
      $region23: #{combination_forward.4} parent=19 // pred_region
        %p133 = scmp.lt.s32.totalorder %s9, 1
        %s134 = scalar_select %p133, %s9, 1
        %s135 = smul.addr %s134, 32
        %s136 = smul.addr %s135, 4
        %s137 = scalar_lea.vmem %s0, %s136
      $region24: #{combination_forward.4} parent=19 // pred_fallthru
        _
      // Predicated region
      $region25: #{combination_forward.4} parent=19 // pred_check
        %p138 = pneg %p55
      $region26: #{combination_forward.4} parent=19 // pred_check_branch
        %140 = sbr.rel (%p138) target = $region28
      $region27: #{combination_forward.4} parent=19 // pred_region
        %p141 = scmp.lt.s32.totalorder %s9, 1
        %s142 = scalar_select %p141, %s9, 1
        %s143 = smul.addr %s142, 8
        %s144 = scalar_lea.vmem %s1, %s143
      $region28: #{combination_forward.4} parent=19 // pred_fallthru
        _
    $region20: #{combination_forward.4} parent=5 // pred_fallthru
      _
    %p145 = scmp.le.s32.totalorder 1, %s9
    %p146 = scmp.lt.s32.totalorder %s9, 3
    %p147 = pnand %p145, %p146
    %p148 = pneg %p147
    // Predicated region
    $region29: #{combination_forward.4} parent=5 // pred_check
      _
    $region30: #{combination_forward.4} parent=5 // pred_check_branch
      %150 = sbr.rel (%p147) target = $region32
    $region31: #{combination_forward.4} parent=5 // pred_region
      %s151 = ssub.s32 %s9, 1
      %p152 = scmp.lt.s32.totalorder %s14, 1
      %s153 = scalar_select %p152, %s14, 1
      %s154 = smul.addr %s153, 32
      %s155 = smul.addr %s154, 4
      %s156 = scalar_lea.vmem %s0, %s155
      %p157 = pneg %p35
      %p158 = pneg %p32
      %p159 = scmp.lt.s32.totalorder %s14, 1
      %s160 = scalar_select %p159, %s14, 1
      %s161 = smul.addr %s160, 8
      %s162 = scalar_lea.vmem %s1, %s161
      %p163 = pneg %p61
      %p164 = pneg %p58
      %p165 = pneg %p82
      %p166 = pneg %p79
      %p167 = pneg %p108
      %p168 = pneg %p105
      %p169 = scmp.lt.s32.totalorder %s14, 1
      %s170 = scalar_select %p169, %s14, 1
      %s171 = smul.addr %s170, 2
      %s172 = smul.addr %s171, 8
      %s173 = scalar_lea.vmem %s3, %s172
      %p174 = scmp.lt.s32.totalorder %s14, 1
      %s175 = scalar_select %p174, %s14, 1
      %s176 = smul.addr %s175, 32
      %s177 = smul.addr %s176, 4
      %s178 = scalar_lea.vmem %s0, %s177
      %p179 = scmp.lt.s32.totalorder %s14, 1
      %s180 = scalar_select %p179, %s14, 1
      %s181 = smul.addr %s180, 8
      %s182 = scalar_lea.vmem %s1, %s181
      %p183 = scmp.lt.s32.totalorder %s14, 1
      %s184 = scalar_select %p183, %s14, 1
      %s185 = smul.addr %s184, 2
      %s186 = smul.addr %s185, 8
      %s187 = scalar_lea.vmem %s3, %s186
      %v188 = vld [vmem:[%s182] sm:$0x1]
      %v189 = vld [vmem:[%s178] sm:$0xf]
      %v190 = vld [vmem:[%s178 + $0x4] sm:$0xf]
      %v191 = vld [vmem:[%s178 + $0x8] sm:$0xf]
      %v192 = vld [vmem:[%s178 + $0xc] sm:$0xf]
      %v193 = vld [vmem:[%s178 + $0x10] sm:$0xf]
      %v194 = vld [vmem:[%s178 + $0x14] sm:$0xf]
      %v195 = vld [vmem:[%s178 + $0x18] sm:$0xf]
      %v196 = vld [vmem:[%s178 + $0x1c] sm:$0xf]
      %v197 = vld [vmem:[%s178 + $0x20] sm:$0xf]
      %v198 = vld [vmem:[%s178 + $0x24] sm:$0xf]
      %v199 = vld [vmem:[%s178 + $0x28] sm:$0xf]
      %v200 = vld [vmem:[%s178 + $0x2c] sm:$0xf]
      %v201 = vld [vmem:[%s178 + $0x30] sm:$0xf]
      %v202 = vld [vmem:[%s178 + $0x34] sm:$0xf]
      %v203 = vld [vmem:[%s178 + $0x38] sm:$0xf]
      %v204 = vld [vmem:[%s178 + $0x3c] sm:$0xf]
      %v205 = vld [vmem:[%s178 + $0x40] sm:$0xf]
      %v206 = vld [vmem:[%s178 + $0x44] sm:$0xf]
      %v207 = vld [vmem:[%s178 + $0x48] sm:$0xf]
      %v208 = vld [vmem:[%s178 + $0x4c] sm:$0xf]
      %v209 = vld [vmem:[%s178 + $0x50] sm:$0xf]
      %v210 = vld [vmem:[%s178 + $0x54] sm:$0xf]
      %v211 = vld [vmem:[%s178 + $0x58] sm:$0xf]
      %v212 = vld [vmem:[%s178 + $0x5c] sm:$0xf]
      %v213 = vld [vmem:[%s178 + $0x60] sm:$0xf]
      %v214 = vld [vmem:[%s178 + $0x64] sm:$0xf]
      %v215 = vld [vmem:[%s178 + $0x68] sm:$0xf]
      %v216 = vld [vmem:[%s178 + $0x6c] sm:$0xf]
      %v217 = vld [vmem:[%s178 + $0x70] sm:$0xf]
      %v218 = vld [vmem:[%s178 + $0x74] sm:$0xf]
      %v219 = vld [vmem:[%s178 + $0x78] sm:$0xf]
      %v220 = vld [vmem:[%s178 + $0x7c] sm:$0xf]
      %v221 = vunpack.c.l.bf16 %v189
      %v222 = vunpack.c.l.bf16 %v190
      %v223 = vunpack.c.l.bf16 %v191
      %v224 = vunpack.c.l.bf16 %v192
      %v225 = vunpack.c.l.bf16 %v193
      %v226 = vunpack.c.l.bf16 %v194
      %v227 = vunpack.c.l.bf16 %v195
      %v228 = vunpack.c.l.bf16 %v196
      %v229 = vunpack.c.l.bf16 %v197
      %v230 = vunpack.c.l.bf16 %v198
      %v231 = vunpack.c.l.bf16 %v199
      %v232 = vunpack.c.l.bf16 %v200
      %v233 = vunpack.c.l.bf16 %v201
      %v234 = vunpack.c.l.bf16 %v202
      %v235 = vunpack.c.l.bf16 %v203
      %v236 = vunpack.c.l.bf16 %v204
      %v237 = vunpack.c.l.bf16 %v205
      %v238 = vunpack.c.l.bf16 %v206
      %v239 = vunpack.c.l.bf16 %v207
      %v240 = vunpack.c.l.bf16 %v208
      %v241 = vunpack.c.l.bf16 %v209
      %v242 = vunpack.c.l.bf16 %v210
      %v243 = vunpack.c.l.bf16 %v211
      %v244 = vunpack.c.l.bf16 %v212
      %v245 = vunpack.c.l.bf16 %v213
      %v246 = vunpack.c.l.bf16 %v214
      %v247 = vunpack.c.l.bf16 %v215
      %v248 = vunpack.c.l.bf16 %v216
      %v249 = vunpack.c.l.bf16 %v217
      %v250 = vunpack.c.l.bf16 %v218
      %v251 = vunpack.c.l.bf16 %v219
      %v252 = vunpack.c.l.bf16 %v220
      %v253 = vperm.slane %v188, 0
      %v254 = vmul.f32 %v221, %v253
      %v255 = vmul.f32 %v222, %v253
      %v256 = vmul.f32 %v223, %v253
      %v257 = vmul.f32 %v224, %v253
      %v258 = vmul.f32 %v225, %v253
      %v259 = vmul.f32 %v226, %v253
      %v260 = vmul.f32 %v227, %v253
      %v261 = vmul.f32 %v228, %v253
      %v262 = vmul.f32 %v229, %v253
      %v263 = vmul.f32 %v230, %v253
      %v264 = vmul.f32 %v231, %v253
      %v265 = vmul.f32 %v232, %v253
      %v266 = vmul.f32 %v233, %v253
      %v267 = vmul.f32 %v234, %v253
      %v268 = vmul.f32 %v235, %v253
      %v269 = vmul.f32 %v236, %v253
      %v270 = vmul.f32 %v237, %v253
      %v271 = vmul.f32 %v238, %v253
      %v272 = vmul.f32 %v239, %v253
      %v273 = vmul.f32 %v240, %v253
      %v274 = vmul.f32 %v241, %v253
      %v275 = vmul.f32 %v242, %v253
      %v276 = vmul.f32 %v243, %v253
      %v277 = vmul.f32 %v244, %v253
      %v278 = vmul.f32 %v245, %v253
      %v279 = vmul.f32 %v246, %v253
      %v280 = vmul.f32 %v247, %v253
      %v281 = vmul.f32 %v248, %v253
      %v282 = vmul.f32 %v249, %v253
      %v283 = vmul.f32 %v250, %v253
      %v284 = vmul.f32 %v251, %v253
      %v285 = vmul.f32 %v252, %v253
      %286 = vadd.xlane.f32.xlu0 %v254
      %v287 = vpop.xlane.xlu0 %286
      %288 = vadd.xlane.f32.xlu0 %v255
      %v289 = vpop.xlane.xlu0 %288
      %290 = vadd.xlane.f32.xlu0 %v256
      %v291 = vpop.xlane.xlu0 %290
      %292 = vadd.xlane.f32.xlu0 %v257
      %v293 = vpop.xlane.xlu0 %292
      %294 = vadd.xlane.f32.xlu0 %v258
      %v295 = vpop.xlane.xlu0 %294
      %296 = vadd.xlane.f32.xlu0 %v259
      %v297 = vpop.xlane.xlu0 %296
      %298 = vadd.xlane.f32.xlu0 %v260
      %v299 = vpop.xlane.xlu0 %298
      %300 = vadd.xlane.f32.xlu0 %v261
      %v301 = vpop.xlane.xlu0 %300
      %302 = vadd.xlane.f32.xlu0 %v262
      %v303 = vpop.xlane.xlu0 %302
      %304 = vadd.xlane.f32.xlu0 %v263
      %v305 = vpop.xlane.xlu0 %304
      %306 = vadd.xlane.f32.xlu0 %v264
      %v307 = vpop.xlane.xlu0 %306
      %308 = vadd.xlane.f32.xlu0 %v265
      %v309 = vpop.xlane.xlu0 %308
      %310 = vadd.xlane.f32.xlu0 %v266
      %v311 = vpop.xlane.xlu0 %310
      %312 = vadd.xlane.f32.xlu0 %v267
      %v313 = vpop.xlane.xlu0 %312
      %314 = vadd.xlane.f32.xlu0 %v268
      %v315 = vpop.xlane.xlu0 %314
      %316 = vadd.xlane.f32.xlu0 %v269
      %v317 = vpop.xlane.xlu0 %316
      %318 = vadd.xlane.f32.xlu0 %v270
      %v319 = vpop.xlane.xlu0 %318
      %320 = vadd.xlane.f32.xlu0 %v271
      %v321 = vpop.xlane.xlu0 %320
      %322 = vadd.xlane.f32.xlu0 %v272
      %v323 = vpop.xlane.xlu0 %322
      %324 = vadd.xlane.f32.xlu0 %v273
      %v325 = vpop.xlane.xlu0 %324
      %326 = vadd.xlane.f32.xlu0 %v274
      %v327 = vpop.xlane.xlu0 %326
      %328 = vadd.xlane.f32.xlu0 %v275
      %v329 = vpop.xlane.xlu0 %328
      %330 = vadd.xlane.f32.xlu0 %v276
      %v331 = vpop.xlane.xlu0 %330
      %332 = vadd.xlane.f32.xlu0 %v277
      %v333 = vpop.xlane.xlu0 %332
      %334 = vadd.xlane.f32.xlu0 %v278
      %v335 = vpop.xlane.xlu0 %334
      %336 = vadd.xlane.f32.xlu0 %v279
      %v337 = vpop.xlane.xlu0 %336
      %338 = vadd.xlane.f32.xlu0 %v280
      %v339 = vpop.xlane.xlu0 %338
      %340 = vadd.xlane.f32.xlu0 %v281
      %v341 = vpop.xlane.xlu0 %340
      %342 = vadd.xlane.f32.xlu0 %v282
      %v343 = vpop.xlane.xlu0 %342
      %344 = vadd.xlane.f32.xlu0 %v283
      %v345 = vpop.xlane.xlu0 %344
      %346 = vadd.xlane.f32.xlu0 %v284
      %v347 = vpop.xlane.xlu0 %346
      %348 = vadd.xlane.f32.xlu0 %v285
      %v349 = vpop.xlane.xlu0 %348
      %v350 = vmul.f32 %v287, 0.03125
      %v351 = vmul.f32 %v289, 0.03125
      %v352 = vmul.f32 %v291, 0.03125
      %v353 = vmul.f32 %v293, 0.03125
      %v354 = vmul.f32 %v295, 0.03125
      %v355 = vmul.f32 %v297, 0.03125
      %v356 = vmul.f32 %v299, 0.03125
      %v357 = vmul.f32 %v301, 0.03125
      %v358 = vmul.f32 %v303, 0.03125
      %v359 = vmul.f32 %v305, 0.03125
      %v360 = vmul.f32 %v307, 0.03125
      %v361 = vmul.f32 %v309, 0.03125
      %v362 = vmul.f32 %v311, 0.03125
      %v363 = vmul.f32 %v313, 0.03125
      %v364 = vmul.f32 %v315, 0.03125
      %v365 = vmul.f32 %v317, 0.03125
      %v366 = vmul.f32 %v319, 0.03125
      %v367 = vmul.f32 %v321, 0.03125
      %v368 = vmul.f32 %v323, 0.03125
      %v369 = vmul.f32 %v325, 0.03125
      %v370 = vmul.f32 %v327, 0.03125
      %v371 = vmul.f32 %v329, 0.03125
      %v372 = vmul.f32 %v331, 0.03125
      %v373 = vmul.f32 %v333, 0.03125
      %v374 = vmul.f32 %v335, 0.03125
      %v375 = vmul.f32 %v337, 0.03125
      %v376 = vmul.f32 %v339, 0.03125
      %v377 = vmul.f32 %v341, 0.03125
      %v378 = vmul.f32 %v343, 0.03125
      %v379 = vmul.f32 %v345, 0.03125
      %v380 = vmul.f32 %v347, 0.03125
      %v381 = vmul.f32 %v349, 0.03125
      %382 = vmax.xlane.f32.xlu0 %v254
      %v383 = vpop.xlane.xlu0 %382
      %384 = vmax.xlane.f32.xlu0 %v255
      %v385 = vpop.xlane.xlu0 %384
      %386 = vmax.xlane.f32.xlu0 %v256
      %v387 = vpop.xlane.xlu0 %386
      %388 = vmax.xlane.f32.xlu0 %v257
      %v389 = vpop.xlane.xlu0 %388
      %390 = vmax.xlane.f32.xlu0 %v258
      %v391 = vpop.xlane.xlu0 %390
      %392 = vmax.xlane.f32.xlu0 %v259
      %v393 = vpop.xlane.xlu0 %392
      %394 = vmax.xlane.f32.xlu0 %v260
      %v395 = vpop.xlane.xlu0 %394
      %396 = vmax.xlane.f32.xlu0 %v261
      %v397 = vpop.xlane.xlu0 %396
      %398 = vmax.xlane.f32.xlu0 %v262
      %v399 = vpop.xlane.xlu0 %398
      %400 = vmax.xlane.f32.xlu0 %v263
      %v401 = vpop.xlane.xlu0 %400
      %402 = vmax.xlane.f32.xlu0 %v264
      %v403 = vpop.xlane.xlu0 %402
      %404 = vmax.xlane.f32.xlu0 %v265
      %v405 = vpop.xlane.xlu0 %404
      %406 = vmax.xlane.f32.xlu0 %v266
      %v407 = vpop.xlane.xlu0 %406
      %408 = vmax.xlane.f32.xlu0 %v267
      %v409 = vpop.xlane.xlu0 %408
      %410 = vmax.xlane.f32.xlu0 %v268
      %v411 = vpop.xlane.xlu0 %410
      %412 = vmax.xlane.f32.xlu0 %v269
      %v413 = vpop.xlane.xlu0 %412
      %414 = vmax.xlane.f32.xlu0 %v270
      %v415 = vpop.xlane.xlu0 %414
      %416 = vmax.xlane.f32.xlu0 %v271
      %v417 = vpop.xlane.xlu0 %416
      %418 = vmax.xlane.f32.xlu0 %v272
      %v419 = vpop.xlane.xlu0 %418
      %420 = vmax.xlane.f32.xlu0 %v273
      %v421 = vpop.xlane.xlu0 %420
      %422 = vmax.xlane.f32.xlu0 %v274
      %v423 = vpop.xlane.xlu0 %422
      %424 = vmax.xlane.f32.xlu0 %v275
      %v425 = vpop.xlane.xlu0 %424
      %426 = vmax.xlane.f32.xlu0 %v276
      %v427 = vpop.xlane.xlu0 %426
      %428 = vmax.xlane.f32.xlu0 %v277
      %v429 = vpop.xlane.xlu0 %428
      %430 = vmax.xlane.f32.xlu0 %v278
      %v431 = vpop.xlane.xlu0 %430
      %432 = vmax.xlane.f32.xlu0 %v279
      %v433 = vpop.xlane.xlu0 %432
      %434 = vmax.xlane.f32.xlu0 %v280
      %v435 = vpop.xlane.xlu0 %434
      %436 = vmax.xlane.f32.xlu0 %v281
      %v437 = vpop.xlane.xlu0 %436
      %438 = vmax.xlane.f32.xlu0 %v282
      %v439 = vpop.xlane.xlu0 %438
      %440 = vmax.xlane.f32.xlu0 %v283
      %v441 = vpop.xlane.xlu0 %440
      %442 = vmax.xlane.f32.xlu0 %v284
      %v443 = vpop.xlane.xlu0 %442
      %444 = vmax.xlane.f32.xlu0 %v285
      %v445 = vpop.xlane.xlu0 %444
      %vm446 = vcmask 359424
      %447 = vst.msk [vmem:[#allocation2] sm:$0xff] %vm446, 0.0
      %448 = vst.msk [vmem:[#allocation2 + $0x8] sm:$0xff] %vm446, 0.0
      %vm449 = vcmask 357376
      %450 = vst.msk [vmem:[#allocation2 + $0x10] sm:$0x3f] %vm449, 0.0
      %v483 = vlaneseq
      %v484 = vand.u32 %v483, 127
      %v485 = vadd.s32 %v484, 4294967293
      %v486 = vperm.slane %v350, %v485
      %v487 = vadd.s32 %v484, 4294967285
      %v488 = vperm.slane %v351, %v487
      %vm489 = vcmask 154712
      %v490 = vsel %vm489, %v488, %v486
      %v491 = vperm.slane %v352, %v485
      %v492 = vperm.slane %v353, %v487
      %v493 = vsel %vm489, %v492, %v491
      %v494 = vperm.slane %v354, %v485
      %v495 = vperm.slane %v355, %v487
      %v496 = vsel %vm489, %v495, %v494
      %v497 = vperm.slane %v356, %v485
      %v498 = vperm.slane %v357, %v487
      %v499 = vsel %vm489, %v498, %v497
      %v500 = vperm.slane %v358, %v485
      %v501 = vperm.slane %v359, %v487
      %v502 = vsel %vm489, %v501, %v500
      %v503 = vperm.slane %v360, %v485
      %v504 = vperm.slane %v361, %v487
      %v505 = vsel %vm489, %v504, %v503
      %v506 = vperm.slane %v362, %v485
      %v507 = vperm.slane %v363, %v487
      %v508 = vsel %vm489, %v507, %v506
      %v509 = vperm.slane %v364, %v485
      %v510 = vperm.slane %v365, %v487
      %v511 = vsel %vm489, %v510, %v509
      %v512 = vperm.slane %v366, %v485
      %v513 = vperm.slane %v367, %v487
      %v514 = vsel %vm489, %v513, %v512
      %v515 = vperm.slane %v368, %v485
      %v516 = vperm.slane %v369, %v487
      %v517 = vsel %vm489, %v516, %v515
      %v518 = vperm.slane %v370, %v485
      %v519 = vperm.slane %v371, %v487
      %v520 = vsel %vm489, %v519, %v518
      %v521 = vperm.slane %v372, %v485
      %v522 = vperm.slane %v373, %v487
      %v523 = vsel %vm489, %v522, %v521
      %v524 = vperm.slane %v374, %v485
      %v525 = vperm.slane %v375, %v487
      %v526 = vsel %vm489, %v525, %v524
      %v527 = vperm.slane %v376, %v485
      %v528 = vperm.slane %v377, %v487
      %v529 = vsel %vm489, %v528, %v527
      %v530 = vperm.slane %v378, %v485
      %v531 = vperm.slane %v379, %v487
      %v532 = vsel %vm489, %v531, %v530
      %v533 = vperm.slane %v380, %v485
      %v534 = vperm.slane %v381, %v487
      %v535 = vsel %vm489, %v534, %v533
      %vm536 = vcmask 1041409
      %v537 = vsel %vm536, %v493, %v490
      %vm538 = vcmask 1042434
      %v539 = vsel %vm538, %v496, %v537
      %vm540 = vcmask 1043459
      %v541 = vsel %vm540, %v499, %v539
      %vm542 = vcmask 1044484
      %v543 = vsel %vm542, %v502, %v541
      %vm544 = vcmask 1045509
      %v545 = vsel %vm544, %v505, %v543
      %vm546 = vcmask 1046534
      %v547 = vsel %vm546, %v508, %v545
      %vm548 = vcmask 1047559
      %v549 = vsel %vm548, %v511, %v547
      %v550 = vsel %vm536, %v517, %v514
      %v551 = vsel %vm538, %v520, %v550
      %v552 = vsel %vm540, %v523, %v551
      %v553 = vsel %vm542, %v526, %v552
      %v554 = vsel %vm544, %v529, %v553
      %v555 = vsel %vm546, %v532, %v554
      %v556 = vsel %vm548, %v535, %v555
      %vm559 = vcmask 154648
      %560 = vst.msk [vmem:[#allocation2 + $0x3] sm:$0xff] %vm559, %v549
      %561 = vst.msk [vmem:[#allocation2 + $0xb] sm:$0xff] %vm559, %v556
      %v594 = vadd.s32 %v484, 4294967271
      %v595 = vperm.slane %v383, %v594
      %v596 = vadd.s32 %v484, 4294967263
      %v597 = vperm.slane %v385, %v596
      %vm598 = vcmask 335112
      %v599 = vsel %vm598, %v597, %v595
      %v600 = vperm.slane %v387, %v594
      %v601 = vperm.slane %v389, %v596
      %v602 = vsel %vm598, %v601, %v600
      %v603 = vperm.slane %v391, %v594
      %v604 = vperm.slane %v393, %v596
      %v605 = vsel %vm598, %v604, %v603
      %v606 = vperm.slane %v395, %v594
      %v607 = vperm.slane %v397, %v596
      %v608 = vsel %vm598, %v607, %v606
      %v609 = vperm.slane %v399, %v594
      %v610 = vperm.slane %v401, %v596
      %v611 = vsel %vm598, %v610, %v609
      %v612 = vperm.slane %v403, %v594
      %v613 = vperm.slane %v405, %v596
      %v614 = vsel %vm598, %v613, %v612
      %v615 = vperm.slane %v407, %v594
      %v616 = vperm.slane %v409, %v596
      %v617 = vsel %vm598, %v616, %v615
      %v618 = vperm.slane %v411, %v594
      %v619 = vperm.slane %v413, %v596
      %v620 = vsel %vm598, %v619, %v618
      %v621 = vperm.slane %v415, %v594
      %v622 = vperm.slane %v417, %v596
      %v623 = vsel %vm598, %v622, %v621
      %v624 = vperm.slane %v419, %v594
      %v625 = vperm.slane %v421, %v596
      %v626 = vsel %vm598, %v625, %v624
      %v627 = vperm.slane %v423, %v594
      %v628 = vperm.slane %v425, %v596
      %v629 = vsel %vm598, %v628, %v627
      %v630 = vperm.slane %v427, %v594
      %v631 = vperm.slane %v429, %v596
      %v632 = vsel %vm598, %v631, %v630
      %v633 = vperm.slane %v431, %v594
      %v634 = vperm.slane %v433, %v596
      %v635 = vsel %vm598, %v634, %v633
      %v636 = vperm.slane %v435, %v594
      %v637 = vperm.slane %v437, %v596
      %v638 = vsel %vm598, %v637, %v636
      %v639 = vperm.slane %v439, %v594
      %v640 = vperm.slane %v441, %v596
      %v641 = vsel %vm598, %v640, %v639
      %v642 = vperm.slane %v443, %v594
      %v643 = vperm.slane %v445, %v596
      %v644 = vsel %vm598, %v643, %v642
      %v645 = vsel %vm536, %v602, %v599
      %v646 = vsel %vm538, %v605, %v645
      %v647 = vsel %vm540, %v608, %v646
      %v648 = vsel %vm542, %v611, %v647
      %v649 = vsel %vm544, %v614, %v648
      %v650 = vsel %vm546, %v617, %v649
      %v651 = vsel %vm548, %v620, %v650
      %v652 = vsel %vm536, %v626, %v623
      %v653 = vsel %vm538, %v629, %v652
      %v654 = vsel %vm540, %v632, %v653
      %v655 = vsel %vm542, %v635, %v654
      %v656 = vsel %vm544, %v638, %v655
      %v657 = vsel %vm546, %v641, %v656
      %v658 = vsel %vm548, %v644, %v657
      %vm661 = vcmask 335048
      %662 = vst.msk [vmem:[#allocation2 + $0x3] sm:$0xff] %vm661, %v651
      %663 = vst.msk [vmem:[#allocation2 + $0xb] sm:$0xff] %vm661, %v658
      %v664 = vld [vmem:[#allocation2] sm:$0xff]
      %v665 = vld [vmem:[#allocation2 + $0x8] sm:$0xff]
      %v666 = vld [vmem:[%s2] sm:$0xff]
      %v667 = vld [vmem:[%s2 + $0x8] sm:$0xff]
      %v668 = vld [vmem:[%s2 + $0x10] sm:$0xff]
      %v669 = vld [vmem:[%s2 + $0x18] sm:$0xff]
      %v670 = vld [vmem:[%s2 + $0x20] sm:$0xff]
      %v671 = vld [vmem:[%s2 + $0x28] sm:$0xf]
      %v672 = vld [vmem:[#allocation2 + $0x1] sm:$0xff]
      %v673 = vld [vmem:[#allocation2 + $0x9] sm:$0xff]
      %s674 = scalar_lea.vmem %s2, 48
      %v675 = vld [vmem:[%s674] sm:$0xff]
      %v676 = vld [vmem:[%s674 + $0x8] sm:$0xff]
      %v677 = vld [vmem:[%s674 + $0x10] sm:$0xff]
      %v678 = vld [vmem:[%s674 + $0x18] sm:$0xff]
      %v679 = vld [vmem:[%s674 + $0x20] sm:$0xff]
      %v680 = vld [vmem:[%s674 + $0x28] sm:$0xf]
      %v682 = vsel %vm446, %v672, 0
      %v685 = vsel %vm446, %v673, 0
      %vm687 = vcmask 1043456
      %v689 = vsel %vm687, %v680, 0
      %691 = vmatpush.msra.mxu0 0.0
      %692 = vmatpush.msra.mxu0 0.0
      %693 = vmatpush.msra.mxu0 0.0
      %694 = vmatpush.msra.mxu0 0.0
      %695 = vmatpush.msra.mxu0 0.0
      %696 = vmatpush.msra.mxu0 0.0
      %697 = vmatpush.msra.mxu0 0.0
      %698 = vmatpush.msra.mxu0 0.0
      %699 = vmatpush.msra.mxu0 0.0
      %700 = vmatpush.msra.mxu0 0.0
      %701 = vmatpush.msra.mxu0 %v689
      %702 = vmatpush.msra.mxu0 %v679
      %703 = vmatpush.msra.mxu0 %v678
      %704 = vmatpush.msra.mxu0 %v677
      %705 = vmatpush.msra.mxu0 %v676
      %706 = vmatpush.msra.mxu0 %v675
      %707 = vmatmul.f32.gmra.mxu0 %v682
      %v708 = vpop.f32.mrf.mxu0
      %v709 = vadd.f32 0.0, %v708
      %710 = vmatmul.f32.gmra.mxu0 %v685
      %v711 = vpop.f32.mrf.mxu0
      %v712 = vadd.f32 0.0, %v711
      %713 = vdwg.mxu0
      %v715 = vsel %vm446, %v664, 0
      %v718 = vsel %vm446, %v665, 0
      %v721 = vsel %vm687, %v671, 0
      %723 = vmatpush.msra.mxu0 0.0
      %724 = vmatpush.msra.mxu0 0.0
      %725 = vmatpush.msra.mxu0 0.0
      %726 = vmatpush.msra.mxu0 0.0
      %727 = vmatpush.msra.mxu0 0.0
      %728 = vmatpush.msra.mxu0 0.0
      %729 = vmatpush.msra.mxu0 0.0
      %730 = vmatpush.msra.mxu0 0.0
      %731 = vmatpush.msra.mxu0 0.0
      %732 = vmatpush.msra.mxu0 0.0
      %733 = vmatpush.msra.mxu0 %v721
      %734 = vmatpush.msra.mxu0 %v670
      %735 = vmatpush.msra.mxu0 %v669
      %736 = vmatpush.msra.mxu0 %v668
      %737 = vmatpush.msra.mxu0 %v667
      %738 = vmatpush.msra.mxu0 %v666
      %739 = vmatmul.f32.gmra.mxu0 %v715
      %v740 = vpop.f32.mrf.mxu0
      %v741 = vadd.f32 %v709, %v740
      %742 = vmatmul.f32.gmra.mxu0 %v718
      %v743 = vpop.f32.mrf.mxu0
      %v744 = vadd.f32 %v712, %v743
      %745 = vdwg.mxu0
      %v746 = vld [vmem:[#allocation2 + $0x2] sm:$0xff]
      %v747 = vld [vmem:[#allocation2 + $0xa] sm:$0xff]
      %s748 = scalar_lea.vmem %s2, 96
      %v749 = vld [vmem:[%s748] sm:$0xff]
      %v750 = vld [vmem:[%s748 + $0x8] sm:$0xff]
      %v751 = vld [vmem:[%s748 + $0x10] sm:$0xff]
      %v752 = vld [vmem:[%s748 + $0x18] sm:$0xff]
      %v753 = vld [vmem:[%s748 + $0x20] sm:$0xff]
      %v754 = vld [vmem:[%s748 + $0x28] sm:$0xf]
      %v756 = vsel %vm446, %v746, 0
      %v759 = vsel %vm446, %v747, 0
      %v762 = vsel %vm687, %v754, 0
      %764 = vmatpush.msra.mxu0 0.0
      %765 = vmatpush.msra.mxu0 0.0
      %766 = vmatpush.msra.mxu0 0.0
      %767 = vmatpush.msra.mxu0 0.0
      %768 = vmatpush.msra.mxu0 0.0
      %769 = vmatpush.msra.mxu0 0.0
      %770 = vmatpush.msra.mxu0 0.0
      %771 = vmatpush.msra.mxu0 0.0
      %772 = vmatpush.msra.mxu0 0.0
      %773 = vmatpush.msra.mxu0 0.0
      %774 = vmatpush.msra.mxu0 %v762
      %775 = vmatpush.msra.mxu0 %v753
      %776 = vmatpush.msra.mxu0 %v752
      %777 = vmatpush.msra.mxu0 %v751
      %778 = vmatpush.msra.mxu0 %v750
      %779 = vmatpush.msra.mxu0 %v749
      %780 = vmatmul.f32.gmra.mxu0 %v756
      %v781 = vpop.f32.mrf.mxu0
      %v782 = vadd.f32 0.0, %v781
      %783 = vmatmul.f32.gmra.mxu0 %v759
      %v784 = vpop.f32.mrf.mxu0
      %v785 = vadd.f32 0.0, %v784
      %786 = vdwg.mxu0
      %v787 = vadd.f32 %v741, %v782
      %v788 = vadd.f32 %v744, %v785
      %v789 = vld [vmem:[#allocation2 + $0x3] sm:$0xff]
      %v790 = vld [vmem:[#allocation2 + $0xb] sm:$0xff]
      %s791 = scalar_lea.vmem %s2, 144
      %v792 = vld [vmem:[%s791] sm:$0xff]
      %v793 = vld [vmem:[%s791 + $0x8] sm:$0xff]
      %v794 = vld [vmem:[%s791 + $0x10] sm:$0xff]
      %v795 = vld [vmem:[%s791 + $0x18] sm:$0xff]
      %v796 = vld [vmem:[%s791 + $0x20] sm:$0xff]
      %v797 = vld [vmem:[%s791 + $0x28] sm:$0xf]
      %v799 = vsel %vm446, %v789, 0
      %v802 = vsel %vm446, %v790, 0
      %v805 = vsel %vm687, %v797, 0
      %807 = vmatpush.msra.mxu0 0.0
      %808 = vmatpush.msra.mxu0 0.0
      %809 = vmatpush.msra.mxu0 0.0
      %810 = vmatpush.msra.mxu0 0.0
      %811 = vmatpush.msra.mxu0 0.0
      %812 = vmatpush.msra.mxu0 0.0
      %813 = vmatpush.msra.mxu0 0.0
      %814 = vmatpush.msra.mxu0 0.0
      %815 = vmatpush.msra.mxu0 0.0
      %816 = vmatpush.msra.mxu0 0.0
      %817 = vmatpush.msra.mxu0 %v805
      %818 = vmatpush.msra.mxu0 %v796
      %819 = vmatpush.msra.mxu0 %v795
      %820 = vmatpush.msra.mxu0 %v794
      %821 = vmatpush.msra.mxu0 %v793
      %822 = vmatpush.msra.mxu0 %v792
      %823 = vmatmul.f32.gmra.mxu0 %v799
      %v824 = vpop.f32.mrf.mxu0
      %v825 = vadd.f32 0.0, %v824
      %826 = vmatmul.f32.gmra.mxu0 %v802
      %v827 = vpop.f32.mrf.mxu0
      %v828 = vadd.f32 0.0, %v827
      %829 = vdwg.mxu0
      %v830 = vadd.f32 %v787, %v825
      %v831 = vadd.f32 %v788, %v828
      %v832 = vld [vmem:[#allocation2 + $0x4] sm:$0xff]
      %v833 = vld [vmem:[#allocation2 + $0xc] sm:$0xff]
      %s834 = scalar_lea.vmem %s2, 192
      %v835 = vld [vmem:[%s834] sm:$0xff]
      %v836 = vld [vmem:[%s834 + $0x8] sm:$0xff]
      %v837 = vld [vmem:[%s834 + $0x10] sm:$0xff]
      %v838 = vld [vmem:[%s834 + $0x18] sm:$0xff]
      %v839 = vld [vmem:[%s834 + $0x20] sm:$0xff]
      %v840 = vld [vmem:[%s834 + $0x28] sm:$0xf]
      %v842 = vsel %vm446, %v832, 0
      %v845 = vsel %vm446, %v833, 0
      %v848 = vsel %vm687, %v840, 0
      %850 = vmatpush.msra.mxu0 0.0
      %851 = vmatpush.msra.mxu0 0.0
      %852 = vmatpush.msra.mxu0 0.0
      %853 = vmatpush.msra.mxu0 0.0
      %854 = vmatpush.msra.mxu0 0.0
      %855 = vmatpush.msra.mxu0 0.0
      %856 = vmatpush.msra.mxu0 0.0
      %857 = vmatpush.msra.mxu0 0.0
      %858 = vmatpush.msra.mxu0 0.0
      %859 = vmatpush.msra.mxu0 0.0
      %860 = vmatpush.msra.mxu0 %v848
      %861 = vmatpush.msra.mxu0 %v839
      %862 = vmatpush.msra.mxu0 %v838
      %863 = vmatpush.msra.mxu0 %v837
      %864 = vmatpush.msra.mxu0 %v836
      %865 = vmatpush.msra.mxu0 %v835
      %866 = vmatmul.f32.gmra.mxu0 %v842
      %v867 = vpop.f32.mrf.mxu0
      %v868 = vadd.f32 0.0, %v867
      %869 = vmatmul.f32.gmra.mxu0 %v845
      %v870 = vpop.f32.mrf.mxu0
      %v871 = vadd.f32 0.0, %v870
      %872 = vdwg.mxu0
      %v873 = vadd.f32 %v830, %v868
      %v874 = vadd.f32 %v831, %v871
      %v875 = vld [vmem:[#allocation2 + $0x5] sm:$0xff]
      %v876 = vld [vmem:[#allocation2 + $0xd] sm:$0xff]
      %s877 = scalar_lea.vmem %s2, 240
      %v878 = vld [vmem:[%s877] sm:$0xff]
      %v879 = vld [vmem:[%s877 + $0x8] sm:$0xff]
      %v880 = vld [vmem:[%s877 + $0x10] sm:$0xff]
      %v881 = vld [vmem:[%s877 + $0x18] sm:$0xff]
      %v882 = vld [vmem:[%s877 + $0x20] sm:$0xff]
      %v883 = vld [vmem:[%s877 + $0x28] sm:$0xf]
      %v885 = vsel %vm446, %v875, 0
      %v888 = vsel %vm446, %v876, 0
      %v891 = vsel %vm687, %v883, 0
      %893 = vmatpush.msra.mxu0 0.0
      %894 = vmatpush.msra.mxu0 0.0
      %895 = vmatpush.msra.mxu0 0.0
      %896 = vmatpush.msra.mxu0 0.0
      %897 = vmatpush.msra.mxu0 0.0
      %898 = vmatpush.msra.mxu0 0.0
      %899 = vmatpush.msra.mxu0 0.0
      %900 = vmatpush.msra.mxu0 0.0
      %901 = vmatpush.msra.mxu0 0.0
      %902 = vmatpush.msra.mxu0 0.0
      %903 = vmatpush.msra.mxu0 %v891
      %904 = vmatpush.msra.mxu0 %v882
      %905 = vmatpush.msra.mxu0 %v881
      %906 = vmatpush.msra.mxu0 %v880
      %907 = vmatpush.msra.mxu0 %v879
      %908 = vmatpush.msra.mxu0 %v878
      %909 = vmatmul.f32.gmra.mxu0 %v885
      %v910 = vpop.f32.mrf.mxu0
      %v911 = vadd.f32 0.0, %v910
      %912 = vmatmul.f32.gmra.mxu0 %v888
      %v913 = vpop.f32.mrf.mxu0
      %v914 = vadd.f32 0.0, %v913
      %915 = vdwg.mxu0
      %v916 = vadd.f32 %v873, %v911
      %v917 = vadd.f32 %v874, %v914
      %v918 = vld [vmem:[#allocation2 + $0x6] sm:$0xff]
      %v919 = vld [vmem:[#allocation2 + $0xe] sm:$0xff]
      %s920 = scalar_lea.vmem %s2, 288
      %v921 = vld [vmem:[%s920] sm:$0xff]
      %v922 = vld [vmem:[%s920 + $0x8] sm:$0xff]
      %v923 = vld [vmem:[%s920 + $0x10] sm:$0xff]
      %v924 = vld [vmem:[%s920 + $0x18] sm:$0xff]
      %v925 = vld [vmem:[%s920 + $0x20] sm:$0xff]
      %v926 = vld [vmem:[%s920 + $0x28] sm:$0xf]
      %v928 = vsel %vm446, %v918, 0
      %v931 = vsel %vm446, %v919, 0
      %v934 = vsel %vm687, %v926, 0
      %936 = vmatpush.msra.mxu0 0.0
      %937 = vmatpush.msra.mxu0 0.0
      %938 = vmatpush.msra.mxu0 0.0
      %939 = vmatpush.msra.mxu0 0.0
      %940 = vmatpush.msra.mxu0 0.0
      %941 = vmatpush.msra.mxu0 0.0
      %942 = vmatpush.msra.mxu0 0.0
      %943 = vmatpush.msra.mxu0 0.0
      %944 = vmatpush.msra.mxu0 0.0
      %945 = vmatpush.msra.mxu0 0.0
      %946 = vmatpush.msra.mxu0 %v934
      %947 = vmatpush.msra.mxu0 %v925
      %948 = vmatpush.msra.mxu0 %v924
      %949 = vmatpush.msra.mxu0 %v923
      %950 = vmatpush.msra.mxu0 %v922
      %951 = vmatpush.msra.mxu0 %v921
      %952 = vmatmul.f32.gmra.mxu0 %v928
      %v953 = vpop.f32.mrf.mxu0
      %v954 = vadd.f32 0.0, %v953
      %955 = vmatmul.f32.gmra.mxu0 %v931
      %v956 = vpop.f32.mrf.mxu0
      %v957 = vadd.f32 0.0, %v956
      %958 = vdwg.mxu0
      %v959 = vadd.f32 %v916, %v954
      %v960 = vadd.f32 %v917, %v957
      %v961 = vxor.u32 %v959, 2147483648
      %v962 = vxor.u32 %v960, 2147483648
      %v963 = vmul.f32 %v961, 1.442695
      %v964 = vpow.pop %v963
      %v965 = vmul.f32 %v962, 1.442695
      %v966 = vpow.pop %v965
      %v967 = vadd.f32 %v964, 1.0
      %v968 = vadd.f32 %v966, 1.0
      %v969 = vrcp.pop %v967
      %v970 = vmul.f32 %v967, %v969
      %v971 = vsub.f32 1.0, %v970
      %v972 = vmul.f32 %v969, %v971
      %v973 = vadd.f32 %v969, %v972
      %vm974 = vweird.f32 %v967
      %vm975 = vweird.f32 %v969
      %vm976 = vmor %vm974, %vm975
      %v977 = vsel %vm976, %v969, %v973
      %v978 = vand.u32 2147483647, %v967
      %vm979 = vcmp.eq.f32.partialorder %v978, 8.507059e+37
      %v980 = vand.u32 %v967, 2147483648
      %v981 = vor.u32 1.1754944e-38, %v980
      %v982 = vsel %vm979, %v981, %v977
      %v983 = vmul.f32 1.0, %v982
      %v984 = vrcp.pop %v968
      %v985 = vmul.f32 %v968, %v984
      %v986 = vsub.f32 1.0, %v985
      %v987 = vmul.f32 %v984, %v986
      %v988 = vadd.f32 %v984, %v987
      %vm989 = vweird.f32 %v968
      %vm990 = vweird.f32 %v984
      %vm991 = vmor %vm989, %vm990
      %v992 = vsel %vm991, %v984, %v988
      %v993 = vand.u32 2147483647, %v968
      %vm994 = vcmp.eq.f32.partialorder %v993, 8.507059e+37
      %v995 = vand.u32 %v968, 2147483648
      %v996 = vor.u32 1.1754944e-38, %v995
      %v997 = vsel %vm994, %v996, %v992
      %v998 = vmul.f32 1.0, %v997
      %vm999 = vcmask 130048
      %1000 = vst.msk [vmem:[%s187] sm:$0xff] %vm999, %v983
      %1001 = vst.msk [vmem:[%s187 + $0x8] sm:$0xff] %vm999, %v998
      %p1002 = scmp.lt.s32.totalorder %s14, 1
      %s1003 = scalar_select %p1002, %s14, 1
      %s1004 = smul.addr %s1003, 2
      %s1005 = smul.addr %s1004, 8
      %s1006 = scalar_lea.vmem %s3, %s1005
      // Predicated region
      $region33: #{combination_forward.4} parent=31 // pred_check
        %p1007 = pneg %p105
      $region34: #{combination_forward.4} parent=31 // pred_check_branch
        %1009 = sbr.rel (%p1007) target = $region36
      $region35: #{combination_forward.4} parent=31 // pred_region
        _
      $region36: #{combination_forward.4} parent=31 // pred_fallthru
        _
    $region32: #{combination_forward.4} parent=5 // pred_fallthru
      _
    %p1010 = scmp.le.s32.totalorder 2, %s9
    // Predicated region
    $region37: #{combination_forward.4} parent=5 // pred_check
      %p1011 = pneg %p1010
    $region38: #{combination_forward.4} parent=5 // pred_check_branch
      %1013 = sbr.rel (%p1011) target = $region40
    $region39: #{combination_forward.4} parent=5 // pred_region
      %s1014 = ssub.s32 %s9, 2
      // Predicated region
      $region41: #{combination_forward.4} parent=39 // pred_check
        %p1015 = pneg %p111
      $region42: #{combination_forward.4} parent=39 // pred_check_branch
        %1017 = sbr.rel (%p1015) target = $region44
      $region43: #{combination_forward.4} parent=39 // pred_region
        %p1018 = scmp.lt.s32.totalorder %s15, 1
        %s1019 = scalar_select %p1018, %s15, 1
        %s1020 = smul.addr %s1019, 2
        %s1021 = smul.addr %s1020, 8
        %s1022 = scalar_lea.vmem %s3, %s1021
      $region44: #{combination_forward.4} parent=39 // pred_fallthru
        _
    $region40: #{combination_forward.4} parent=5 // pred_fallthru
      _
  $region6: #{combination_forward.4} parent=0 // loop_footer
    %s13 = sadd.s32 1, %s9
  $region7: #{combination_forward.4} parent=0 // loop_footer_branch
    %8 = sbr.rel target = $region3
  $region8: #{combination_forward.4} parent=0 // loop_exit
    _

// kernel: combination_forward.5
$region0: #{combination_forward.5}
  #allocation0 [shape = 'u32[]', space=smem, size = 0x4, offset = 0x4, fixed_abs, tag = 'smem constant byte address 0x4 - core index']
  #allocation1 [shape = 'u32[72,128]{1,0:T(1,128)}', space=vmem, size = 0x9000, scoped, tag = 'internal scratch']
  %s0 = inlined_call_operand.vmem [shape: bf16[2,256,128], index: 0, kind: input, shape index: {}]
  %s1 = inlined_call_operand.vmem [shape: bf16[2,256,128], index: 1, kind: input, shape index: {}]
  %s2 = inlined_call_operand.vmem [shape: f32[2,8,128], index: 2, kind: input, shape index: {}]
  %s3 = inlined_call_operand.vmem [shape: f32[2,256,1], index: 3, kind: input, shape index: {}]
  %s4 = inlined_call_operand.vmem [shape: bf16[256,128], index: 4, kind: input, shape index: {}]
  %s5 = inlined_call_operand.vmem [shape: f32[1,128], index: 5, kind: input, shape index: {}]
  %s6 = inlined_call_operand.hbm [shape: f32[2,256,128], index: 6, kind: output, shape index: {}]
  %s7 = sld [smem:[#allocation0]]
  $region57: #{combination_forward.5} parent=0
    _
  %s9 = ssub.s32 1, %s7
  %s10 = scalar_select 0, %s9, %s7
  $region1: #{combination_forward.5} parent=0
    #allocation2 [shape = 'u8[262144]{0}', space=vmem, size = 0x40000, scoped, tag = 'output window, operand 0']
    #allocation3 [shape = 's32[2]{0}', space=sflag, size = 0x8, scoped, tag = 'scoped memory for combination_forward.5']
    %11 = vsyncpa [#allocation3], 0
    %s12 = scalar_lea.sflag [#allocation3], 1
    %13 = vsyncpa %s12, 0
    loop: start=0, step=1, limit=4
    $region2: #{combination_forward.5} parent=1 // loop_pre_header
      _
    $region3: #{combination_forward.5} parent=1 // loop_header
      %s15 = sphi 0, %s19
      %p16 = scmp.ge.s32.totalorder %s15, 4
      %s22 = sphi 0, %s34
      %s23 = sphi 0, %s30
      %s24 = sphi 0, %s22
      %s25 = sphi 0, %s23
      %s26 = sphi 0, %s24
      %s27 = sphi 0, %s25
      %s39 = sphi 0, %s41
      %s42 = sphi 0, %s39
      %s43 = sphi 0, %s42
      %s59 = sphi 0, %s43
      %s67 = sphi 0, %s69
      %s70 = sphi 0, %s67
      %s71 = sphi 0, %s70
      %s87 = sphi 0, %s71
      %s93 = sphi 0, %s95
      %s96 = sphi 0, %s93
      %s97 = sphi 0, %s96
      %s113 = sphi 0, %s97
      %s121 = sphi 0, %s123
      %s124 = sphi 0, %s121
      %s125 = sphi 0, %s124
      %s141 = sphi 0, %s125
      %s145 = sphi 0, %s145
      %s147 = sphi 0, %s145
      %s148 = sphi 0, %s147
      %s162 = sphi 0, %s148
      %s166 = sphi 0, %s166
      %s168 = sphi 0, %s166
      %s169 = sphi 0, %s168
      %s183 = sphi 0, %s169
      %s191 = sphi 0, %s193
      %s194 = sphi 0, %s191
      %s195 = sphi 0, %s194
      %s211 = sphi 0, %s195
    $region4: #{combination_forward.5} parent=1 // loop_header_branch
      %18 = sbr.rel (%p16) target = $region8
    $region5: #{combination_forward.5} parent=1 // loop_body
      %s20 = ssub.s32 %s15, 1
      %s21 = ssub.s32 %s15, 2
      %s28 = sadd.s32 1, %s23
      %p29 = scmp.ge.s32.totalorder %s28, 1
      %s30 = scalar_select %p29, 0, %s28
      %s31 = sadd.s32 1, %s22
      %s32 = scalar_select %p29, %s31, %s22
      %p33 = scmp.ge.s32.totalorder %s32, 2
      %s34 = scalar_select %p33, 0, %s32
      %s35 = ssub.s32 %s22, %s34
      %s36 = ssub.s32 %s23, %s30
      %s37 = sor.u32 %s35, %s36
      %p38 = scmp.eq.s32.totalorder %s37, 0
      %s40 = sadd.s32 %s39, 1
      %s41 = scalar_select %p38, %s39, %s40
      %p44 = pneg %p38
      %p45 = scmp.eq.s32.totalorder %s15, 1
      %p46 = por %p44, %p45
      %p47 = scmp.ne.s32.totalorder %s39, %s42
      %p48 = scmp.eq.s32.totalorder %s15, 0
      %p49 = por %p47, %p48
      %p50 = scmp.ne.s32.totalorder %s39, %s42
      %p51 = scmp.eq.s32.totalorder %s20, 1
      %p52 = por %p50, %p51
      %p53 = scmp.ne.s32.totalorder %s42, %s43
      %p54 = scmp.eq.s32.totalorder %s20, 0
      %p55 = por %p53, %p54
      %p56 = scmp.ne.s32.totalorder %s42, %s43
      %p57 = scmp.eq.s32.totalorder %s21, 1
      %p58 = por %p56, %p57
      %p60 = scmp.ne.s32.totalorder %s43, %s59
      %p61 = scmp.eq.s32.totalorder %s21, 0
      %p62 = por %p60, %p61
      %s63 = ssub.s32 %s22, %s34
      %s64 = ssub.s32 %s23, %s30
      %s65 = sor.u32 %s63, %s64
      %p66 = scmp.eq.s32.totalorder %s65, 0
      %s68 = sadd.s32 %s67, 1
      %s69 = scalar_select %p66, %s67, %s68
      %p72 = pneg %p66
      %p73 = scmp.eq.s32.totalorder %s15, 1
      %p74 = por %p72, %p73
      %p75 = scmp.ne.s32.totalorder %s67, %s70
      %p76 = scmp.eq.s32.totalorder %s15, 0
      %p77 = por %p75, %p76
      %p78 = scmp.ne.s32.totalorder %s67, %s70
      %p79 = scmp.eq.s32.totalorder %s20, 1
      %p80 = por %p78, %p79
      %p81 = scmp.ne.s32.totalorder %s70, %s71
      %p82 = scmp.eq.s32.totalorder %s20, 0
      %p83 = por %p81, %p82
      %p84 = scmp.ne.s32.totalorder %s70, %s71
      %p85 = scmp.eq.s32.totalorder %s21, 1
      %p86 = por %p84, %p85
      %p88 = scmp.ne.s32.totalorder %s71, %s87
      %p89 = scmp.eq.s32.totalorder %s21, 0
      %p90 = por %p88, %p89
      %s91 = ssub.s32 %s22, %s34
      %p92 = scmp.eq.s32.totalorder %s91, 0
      %s94 = sadd.s32 %s93, 1
      %s95 = scalar_select %p92, %s93, %s94
      %p98 = pneg %p92
      %p99 = scmp.eq.s32.totalorder %s15, 1
      %p100 = por %p98, %p99
      %p101 = scmp.ne.s32.totalorder %s93, %s96
      %p102 = scmp.eq.s32.totalorder %s15, 0
      %p103 = por %p101, %p102
      %p104 = scmp.ne.s32.totalorder %s93, %s96
      %p105 = scmp.eq.s32.totalorder %s20, 1
      %p106 = por %p104, %p105
      %p107 = scmp.ne.s32.totalorder %s96, %s97
      %p108 = scmp.eq.s32.totalorder %s20, 0
      %p109 = por %p107, %p108
      %p110 = scmp.ne.s32.totalorder %s96, %s97
      %p111 = scmp.eq.s32.totalorder %s21, 1
      %p112 = por %p110, %p111
      %p114 = scmp.ne.s32.totalorder %s97, %s113
      %p115 = scmp.eq.s32.totalorder %s21, 0
      %p116 = por %p114, %p115
      %s117 = ssub.s32 %s22, %s34
      %s118 = ssub.s32 %s23, %s30
      %s119 = sor.u32 %s117, %s118
      %p120 = scmp.eq.s32.totalorder %s119, 0
      %s122 = sadd.s32 %s121, 1
      %s123 = scalar_select %p120, %s121, %s122
      %p126 = pneg %p120
      %p127 = scmp.eq.s32.totalorder %s15, 1
      %p128 = por %p126, %p127
      %p129 = scmp.ne.s32.totalorder %s121, %s124
      %p130 = scmp.eq.s32.totalorder %s15, 0
      %p131 = por %p129, %p130
      %p132 = scmp.ne.s32.totalorder %s121, %s124
      %p133 = scmp.eq.s32.totalorder %s20, 1
      %p134 = por %p132, %p133
      %p135 = scmp.ne.s32.totalorder %s124, %s125
      %p136 = scmp.eq.s32.totalorder %s20, 0
      %p137 = por %p135, %p136
      %p138 = scmp.ne.s32.totalorder %s124, %s125
      %p139 = scmp.eq.s32.totalorder %s21, 1
      %p140 = por %p138, %p139
      %p142 = scmp.ne.s32.totalorder %s125, %s141
      %p143 = scmp.eq.s32.totalorder %s21, 0
      %p144 = por %p142, %p143
      %s146 = sadd.s32 %s145, 1
      %p149 = scmp.eq.s32.totalorder %s15, 1
      %p150 = scmp.ne.s32.totalorder %s145, %s147
      %p151 = scmp.eq.s32.totalorder %s15, 0
      %p152 = por %p150, %p151
      %p153 = scmp.ne.s32.totalorder %s145, %s147
      %p154 = scmp.eq.s32.totalorder %s20, 1
      %p155 = por %p153, %p154
      %p156 = scmp.ne.s32.totalorder %s147, %s148
      %p157 = scmp.eq.s32.totalorder %s20, 0
      %p158 = por %p156, %p157
      %p159 = scmp.ne.s32.totalorder %s147, %s148
      %p160 = scmp.eq.s32.totalorder %s21, 1
      %p161 = por %p159, %p160
      %p163 = scmp.ne.s32.totalorder %s148, %s162
      %p164 = scmp.eq.s32.totalorder %s21, 0
      %p165 = por %p163, %p164
      %s167 = sadd.s32 %s166, 1
      %p170 = scmp.eq.s32.totalorder %s15, 1
      %p171 = scmp.ne.s32.totalorder %s166, %s168
      %p172 = scmp.eq.s32.totalorder %s15, 0
      %p173 = por %p171, %p172
      %p174 = scmp.ne.s32.totalorder %s166, %s168
      %p175 = scmp.eq.s32.totalorder %s20, 1
      %p176 = por %p174, %p175
      %p177 = scmp.ne.s32.totalorder %s168, %s169
      %p178 = scmp.eq.s32.totalorder %s20, 0
      %p179 = por %p177, %p178
      %p180 = scmp.ne.s32.totalorder %s168, %s169
      %p181 = scmp.eq.s32.totalorder %s21, 1
      %p182 = por %p180, %p181
      %p184 = scmp.ne.s32.totalorder %s169, %s183
      %p185 = scmp.eq.s32.totalorder %s21, 0
      %p186 = por %p184, %p185
      %s187 = ssub.s32 %s22, %s34
      %s188 = ssub.s32 %s23, %s30
      %s189 = sor.u32 %s187, %s188
      %p190 = scmp.eq.s32.totalorder %s189, 0
      %s192 = sadd.s32 %s191, 1
      %s193 = scalar_select %p190, %s191, %s192
      %p196 = pneg %p190
      %p197 = scmp.eq.s32.totalorder %s15, 1
      %p198 = por %p196, %p197
      %p199 = scmp.ne.s32.totalorder %s191, %s194
      %p200 = scmp.eq.s32.totalorder %s15, 0
      %p201 = por %p199, %p200
      %p202 = scmp.ne.s32.totalorder %s191, %s194
      %p203 = scmp.eq.s32.totalorder %s20, 1
      %p204 = por %p202, %p203
      %p205 = scmp.ne.s32.totalorder %s194, %s195
      %p206 = scmp.eq.s32.totalorder %s20, 0
      %p207 = por %p205, %p206
      %p208 = scmp.ne.s32.totalorder %s194, %s195
      %p209 = scmp.eq.s32.totalorder %s21, 1
      %p210 = por %p208, %p209
      %p212 = scmp.ne.s32.totalorder %s195, %s211
      %p213 = scmp.eq.s32.totalorder %s21, 0
      %p214 = por %p212, %p213
      %p215 = scmp.le.s32.totalorder 1, %s15
      %p216 = scmp.lt.s32.totalorder %s15, 3
      %p217 = pnand %p215, %p216
      %p218 = pneg %p217
      // Predicated region
      $region9: #{combination_forward.5} parent=5 // pred_check
        _
      $region10: #{combination_forward.5} parent=5 // pred_check_branch
        %220 = sbr.rel (%p217) target = $region12
      $region11: #{combination_forward.5} parent=5 // pred_region
        %s221 = ssub.s32 %s15, 1
        // Predicated region
        $region13: #{combination_forward.5} parent=11 // pred_check
          %p222 = pneg %p158
        $region14: #{combination_forward.5} parent=11 // pred_check_branch
          %224 = sbr.rel (%p222) target = $region16
        $region15: #{combination_forward.5} parent=11 // pred_region
          _
        $region16: #{combination_forward.5} parent=11 // pred_fallthru
          _
        // Predicated region
        $region17: #{combination_forward.5} parent=11 // pred_check
          %p225 = pneg %p179
        $region18: #{combination_forward.5} parent=11 // pred_check_branch
          %227 = sbr.rel (%p225) target = $region20
        $region19: #{combination_forward.5} parent=11 // pred_region
          _
        $region20: #{combination_forward.5} parent=11 // pred_fallthru
          _
      $region12: #{combination_forward.5} parent=5 // pred_fallthru
        _
      %p228 = scmp.lt.s32.totalorder %s15, 2
      // Predicated region
      $region21: #{combination_forward.5} parent=5 // pred_check
        %p229 = pneg %p228
      $region22: #{combination_forward.5} parent=5 // pred_check_branch
        %231 = sbr.rel (%p229) target = $region24
      $region23: #{combination_forward.5} parent=5 // pred_region
        // Predicated region
        $region25: #{combination_forward.5} parent=23 // pred_check
          %p232 = pneg %p49
        $region26: #{combination_forward.5} parent=23 // pred_check_branch
          %234 = sbr.rel (%p232) target = $region28
        $region27: #{combination_forward.5} parent=23 // pred_region
          %s235 = smul.u32 32, %s23
          %p236 = scmp.lt.s32.totalorder %s22, 1
          %s237 = scalar_select %p236, %s22, 1
          %p238 = scmp.lt.s32.totalorder %s235, 31
          %s239 = scalar_select %p238, %s235, 31
          %s240 = smul.addr %s237, 32
          %s241 = sadd.s32 %s239, %s240
          %s242 = smul.addr %s241, 4
          %s243 = scalar_lea.vmem %s0, %s242
          %s244 = smul.u32 32, %s23
        $region28: #{combination_forward.5} parent=23 // pred_fallthru
          _
        // Predicated region
        $region29: #{combination_forward.5} parent=23 // pred_check
          %p245 = pneg %p77
        $region30: #{combination_forward.5} parent=23 // pred_check_branch
          %247 = sbr.rel (%p245) target = $region32
        $region31: #{combination_forward.5} parent=23 // pred_region
          %s248 = smul.u32 32, %s23
          %p249 = scmp.lt.s32.totalorder %s22, 1
          %s250 = scalar_select %p249, %s22, 1
          %p251 = scmp.lt.s32.totalorder %s248, 31
          %s252 = scalar_select %p251, %s248, 31
          %s253 = smul.addr %s250, 32
          %s254 = sadd.s32 %s252, %s253
          %s255 = smul.addr %s254, 4
          %s256 = scalar_lea.vmem %s1, %s255
          %s257 = smul.u32 32, %s23
        $region32: #{combination_forward.5} parent=23 // pred_fallthru
          _
        // Predicated region
        $region33: #{combination_forward.5} parent=23 // pred_check
          %p258 = pneg %p103
        $region34: #{combination_forward.5} parent=23 // pred_check_branch
          %260 = sbr.rel (%p258) target = $region36
        $region35: #{combination_forward.5} parent=23 // pred_region
          %p261 = scmp.lt.s32.totalorder %s22, 1
          %s262 = scalar_select %p261, %s22, 1
          %s263 = smul.addr %s262, 8
          %s264 = scalar_lea.vmem %s2, %s263
        $region36: #{combination_forward.5} parent=23 // pred_fallthru
          _
        // Predicated region
        $region37: #{combination_forward.5} parent=23 // pred_check
          %p265 = pneg %p131
        $region38: #{combination_forward.5} parent=23 // pred_check_branch
          %267 = sbr.rel (%p265) target = $region40
        $region39: #{combination_forward.5} parent=23 // pred_region
          %s268 = smul.u32 32, %s23
          %p269 = scmp.lt.s32.totalorder %s22, 1
          %s270 = scalar_select %p269, %s22, 1
          %p271 = scmp.lt.s32.totalorder %s268, 31
          %s272 = scalar_select %p271, %s268, 31
          %s273 = smul.addr %s270, 32
          %s274 = sadd.s32 %s272, %s273
          %s275 = smul.addr %s274, 8
          %s276 = scalar_lea.vmem %s3, %s275
          %s277 = smul.u32 32, %s23
        $region40: #{combination_forward.5} parent=23 // pred_fallthru
          _
      $region24: #{combination_forward.5} parent=5 // pred_fallthru
        _
      %p278 = scmp.le.s32.totalorder 1, %s15
      %p279 = scmp.lt.s32.totalorder %s15, 3
      %p280 = pnand %p278, %p279
      %p281 = pneg %p280
      // Predicated region
      $region41: #{combination_forward.5} parent=5 // pred_check
        _
      $region42: #{combination_forward.5} parent=5 // pred_check_branch
        %283 = sbr.rel (%p280) target = $region44
      $region43: #{combination_forward.5} parent=5 // pred_region
        %s284 = ssub.s32 %s15, 1
        %s285 = smul.u32 32, %s25
        %p286 = scmp.lt.s32.totalorder %s24, 1
        %s287 = scalar_select %p286, %s24, 1
        %p288 = scmp.lt.s32.totalorder %s285, 31
        %s289 = scalar_select %p288, %s285, 31
        %s290 = smul.addr %s287, 32
        %s291 = sadd.s32 %s289, %s290
        %s292 = smul.addr %s291, 4
        %s293 = scalar_lea.vmem %s0, %s292
        %p294 = pneg %p55
        %p295 = pneg %p52
        %s296 = smul.u32 32, %s25
        %p297 = scmp.lt.s32.totalorder %s24, 1
        %s298 = scalar_select %p297, %s24, 1
        %p299 = scmp.lt.s32.totalorder %s296, 31
        %s300 = scalar_select %p299, %s296, 31
        %s301 = smul.addr %s298, 32
        %s302 = sadd.s32 %s300, %s301
        %s303 = smul.addr %s302, 4
        %s304 = scalar_lea.vmem %s1, %s303
        %p305 = pneg %p83
        %p306 = pneg %p80
        %p307 = scmp.lt.s32.totalorder %s24, 1
        %s308 = scalar_select %p307, %s24, 1
        %s309 = smul.addr %s308, 8
        %s310 = scalar_lea.vmem %s2, %s309
        %p311 = pneg %p109
        %p312 = pneg %p106
        %s313 = smul.u32 32, %s25
        %p314 = scmp.lt.s32.totalorder %s24, 1
        %s315 = scalar_select %p314, %s24, 1
        %p316 = scmp.lt.s32.totalorder %s313, 31
        %s317 = scalar_select %p316, %s313, 31
        %s318 = smul.addr %s315, 32
        %s319 = sadd.s32 %s317, %s318
        %s320 = smul.addr %s319, 8
        %s321 = scalar_lea.vmem %s3, %s320
        %p322 = pneg %p137
        %p323 = pneg %p134
        %p324 = pneg %p158
        %p325 = pneg %p155
        %p326 = pneg %p179
        %p327 = pneg %p176
        %p328 = pneg %p207
        %p329 = pneg %p204
        %s330 = sand.u32 %s194, 1
        %s331 = scalar_lea.sflag [#allocation3], %s330
        %s332 = sand.u32 %s194, 1
        %s333 = smul.addr %s332, 256
        %s334 = scalar_lea.vmem [#allocation2], %s333
        %s335 = smul.u32 32, %s25
        %p336 = scmp.lt.s32.totalorder %s24, 1
        %s337 = scalar_select %p336, %s24, 1
        %p338 = scmp.lt.s32.totalorder %s335, 31
        %s339 = scalar_select %p338, %s335, 31
        %s340 = smul.addr %s337, 32
        %s341 = sadd.s32 %s339, %s340
        %s342 = smul.addr %s341, 4
        %s343 = scalar_lea.vmem %s0, %s342
        %s344 = smul.u32 32, %s25
        %s345 = smul.u32 32, %s25
        %p346 = scmp.lt.s32.totalorder %s24, 1
        %s347 = scalar_select %p346, %s24, 1
        %p348 = scmp.lt.s32.totalorder %s345, 31
        %s349 = scalar_select %p348, %s345, 31
        %s350 = smul.addr %s347, 32
        %s351 = sadd.s32 %s349, %s350
        %s352 = smul.addr %s351, 4
        %s353 = scalar_lea.vmem %s1, %s352
        %s354 = smul.u32 32, %s25
        %p355 = scmp.lt.s32.totalorder %s24, 1
        %s356 = scalar_select %p355, %s24, 1
        %s357 = smul.addr %s356, 8
        %s358 = scalar_lea.vmem %s2, %s357
        %s359 = smul.u32 32, %s25
        %p360 = scmp.lt.s32.totalorder %s24, 1
        %s361 = scalar_select %p360, %s24, 1
        %p362 = scmp.lt.s32.totalorder %s359, 31
        %s363 = scalar_select %p362, %s359, 31
        %s364 = smul.addr %s361, 32
        %s365 = sadd.s32 %s363, %s364
        %s366 = smul.addr %s365, 8
        %s367 = scalar_lea.vmem %s3, %s366
        %s368 = smul.u32 32, %s25
        %s369 = smul.u32 32, %s25
        %v370 = vld [vmem:[%s353] sm:$0xf]
        %v371 = vld [vmem:[%s353 + $0x4] sm:$0xf]
        %v372 = vld [vmem:[%s353 + $0x8] sm:$0xf]
        %v373 = vld [vmem:[%s353 + $0xc] sm:$0xf]
        %v374 = vld [vmem:[%s353 + $0x10] sm:$0xf]
        %v375 = vld [vmem:[%s353 + $0x14] sm:$0xf]
        %v376 = vld [vmem:[%s353 + $0x18] sm:$0xf]
        %v377 = vld [vmem:[%s353 + $0x1c] sm:$0xf]
        %v378 = vld [vmem:[%s353 + $0x20] sm:$0xf]
        %v379 = vld [vmem:[%s353 + $0x24] sm:$0xf]
        %v380 = vld [vmem:[%s353 + $0x28] sm:$0xf]
        %v381 = vld [vmem:[%s353 + $0x2c] sm:$0xf]
        %v382 = vld [vmem:[%s353 + $0x30] sm:$0xf]
        %v383 = vld [vmem:[%s353 + $0x34] sm:$0xf]
        %v384 = vld [vmem:[%s353 + $0x38] sm:$0xf]
        %v385 = vld [vmem:[%s353 + $0x3c] sm:$0xf]
        %v386 = vld [vmem:[%s353 + $0x40] sm:$0xf]
        %v387 = vld [vmem:[%s353 + $0x44] sm:$0xf]
        %v388 = vld [vmem:[%s353 + $0x48] sm:$0xf]
        %v389 = vld [vmem:[%s353 + $0x4c] sm:$0xf]
        %v390 = vld [vmem:[%s353 + $0x50] sm:$0xf]
        %v391 = vld [vmem:[%s353 + $0x54] sm:$0xf]
        %v392 = vld [vmem:[%s353 + $0x58] sm:$0xf]
        %v393 = vld [vmem:[%s353 + $0x5c] sm:$0xf]
        %v394 = vld [vmem:[%s353 + $0x60] sm:$0xf]
        %v395 = vld [vmem:[%s353 + $0x64] sm:$0xf]
        %v396 = vld [vmem:[%s353 + $0x68] sm:$0xf]
        %v397 = vld [vmem:[%s353 + $0x6c] sm:$0xf]
        %v398 = vld [vmem:[%s353 + $0x70] sm:$0xf]
        %v399 = vld [vmem:[%s353 + $0x74] sm:$0xf]
        %v400 = vld [vmem:[%s353 + $0x78] sm:$0xf]
        %v401 = vld [vmem:[%s353 + $0x7c] sm:$0xf]
        %v402 = vunpack.c.l.bf16 %v370
        %v403 = vunpack.c.l.bf16 %v371
        %v404 = vunpack.c.l.bf16 %v372
        %v405 = vunpack.c.l.bf16 %v373
        %v406 = vunpack.c.l.bf16 %v374
        %v407 = vunpack.c.l.bf16 %v375
        %v408 = vunpack.c.l.bf16 %v376
        %v409 = vunpack.c.l.bf16 %v377
        %v410 = vunpack.c.l.bf16 %v378
        %v411 = vunpack.c.l.bf16 %v379
        %v412 = vunpack.c.l.bf16 %v380
        %v413 = vunpack.c.l.bf16 %v381
        %v414 = vunpack.c.l.bf16 %v382
        %v415 = vunpack.c.l.bf16 %v383
        %v416 = vunpack.c.l.bf16 %v384
        %v417 = vunpack.c.l.bf16 %v385
        %v418 = vunpack.c.l.bf16 %v386
        %v419 = vunpack.c.l.bf16 %v387
        %v420 = vunpack.c.l.bf16 %v388
        %v421 = vunpack.c.l.bf16 %v389
        %v422 = vunpack.c.l.bf16 %v390
        %v423 = vunpack.c.l.bf16 %v391
        %v424 = vunpack.c.l.bf16 %v392
        %v425 = vunpack.c.l.bf16 %v393
        %v426 = vunpack.c.l.bf16 %v394
        %v427 = vunpack.c.l.bf16 %v395
        %v428 = vunpack.c.l.bf16 %v396
        %v429 = vunpack.c.l.bf16 %v397
        %v430 = vunpack.c.l.bf16 %v398
        %v431 = vunpack.c.l.bf16 %v399
        %v432 = vunpack.c.l.bf16 %v400
        %v433 = vunpack.c.l.bf16 %v401
        %v434 = vld [vmem:[%s358] sm:$0x1]
        %v435 = vperm.slane %v434, 0
        %v436 = vmul.f32 %v402, %v435
        %v437 = vmul.f32 %v403, %v435
        %v438 = vmul.f32 %v404, %v435
        %v439 = vmul.f32 %v405, %v435
        %v440 = vmul.f32 %v406, %v435
        %v441 = vmul.f32 %v407, %v435
        %v442 = vmul.f32 %v408, %v435
        %v443 = vmul.f32 %v409, %v435
        %v444 = vmul.f32 %v410, %v435
        %v445 = vmul.f32 %v411, %v435
        %v446 = vmul.f32 %v412, %v435
        %v447 = vmul.f32 %v413, %v435
        %v448 = vmul.f32 %v414, %v435
        %v449 = vmul.f32 %v415, %v435
        %v450 = vmul.f32 %v416, %v435
        %v451 = vmul.f32 %v417, %v435
        %v452 = vmul.f32 %v418, %v435
        %v453 = vmul.f32 %v419, %v435
        %v454 = vmul.f32 %v420, %v435
        %v455 = vmul.f32 %v421, %v435
        %v456 = vmul.f32 %v422, %v435
        %v457 = vmul.f32 %v423, %v435
        %v458 = vmul.f32 %v424, %v435
        %v459 = vmul.f32 %v425, %v435
        %v460 = vmul.f32 %v426, %v435
        %v461 = vmul.f32 %v427, %v435
        %v462 = vmul.f32 %v428, %v435
        %v463 = vmul.f32 %v429, %v435
        %v464 = vmul.f32 %v430, %v435
        %v465 = vmul.f32 %v431, %v435
        %v466 = vmul.f32 %v432, %v435
        %v467 = vmul.f32 %v433, %v435
        %v468 = vld [vmem:[%s367] sm:$0xff]
        %v469 = vld [vmem:[%s367 + $0x8] sm:$0xff]
        %v470 = vld [vmem:[%s367 + $0x10] sm:$0xff]
        %v471 = vld [vmem:[%s367 + $0x18] sm:$0xff]
        %v472 = vld [vmem:[%s367 + $0x20] sm:$0xff]
        %v473 = vld [vmem:[%s367 + $0x28] sm:$0xff]
        %v474 = vld [vmem:[%s367 + $0x30] sm:$0xff]
        %v475 = vld [vmem:[%s367 + $0x38] sm:$0xff]
        %v476 = vld [vmem:[%s367 + $0x40] sm:$0xff]
        %v477 = vld [vmem:[%s367 + $0x48] sm:$0xff]
        %v478 = vld [vmem:[%s367 + $0x50] sm:$0xff]
        %v479 = vld [vmem:[%s367 + $0x58] sm:$0xff]
        %v480 = vld [vmem:[%s367 + $0x60] sm:$0xff]
        %v481 = vld [vmem:[%s367 + $0x68] sm:$0xff]
        %v482 = vld [vmem:[%s367 + $0x70] sm:$0xff]
        %v483 = vld [vmem:[%s367 + $0x78] sm:$0xff]
        %v484 = vld [vmem:[%s367 + $0x80] sm:$0xff]
        %v485 = vld [vmem:[%s367 + $0x88] sm:$0xff]
        %v486 = vld [vmem:[%s367 + $0x90] sm:$0xff]
        %v487 = vld [vmem:[%s367 + $0x98] sm:$0xff]
        %v488 = vld [vmem:[%s367 + $0xa0] sm:$0xff]
        %v489 = vld [vmem:[%s367 + $0xa8] sm:$0xff]
        %v490 = vld [vmem:[%s367 + $0xb0] sm:$0xff]
        %v491 = vld [vmem:[%s367 + $0xb8] sm:$0xff]
        %v492 = vld [vmem:[%s367 + $0xc0] sm:$0xff]
        %v493 = vld [vmem:[%s367 + $0xc8] sm:$0xff]
        %v494 = vld [vmem:[%s367 + $0xd0] sm:$0xff]
        %v495 = vld [vmem:[%s367 + $0xd8] sm:$0xff]
        %v496 = vld [vmem:[%s367 + $0xe0] sm:$0xff]
        %v497 = vld [vmem:[%s367 + $0xe8] sm:$0xff]
        %v498 = vld [vmem:[%s367 + $0xf0] sm:$0xff]
        %v499 = vld [vmem:[%s367 + $0xf8] sm:$0xff]
        %501 = vset.pattern.permute.xlu0 0
        %502 = vperm.xlu0 %501, %v468
        %v503 = vpop.permute.xlu0 %502
        %506 = vset.pattern.permute.xlu0 0
        %507 = vperm.xlu0 %506, %v469
        %v508 = vpop.permute.xlu0 %507
        %511 = vset.pattern.permute.xlu0 0
        %512 = vperm.xlu0 %511, %v470
        %v513 = vpop.permute.xlu0 %512
        %516 = vset.pattern.permute.xlu0 0
        %517 = vperm.xlu0 %516, %v471
        %v518 = vpop.permute.xlu0 %517
        %521 = vset.pattern.permute.xlu0 0
        %522 = vperm.xlu0 %521, %v472
        %v523 = vpop.permute.xlu0 %522
        %526 = vset.pattern.permute.xlu0 0
        %527 = vperm.xlu0 %526, %v473
        %v528 = vpop.permute.xlu0 %527
        %531 = vset.pattern.permute.xlu0 0
        %532 = vperm.xlu0 %531, %v474
        %v533 = vpop.permute.xlu0 %532
        %536 = vset.pattern.permute.xlu0 0
        %537 = vperm.xlu0 %536, %v475
        %v538 = vpop.permute.xlu0 %537
        %541 = vset.pattern.permute.xlu0 0
        %542 = vperm.xlu0 %541, %v476
        %v543 = vpop.permute.xlu0 %542
        %546 = vset.pattern.permute.xlu0 0
        %547 = vperm.xlu0 %546, %v477
        %v548 = vpop.permute.xlu0 %547
        %551 = vset.pattern.permute.xlu0 0
        %552 = vperm.xlu0 %551, %v478
        %v553 = vpop.permute.xlu0 %552
        %556 = vset.pattern.permute.xlu0 0
        %557 = vperm.xlu0 %556, %v479
        %v558 = vpop.permute.xlu0 %557
        %561 = vset.pattern.permute.xlu0 0
        %562 = vperm.xlu0 %561, %v480
        %v563 = vpop.permute.xlu0 %562
        %566 = vset.pattern.permute.xlu0 0
        %567 = vperm.xlu0 %566, %v481
        %v568 = vpop.permute.xlu0 %567
        %571 = vset.pattern.permute.xlu0 0
        %572 = vperm.xlu0 %571, %v482
        %v573 = vpop.permute.xlu0 %572
        %576 = vset.pattern.permute.xlu0 0
        %577 = vperm.xlu0 %576, %v483
        %v578 = vpop.permute.xlu0 %577
        %581 = vset.pattern.permute.xlu0 0
        %582 = vperm.xlu0 %581, %v484
        %v583 = vpop.permute.xlu0 %582
        %586 = vset.pattern.permute.xlu0 0
        %587 = vperm.xlu0 %586, %v485
        %v588 = vpop.permute.xlu0 %587
        %591 = vset.pattern.permute.xlu0 0
        %592 = vperm.xlu0 %591, %v486
        %v593 = vpop.permute.xlu0 %592
        %596 = vset.pattern.permute.xlu0 0
        %597 = vperm.xlu0 %596, %v487
        %v598 = vpop.permute.xlu0 %597
        %601 = vset.pattern.permute.xlu0 0
        %602 = vperm.xlu0 %601, %v488
        %v603 = vpop.permute.xlu0 %602
        %606 = vset.pattern.permute.xlu0 0
        %607 = vperm.xlu0 %606, %v489
        %v608 = vpop.permute.xlu0 %607
        %611 = vset.pattern.permute.xlu0 0
        %612 = vperm.xlu0 %611, %v490
        %v613 = vpop.permute.xlu0 %612
        %616 = vset.pattern.permute.xlu0 0
        %617 = vperm.xlu0 %616, %v491
        %v618 = vpop.permute.xlu0 %617
        %621 = vset.pattern.permute.xlu0 0
        %622 = vperm.xlu0 %621, %v492
        %v623 = vpop.permute.xlu0 %622
        %626 = vset.pattern.permute.xlu0 0
        %627 = vperm.xlu0 %626, %v493
        %v628 = vpop.permute.xlu0 %627
        %631 = vset.pattern.permute.xlu0 0
        %632 = vperm.xlu0 %631, %v494
        %v633 = vpop.permute.xlu0 %632
        %636 = vset.pattern.permute.xlu0 0
        %637 = vperm.xlu0 %636, %v495
        %v638 = vpop.permute.xlu0 %637
        %641 = vset.pattern.permute.xlu0 0
        %642 = vperm.xlu0 %641, %v496
        %v643 = vpop.permute.xlu0 %642
        %646 = vset.pattern.permute.xlu0 0
        %647 = vperm.xlu0 %646, %v497
        %v648 = vpop.permute.xlu0 %647
        %651 = vset.pattern.permute.xlu0 0
        %652 = vperm.xlu0 %651, %v498
        %v653 = vpop.permute.xlu0 %652
        %656 = vset.pattern.permute.xlu0 0
        %657 = vperm.xlu0 %656, %v499
        %v658 = vpop.permute.xlu0 %657
        %v660 = vmul.f32 %v436, %v503
        %v661 = vmul.f32 %v437, %v508
        %v662 = vmul.f32 %v438, %v513
        %v663 = vmul.f32 %v439, %v518
        %v664 = vmul.f32 %v440, %v523
        %v665 = vmul.f32 %v441, %v528
        %v666 = vmul.f32 %v442, %v533
        %v667 = vmul.f32 %v443, %v538
        %v668 = vmul.f32 %v444, %v543
        %v669 = vmul.f32 %v445, %v548
        %v670 = vmul.f32 %v446, %v553
        %v671 = vmul.f32 %v447, %v558
        %v672 = vmul.f32 %v448, %v563
        %v673 = vmul.f32 %v449, %v568
        %v674 = vmul.f32 %v450, %v573
        %v675 = vmul.f32 %v451, %v578
        %v676 = vmul.f32 %v452, %v583
        %v677 = vmul.f32 %v453, %v588
        %v678 = vmul.f32 %v454, %v593
        %v679 = vmul.f32 %v455, %v598
        %v680 = vmul.f32 %v456, %v603
        %v681 = vmul.f32 %v457, %v608
        %v682 = vmul.f32 %v458, %v613
        %v683 = vmul.f32 %v459, %v618
        %v684 = vmul.f32 %v460, %v623
        %v685 = vmul.f32 %v461, %v628
        %v686 = vmul.f32 %v462, %v633
        %v687 = vmul.f32 %v463, %v638
        %v688 = vmul.f32 %v464, %v643
        %v689 = vmul.f32 %v465, %v648
        %v690 = vmul.f32 %v466, %v653
        %v691 = vmul.f32 %v467, %v658
        %v692 = vld [vmem:[%s343] sm:$0xf]
        %v693 = vld [vmem:[%s343 + $0x4] sm:$0xf]
        %v694 = vld [vmem:[%s343 + $0x8] sm:$0xf]
        %v695 = vld [vmem:[%s343 + $0xc] sm:$0xf]
        %v696 = vld [vmem:[%s343 + $0x10] sm:$0xf]
        %v697 = vld [vmem:[%s343 + $0x14] sm:$0xf]
        %v698 = vld [vmem:[%s343 + $0x18] sm:$0xf]
        %v699 = vld [vmem:[%s343 + $0x1c] sm:$0xf]
        %v700 = vld [vmem:[%s343 + $0x20] sm:$0xf]
        %v701 = vld [vmem:[%s343 + $0x24] sm:$0xf]
        %v702 = vld [vmem:[%s343 + $0x28] sm:$0xf]
        %v703 = vld [vmem:[%s343 + $0x2c] sm:$0xf]
        %v704 = vld [vmem:[%s343 + $0x30] sm:$0xf]
        %v705 = vld [vmem:[%s343 + $0x34] sm:$0xf]
        %v706 = vld [vmem:[%s343 + $0x38] sm:$0xf]
        %v707 = vld [vmem:[%s343 + $0x3c] sm:$0xf]
        %v708 = vld [vmem:[%s343 + $0x40] sm:$0xf]
        %v709 = vld [vmem:[%s343 + $0x44] sm:$0xf]
        %v710 = vld [vmem:[%s343 + $0x48] sm:$0xf]
        %v711 = vld [vmem:[%s343 + $0x4c] sm:$0xf]
        %v712 = vld [vmem:[%s343 + $0x50] sm:$0xf]
        %v713 = vld [vmem:[%s343 + $0x54] sm:$0xf]
        %v714 = vld [vmem:[%s343 + $0x58] sm:$0xf]
        %v715 = vld [vmem:[%s343 + $0x5c] sm:$0xf]
        %v716 = vld [vmem:[%s343 + $0x60] sm:$0xf]
        %v717 = vld [vmem:[%s343 + $0x64] sm:$0xf]
        %v718 = vld [vmem:[%s343 + $0x68] sm:$0xf]
        %v719 = vld [vmem:[%s343 + $0x6c] sm:$0xf]
        %v720 = vld [vmem:[%s343 + $0x70] sm:$0xf]
        %v721 = vld [vmem:[%s343 + $0x74] sm:$0xf]
        %v722 = vld [vmem:[%s343 + $0x78] sm:$0xf]
        %v723 = vld [vmem:[%s343 + $0x7c] sm:$0xf]
        %v724 = vpack.c.bf16 %v660, %v660
        %v725 = vpack.c.bf16 %v661, %v661
        %v726 = vpack.c.bf16 %v662, %v662
        %v727 = vpack.c.bf16 %v663, %v663
        %v728 = vpack.c.bf16 %v664, %v664
        %v729 = vpack.c.bf16 %v665, %v665
        %v730 = vpack.c.bf16 %v666, %v666
        %v731 = vpack.c.bf16 %v667, %v667
        %v732 = vpack.c.bf16 %v668, %v668
        %v733 = vpack.c.bf16 %v669, %v669
        %v734 = vpack.c.bf16 %v670, %v670
        %v735 = vpack.c.bf16 %v671, %v671
        %v736 = vpack.c.bf16 %v672, %v672
        %v737 = vpack.c.bf16 %v673, %v673
        %v738 = vpack.c.bf16 %v674, %v674
        %v739 = vpack.c.bf16 %v675, %v675
        %v740 = vpack.c.bf16 %v676, %v676
        %v741 = vpack.c.bf16 %v677, %v677
        %v742 = vpack.c.bf16 %v678, %v678
        %v743 = vpack.c.bf16 %v679, %v679
        %v744 = vpack.c.bf16 %v680, %v680
        %v745 = vpack.c.bf16 %v681, %v681
        %v746 = vpack.c.bf16 %v682, %v682
        %v747 = vpack.c.bf16 %v683, %v683
        %v748 = vpack.c.bf16 %v684, %v684
        %v749 = vpack.c.bf16 %v685, %v685
        %v750 = vpack.c.bf16 %v686, %v686
        %v751 = vpack.c.bf16 %v687, %v687
        %v752 = vpack.c.bf16 %v688, %v688
        %v753 = vpack.c.bf16 %v689, %v689
        %v754 = vpack.c.bf16 %v690, %v690
        %v755 = vpack.c.bf16 %v691, %v691
        %v788 = vunpack.c.l.b16 %v692
        %v789 = vunpack.c.l.b16 %v693
        %v790 = vunpack.c.l.b16 %v694
        %v791 = vunpack.c.l.b16 %v695
        %v792 = vunpack.c.l.b16 %v696
        %v793 = vunpack.c.l.b16 %v697
        %v794 = vunpack.c.l.b16 %v698
        %v795 = vunpack.c.l.b16 %v699
        %v796 = vunpack.c.l.b16 %v700
        %v797 = vunpack.c.l.b16 %v701
        %v798 = vunpack.c.l.b16 %v702
        %v799 = vunpack.c.l.b16 %v703
        %v800 = vunpack.c.l.b16 %v704
        %v801 = vunpack.c.l.b16 %v705
        %v802 = vunpack.c.l.b16 %v706
        %v803 = vunpack.c.l.b16 %v707
        %v804 = vunpack.c.l.b16 %v708
        %v805 = vunpack.c.l.b16 %v709
        %v806 = vunpack.c.l.b16 %v710
        %v807 = vunpack.c.l.b16 %v711
        %v808 = vunpack.c.l.b16 %v712
        %v809 = vunpack.c.l.b16 %v713
        %v810 = vunpack.c.l.b16 %v714
        %v811 = vunpack.c.l.b16 %v715
        %v812 = vunpack.c.l.b16 %v716
        %v813 = vunpack.c.l.b16 %v717
        %v814 = vunpack.c.l.b16 %v718
        %v815 = vunpack.c.l.b16 %v719
        %v816 = vunpack.c.l.b16 %v720
        %v817 = vunpack.c.l.b16 %v721
        %v818 = vunpack.c.l.b16 %v722
        %v819 = vunpack.c.l.b16 %v723
        %v820 = vpack.c.b16 %v789, %v788
        %v821 = vpack.c.b16 %v791, %v790
        %v822 = vpack.c.b16 %v793, %v792
        %v823 = vpack.c.b16 %v795, %v794
        %v824 = vpack.c.b16 %v797, %v796
        %v825 = vpack.c.b16 %v799, %v798
        %v826 = vpack.c.b16 %v801, %v800
        %v827 = vpack.c.b16 %v803, %v802
        %v828 = vpack.c.b16 %v805, %v804
        %v829 = vpack.c.b16 %v807, %v806
        %v830 = vpack.c.b16 %v809, %v808
        %v831 = vpack.c.b16 %v811, %v810
        %v832 = vpack.c.b16 %v813, %v812
        %v833 = vpack.c.b16 %v815, %v814
        %v834 = vpack.c.b16 %v817, %v816
        %v835 = vpack.c.b16 %v819, %v818
        %v884 = vunpack.c.l.b16 %v724
        %v885 = vunpack.c.l.b16 %v725
        %v886 = vunpack.c.l.b16 %v726
        %v887 = vunpack.c.l.b16 %v727
        %v888 = vunpack.c.l.b16 %v728
        %v889 = vunpack.c.l.b16 %v729
        %v890 = vunpack.c.l.b16 %v730
        %v891 = vunpack.c.l.b16 %v731
        %v892 = vunpack.c.l.b16 %v732
        %v893 = vunpack.c.l.b16 %v733
        %v894 = vunpack.c.l.b16 %v734
        %v895 = vunpack.c.l.b16 %v735
        %v896 = vunpack.c.l.b16 %v736
        %v897 = vunpack.c.l.b16 %v737
        %v898 = vunpack.c.l.b16 %v738
        %v899 = vunpack.c.l.b16 %v739
        %v900 = vunpack.c.l.b16 %v740
        %v901 = vunpack.c.l.b16 %v741
        %v902 = vunpack.c.l.b16 %v742
        %v903 = vunpack.c.l.b16 %v743
        %v904 = vunpack.c.l.b16 %v744
        %v905 = vunpack.c.l.b16 %v745
        %v906 = vunpack.c.l.b16 %v746
        %v907 = vunpack.c.l.b16 %v747
        %v908 = vunpack.c.l.b16 %v748
        %v909 = vunpack.c.l.b16 %v749
        %v910 = vunpack.c.l.b16 %v750
        %v911 = vunpack.c.l.b16 %v751
        %v912 = vunpack.c.l.b16 %v752
        %v913 = vunpack.c.l.b16 %v753
        %v914 = vunpack.c.l.b16 %v754
        %v915 = vunpack.c.l.b16 %v755
        %v916 = vpack.c.b16 %v885, %v884
        %v917 = vpack.c.b16 %v887, %v886
        %v918 = vpack.c.b16 %v889, %v888
        %v919 = vpack.c.b16 %v891, %v890
        %v920 = vpack.c.b16 %v893, %v892
        %v921 = vpack.c.b16 %v895, %v894
        %v922 = vpack.c.b16 %v897, %v896
        %v923 = vpack.c.b16 %v899, %v898
        %v924 = vpack.c.b16 %v901, %v900
        %v925 = vpack.c.b16 %v903, %v902
        %v926 = vpack.c.b16 %v905, %v904
        %v927 = vpack.c.b16 %v907, %v906
        %v928 = vpack.c.b16 %v909, %v908
        %v929 = vpack.c.b16 %v911, %v910
        %v930 = vpack.c.b16 %v913, %v912
        %v931 = vpack.c.b16 %v915, %v914
        %v948 = vld [vmem:[%s4] sm:$0xf]
        %v949 = vld [vmem:[%s4 + $0x4] sm:$0xf]
        %v950 = vld [vmem:[%s4 + $0x8] sm:$0xf]
        %v951 = vld [vmem:[%s4 + $0xc] sm:$0xf]
        %v952 = vld [vmem:[%s4 + $0x10] sm:$0xf]
        %v953 = vld [vmem:[%s4 + $0x14] sm:$0xf]
        %v954 = vld [vmem:[%s4 + $0x18] sm:$0xf]
        %v955 = vld [vmem:[%s4 + $0x1c] sm:$0xf]
        %v956 = vld [vmem:[%s4 + $0x20] sm:$0xf]
        %v957 = vld [vmem:[%s4 + $0x24] sm:$0xf]
        %v958 = vld [vmem:[%s4 + $0x28] sm:$0xf]
        %v959 = vld [vmem:[%s4 + $0x2c] sm:$0xf]
        %v960 = vld [vmem:[%s4 + $0x30] sm:$0xf]
        %v961 = vld [vmem:[%s4 + $0x34] sm:$0xf]
        %v962 = vld [vmem:[%s4 + $0x38] sm:$0xf]
        %v963 = vld [vmem:[%s4 + $0x3c] sm:$0xf]
        %v964 = vld [vmem:[%s4 + $0x40] sm:$0xf]
        %v965 = vld [vmem:[%s4 + $0x44] sm:$0xf]
        %v966 = vld [vmem:[%s4 + $0x48] sm:$0xf]
        %v967 = vld [vmem:[%s4 + $0x4c] sm:$0xf]
        %v968 = vld [vmem:[%s4 + $0x50] sm:$0xf]
        %v969 = vld [vmem:[%s4 + $0x54] sm:$0xf]
        %v970 = vld [vmem:[%s4 + $0x58] sm:$0xf]
        %v971 = vld [vmem:[%s4 + $0x5c] sm:$0xf]
        %v972 = vld [vmem:[%s4 + $0x60] sm:$0xf]
        %v973 = vld [vmem:[%s4 + $0x64] sm:$0xf]
        %v974 = vld [vmem:[%s4 + $0x68] sm:$0xf]
        %v975 = vld [vmem:[%s4 + $0x6c] sm:$0xf]
        %v976 = vld [vmem:[%s4 + $0x70] sm:$0xf]
        %v977 = vld [vmem:[%s4 + $0x74] sm:$0xf]
        %v978 = vld [vmem:[%s4 + $0x78] sm:$0xf]
        %v979 = vld [vmem:[%s4 + $0x7c] sm:$0xf]
        %v980 = vld [vmem:[%s5] sm:$0x1]
        %v982 = vperm.slane %v980, 0
        %v1016 = vunpack.c.l.b16 %v948
        %v1017 = vunpack.c.l.b16 %v949
        %v1018 = vunpack.c.l.b16 %v950
        %v1019 = vunpack.c.l.b16 %v951
        %v1020 = vunpack.c.l.b16 %v952
        %v1021 = vunpack.c.l.b16 %v953
        %v1022 = vunpack.c.l.b16 %v954
        %v1023 = vunpack.c.l.b16 %v955
        %v1024 = vunpack.c.l.b16 %v956
        %v1025 = vunpack.c.l.b16 %v957
        %v1026 = vunpack.c.l.b16 %v958
        %v1027 = vunpack.c.l.b16 %v959
        %v1028 = vunpack.c.l.b16 %v960
        %v1029 = vunpack.c.l.b16 %v961
        %v1030 = vunpack.c.l.b16 %v962
        %v1031 = vunpack.c.l.b16 %v963
        %v1032 = vunpack.c.l.b16 %v964
        %v1033 = vunpack.c.l.b16 %v965
        %v1034 = vunpack.c.l.b16 %v966
        %v1035 = vunpack.c.l.b16 %v967
        %v1036 = vunpack.c.l.b16 %v968
        %v1037 = vunpack.c.l.b16 %v969
        %v1038 = vunpack.c.l.b16 %v970
        %v1039 = vunpack.c.l.b16 %v971
        %v1040 = vunpack.c.l.b16 %v972
        %v1041 = vunpack.c.l.b16 %v973
        %v1042 = vunpack.c.l.b16 %v974
        %v1043 = vunpack.c.l.b16 %v975
        %v1044 = vunpack.c.l.b16 %v976
        %v1045 = vunpack.c.l.b16 %v977
        %v1046 = vunpack.c.l.b16 %v978
        %v1047 = vunpack.c.l.b16 %v979
        %v1048 = vpack.c.b16 %v1017, %v1016
        %v1049 = vpack.c.b16 %v1019, %v1018
        %v1050 = vpack.c.b16 %v1021, %v1020
        %v1051 = vpack.c.b16 %v1023, %v1022
        %v1052 = vpack.c.b16 %v1025, %v1024
        %v1053 = vpack.c.b16 %v1027, %v1026
        %v1054 = vpack.c.b16 %v1029, %v1028
        %v1055 = vpack.c.b16 %v1031, %v1030
        %v1056 = vpack.c.b16 %v1033, %v1032
        %v1057 = vpack.c.b16 %v1035, %v1034
        %v1058 = vpack.c.b16 %v1037, %v1036
        %v1059 = vpack.c.b16 %v1039, %v1038
        %v1060 = vpack.c.b16 %v1041, %v1040
        %v1061 = vpack.c.b16 %v1043, %v1042
        %v1062 = vpack.c.b16 %v1045, %v1044
        %v1063 = vpack.c.b16 %v1047, %v1046
        %1080 = vmatpush.bf16.msra.mxu0 %v1055
        %1081 = vmatpush.bf16.msra.mxu0 %v1054
        %1082 = vmatpush.bf16.msra.mxu0 %v1053
        %1083 = vmatpush.bf16.msra.mxu0 %v1052
        %1084 = vmatpush.bf16.msra.mxu0 %v1051
        %1085 = vmatpush.bf16.msra.mxu0 %v1050
        %1086 = vmatpush.bf16.msra.mxu0 %v1049
        %1087 = vmatpush.bf16.msra.mxu0 %v1048
        %1088 = vmatmul.bf16.gmra.mxu0 %v820
        %v1089 = vpop.f32.mrf.mxu0
        %v1090 = vadd.f32 %v982, %v1089
        %v1091 = vpop.f32.mrf.mxu0
        %v1092 = vadd.f32 %v982, %v1091
        %1093 = vmatmul.bf16.gmra.mxu0 %v821
        %v1094 = vpop.f32.mrf.mxu0
        %v1095 = vadd.f32 %v982, %v1094
        %v1096 = vpop.f32.mrf.mxu0
        %v1097 = vadd.f32 %v982, %v1096
        %1098 = vmatmul.bf16.gmra.mxu0 %v822
        %v1099 = vpop.f32.mrf.mxu0
        %v1100 = vadd.f32 %v982, %v1099
        %v1101 = vpop.f32.mrf.mxu0
        %v1102 = vadd.f32 %v982, %v1101
        %1103 = vmatmul.bf16.gmra.mxu0 %v823
        %v1104 = vpop.f32.mrf.mxu0
        %v1105 = vadd.f32 %v982, %v1104
        %v1106 = vpop.f32.mrf.mxu0
        %v1107 = vadd.f32 %v982, %v1106
        %1108 = vmatmul.bf16.gmra.mxu0 %v824
        %v1109 = vpop.f32.mrf.mxu0
        %v1110 = vadd.f32 %v982, %v1109
        %v1111 = vpop.f32.mrf.mxu0
        %v1112 = vadd.f32 %v982, %v1111
        %1113 = vmatmul.bf16.gmra.mxu0 %v825
        %v1114 = vpop.f32.mrf.mxu0
        %v1115 = vadd.f32 %v982, %v1114
        %v1116 = vpop.f32.mrf.mxu0
        %v1117 = vadd.f32 %v982, %v1116
        %1118 = vmatmul.bf16.gmra.mxu0 %v826
        %v1119 = vpop.f32.mrf.mxu0
        %v1120 = vadd.f32 %v982, %v1119
        %v1121 = vpop.f32.mrf.mxu0
        %v1122 = vadd.f32 %v982, %v1121
        %1123 = vmatmul.bf16.gmra.mxu0 %v827
        %v1124 = vpop.f32.mrf.mxu0
        %v1125 = vadd.f32 %v982, %v1124
        %v1126 = vpop.f32.mrf.mxu0
        %v1127 = vadd.f32 %v982, %v1126
        %1128 = vmatmul.bf16.gmra.mxu0 %v828
        %v1129 = vpop.f32.mrf.mxu0
        %v1130 = vadd.f32 %v982, %v1129
        %v1131 = vpop.f32.mrf.mxu0
        %v1132 = vadd.f32 %v982, %v1131
        %1133 = vmatmul.bf16.gmra.mxu0 %v829
        %v1134 = vpop.f32.mrf.mxu0
        %v1135 = vadd.f32 %v982, %v1134
        %v1136 = vpop.f32.mrf.mxu0
        %v1137 = vadd.f32 %v982, %v1136
        %1138 = vmatmul.bf16.gmra.mxu0 %v830
        %v1139 = vpop.f32.mrf.mxu0
        %v1140 = vadd.f32 %v982, %v1139
        %v1141 = vpop.f32.mrf.mxu0
        %v1142 = vadd.f32 %v982, %v1141
        %1143 = vmatmul.bf16.gmra.mxu0 %v831
        %v1144 = vpop.f32.mrf.mxu0
        %v1145 = vadd.f32 %v982, %v1144
        %v1146 = vpop.f32.mrf.mxu0
        %v1147 = vadd.f32 %v982, %v1146
        %1148 = vmatmul.bf16.gmra.mxu0 %v832
        %v1149 = vpop.f32.mrf.mxu0
        %v1150 = vadd.f32 %v982, %v1149
        %v1151 = vpop.f32.mrf.mxu0
        %v1152 = vadd.f32 %v982, %v1151
        %1153 = vmatmul.bf16.gmra.mxu0 %v833
        %v1154 = vpop.f32.mrf.mxu0
        %v1155 = vadd.f32 %v982, %v1154
        %v1156 = vpop.f32.mrf.mxu0
        %v1157 = vadd.f32 %v982, %v1156
        %1158 = vmatmul.bf16.gmra.mxu0 %v834
        %v1159 = vpop.f32.mrf.mxu0
        %v1160 = vadd.f32 %v982, %v1159
        %v1161 = vpop.f32.mrf.mxu0
        %v1162 = vadd.f32 %v982, %v1161
        %1163 = vmatmul.bf16.gmra.mxu0 %v835
        %v1164 = vpop.f32.mrf.mxu0
        %v1165 = vadd.f32 %v982, %v1164
        %v1166 = vpop.f32.mrf.mxu0
        %v1167 = vadd.f32 %v982, %v1166
        %1168 = vdwg.mxu0
        %1169 = vmatpush.bf16.msra.mxu0 %v1063
        %1170 = vmatpush.bf16.msra.mxu0 %v1062
        %1171 = vmatpush.bf16.msra.mxu0 %v1061
        %1172 = vmatpush.bf16.msra.mxu0 %v1060
        %1173 = vmatpush.bf16.msra.mxu0 %v1059
        %1174 = vmatpush.bf16.msra.mxu0 %v1058
        %1175 = vmatpush.bf16.msra.mxu0 %v1057
        %1176 = vmatpush.bf16.msra.mxu0 %v1056
        %1177 = vmatmul.bf16.gmra.mxu0 %v916
        %v1178 = vpop.f32.mrf.mxu0
        %v1179 = vadd.f32 %v1090, %v1178
        %v1180 = vpop.f32.mrf.mxu0
        %v1181 = vadd.f32 %v1092, %v1180
        %1182 = vmatmul.bf16.gmra.mxu0 %v917
        %v1183 = vpop.f32.mrf.mxu0
        %v1184 = vadd.f32 %v1095, %v1183
        %v1185 = vpop.f32.mrf.mxu0
        %v1186 = vadd.f32 %v1097, %v1185
        %1187 = vmatmul.bf16.gmra.mxu0 %v918
        %v1188 = vpop.f32.mrf.mxu0
        %v1189 = vadd.f32 %v1100, %v1188
        %v1190 = vpop.f32.mrf.mxu0
        %v1191 = vadd.f32 %v1102, %v1190
        %1192 = vmatmul.bf16.gmra.mxu0 %v919
        %v1193 = vpop.f32.mrf.mxu0
        %v1194 = vadd.f32 %v1105, %v1193
        %v1195 = vpop.f32.mrf.mxu0
        %v1196 = vadd.f32 %v1107, %v1195
        %1197 = vmatmul.bf16.gmra.mxu0 %v920
        %v1198 = vpop.f32.mrf.mxu0
        %v1199 = vadd.f32 %v1110, %v1198
        %v1200 = vpop.f32.mrf.mxu0
        %v1201 = vadd.f32 %v1112, %v1200
        %1202 = vmatmul.bf16.gmra.mxu0 %v921
        %v1203 = vpop.f32.mrf.mxu0
        %v1204 = vadd.f32 %v1115, %v1203
        %v1205 = vpop.f32.mrf.mxu0
        %v1206 = vadd.f32 %v1117, %v1205
        %1207 = vmatmul.bf16.gmra.mxu0 %v922
        %v1208 = vpop.f32.mrf.mxu0
        %v1209 = vadd.f32 %v1120, %v1208
        %v1210 = vpop.f32.mrf.mxu0
        %v1211 = vadd.f32 %v1122, %v1210
        %1212 = vmatmul.bf16.gmra.mxu0 %v923
        %v1213 = vpop.f32.mrf.mxu0
        %v1214 = vadd.f32 %v1125, %v1213
        %v1215 = vpop.f32.mrf.mxu0
        %v1216 = vadd.f32 %v1127, %v1215
        %1217 = vmatmul.bf16.gmra.mxu0 %v924
        %v1218 = vpop.f32.mrf.mxu0
        %v1219 = vadd.f32 %v1130, %v1218
        %v1220 = vpop.f32.mrf.mxu0
        %v1221 = vadd.f32 %v1132, %v1220
        %1222 = vmatmul.bf16.gmra.mxu0 %v925
        %v1223 = vpop.f32.mrf.mxu0
        %v1224 = vadd.f32 %v1135, %v1223
        %v1225 = vpop.f32.mrf.mxu0
        %v1226 = vadd.f32 %v1137, %v1225
        %1227 = vmatmul.bf16.gmra.mxu0 %v926
        %v1228 = vpop.f32.mrf.mxu0
        %v1229 = vadd.f32 %v1140, %v1228
        %v1230 = vpop.f32.mrf.mxu0
        %v1231 = vadd.f32 %v1142, %v1230
        %1232 = vmatmul.bf16.gmra.mxu0 %v927
        %v1233 = vpop.f32.mrf.mxu0
        %v1234 = vadd.f32 %v1145, %v1233
        %v1235 = vpop.f32.mrf.mxu0
        %v1236 = vadd.f32 %v1147, %v1235
        %1237 = vmatmul.bf16.gmra.mxu0 %v928
        %v1238 = vpop.f32.mrf.mxu0
        %v1239 = vadd.f32 %v1150, %v1238
        %v1240 = vpop.f32.mrf.mxu0
        %v1241 = vadd.f32 %v1152, %v1240
        %1242 = vmatmul.bf16.gmra.mxu0 %v929
        %v1243 = vpop.f32.mrf.mxu0
        %v1244 = vadd.f32 %v1155, %v1243
        %v1245 = vpop.f32.mrf.mxu0
        %v1246 = vadd.f32 %v1157, %v1245
        %1247 = vmatmul.bf16.gmra.mxu0 %v930
        %v1248 = vpop.f32.mrf.mxu0
        %v1249 = vadd.f32 %v1160, %v1248
        %v1250 = vpop.f32.mrf.mxu0
        %v1251 = vadd.f32 %v1162, %v1250
        %1252 = vmatmul.bf16.gmra.mxu0 %v931
        %v1253 = vpop.f32.mrf.mxu0
        %v1254 = vadd.f32 %v1165, %v1253
        %v1255 = vpop.f32.mrf.mxu0
        %v1256 = vadd.f32 %v1167, %v1255
        %1257 = vdwg.mxu0
        %v1258 = vmax.f32 %v1179, 0.0
        %v1259 = vmax.f32 %v1181, 0.0
        %v1260 = vmax.f32 %v1184, 0.0
        %v1261 = vmax.f32 %v1186, 0.0
        %v1262 = vmax.f32 %v1189, 0.0
        %v1263 = vmax.f32 %v1191, 0.0
        %v1264 = vmax.f32 %v1194, 0.0
        %v1265 = vmax.f32 %v1196, 0.0
        %v1266 = vmax.f32 %v1199, 0.0
        %v1267 = vmax.f32 %v1201, 0.0
        %v1268 = vmax.f32 %v1204, 0.0
        %v1269 = vmax.f32 %v1206, 0.0
        %v1270 = vmax.f32 %v1209, 0.0
        %v1271 = vmax.f32 %v1211, 0.0
        %v1272 = vmax.f32 %v1214, 0.0
        %v1273 = vmax.f32 %v1216, 0.0
        %v1274 = vmax.f32 %v1219, 0.0
        %v1275 = vmax.f32 %v1221, 0.0
        %v1276 = vmax.f32 %v1224, 0.0
        %v1277 = vmax.f32 %v1226, 0.0
        %v1278 = vmax.f32 %v1229, 0.0
        %v1279 = vmax.f32 %v1231, 0.0
        %v1280 = vmax.f32 %v1234, 0.0
        %v1281 = vmax.f32 %v1236, 0.0
        %v1282 = vmax.f32 %v1239, 0.0
        %v1283 = vmax.f32 %v1241, 0.0
        %v1284 = vmax.f32 %v1244, 0.0
        %v1285 = vmax.f32 %v1246, 0.0
        %v1286 = vmax.f32 %v1249, 0.0
        %v1287 = vmax.f32 %v1251, 0.0
        %v1288 = vmax.f32 %v1254, 0.0
        %v1289 = vmax.f32 %v1256, 0.0
        %1290 = vst [vmem:[%s334] sm:$0xff] %v1258
        %1291 = vst [vmem:[%s334 + $0x8] sm:$0xff] %v1259
        %1292 = vst [vmem:[%s334 + $0x10] sm:$0xff] %v1260
        %1293 = vst [vmem:[%s334 + $0x18] sm:$0xff] %v1261
        %1294 = vst [vmem:[%s334 + $0x20] sm:$0xff] %v1262
        %1295 = vst [vmem:[%s334 + $0x28] sm:$0xff] %v1263
        %1296 = vst [vmem:[%s334 + $0x30] sm:$0xff] %v1264
        %1297 = vst [vmem:[%s334 + $0x38] sm:$0xff] %v1265
        %1298 = vst [vmem:[%s334 + $0x40] sm:$0xff] %v1266
        %1299 = vst [vmem:[%s334 + $0x48] sm:$0xff] %v1267
        %1300 = vst [vmem:[%s334 + $0x50] sm:$0xff] %v1268
        %1301 = vst [vmem:[%s334 + $0x58] sm:$0xff] %v1269
        %1302 = vst [vmem:[%s334 + $0x60] sm:$0xff] %v1270
        %1303 = vst [vmem:[%s334 + $0x68] sm:$0xff] %v1271
        %1304 = vst [vmem:[%s334 + $0x70] sm:$0xff] %v1272
        %1305 = vst [vmem:[%s334 + $0x78] sm:$0xff] %v1273
        %1306 = vst [vmem:[%s334 + $0x80] sm:$0xff] %v1274
        %1307 = vst [vmem:[%s334 + $0x88] sm:$0xff] %v1275
        %1308 = vst [vmem:[%s334 + $0x90] sm:$0xff] %v1276
        %1309 = vst [vmem:[%s334 + $0x98] sm:$0xff] %v1277
        %1310 = vst [vmem:[%s334 + $0xa0] sm:$0xff] %v1278
        %1311 = vst [vmem:[%s334 + $0xa8] sm:$0xff] %v1279
        %1312 = vst [vmem:[%s334 + $0xb0] sm:$0xff] %v1280
        %1313 = vst [vmem:[%s334 + $0xb8] sm:$0xff] %v1281
        %1314 = vst [vmem:[%s334 + $0xc0] sm:$0xff] %v1282
        %1315 = vst [vmem:[%s334 + $0xc8] sm:$0xff] %v1283
        %1316 = vst [vmem:[%s334 + $0xd0] sm:$0xff] %v1284
        %1317 = vst [vmem:[%s334 + $0xd8] sm:$0xff] %v1285
        %1318 = vst [vmem:[%s334 + $0xe0] sm:$0xff] %v1286
        %1319 = vst [vmem:[%s334 + $0xe8] sm:$0xff] %v1287
        %1320 = vst [vmem:[%s334 + $0xf0] sm:$0xff] %v1288
        %1321 = vst [vmem:[%s334 + $0xf8] sm:$0xff] %v1289
        %s1322 = sand.u32 %s194, 1
        %s1323 = scalar_lea.sflag [#allocation3], %s1322
        %s1324 = sand.u32 %s194, 1
        %s1325 = smul.addr %s1324, 256
        %s1326 = scalar_lea.vmem [#allocation2], %s1325
        // Predicated region
        $region45: #{combination_forward.5} parent=43 // pred_check
          %p1327 = pneg %p204
        $region46: #{combination_forward.5} parent=43 // pred_check_branch
          %1329 = sbr.rel (%p1327) target = $region48
        $region47: #{combination_forward.5} parent=43 // pred_region
          %s1330 = smul.u32 32, %s25
          %1332 = vsyncadd %s1323, 0
          %s1333 = smul.addr %s24, 32
          %s1334 = sadd.s32 %s1330, %s1333
          %s1335 = smul.addr %s1334, 8
          %s1336 = scalar_lea.hbm %s6, %s1335
          %s1337 = sshll.u32 %s1326, 4
          %s1338 = int_to_ptr.vmem [resolvable:$true] %s1337
          %s1339 = sshll.u32 %s1336, 4
          %s1340 = int_to_ptr.hbm [resolvable:$true] %s1339
          %1345 = dma.vmem_to_hbm [thread:$0]  %s1338, 4096, %s1340, %s1323, 128, 128, 8
        $region48: #{combination_forward.5} parent=43 // pred_fallthru
          _
      $region44: #{combination_forward.5} parent=5 // pred_fallthru
        _
      %p1346 = scmp.le.s32.totalorder 2, %s15
      // Predicated region
      $region49: #{combination_forward.5} parent=5 // pred_check
        %p1347 = pneg %p1346
      $region50: #{combination_forward.5} parent=5 // pred_check_branch
        %1349 = sbr.rel (%p1347) target = $region52
      $region51: #{combination_forward.5} parent=5 // pred_region
        %s1350 = ssub.s32 %s15, 2
        // Predicated region
        $region53: #{combination_forward.5} parent=51 // pred_check
          %p1351 = pneg %p210
        $region54: #{combination_forward.5} parent=51 // pred_check_branch
          %1353 = sbr.rel (%p1351) target = $region56
        $region55: #{combination_forward.5} parent=51 // pred_region
          %s1354 = sand.u32 %s195, 1
          %s1355 = scalar_lea.sflag [#allocation3], %s1354
          %s1356 = sand.u32 %s195, 1
          %s1357 = smul.addr %s1356, 256
          %s1358 = scalar_lea.vmem [#allocation2], %s1357
          %1360 = dma.done %s1355, 4096
        $region56: #{combination_forward.5} parent=51 // pred_fallthru
          _
      $region52: #{combination_forward.5} parent=5 // pred_fallthru
        _
    $region6: #{combination_forward.5} parent=1 // loop_footer
      %s19 = sadd.s32 1, %s15
    $region7: #{combination_forward.5} parent=1 // loop_footer_branch
      %14 = sbr.rel target = $region3
    $region8: #{combination_forward.5} parent=1 // loop_exit
      _
    %1361 = vsyncpa [#allocation3], 1
    %s1362 = scalar_lea.sflag [#allocation3], 1
    %1363 = vsyncpa %s1362, 1

</llo_original>
